<compile_context>
chip_gen: v7x
topology: tpu7x:2x2x1
jax: 0.10.0
libtpu: 0.0.40
codegen_flags: <defaults>
</compile_context>

<pallas_src>
import functools

import jax
import jax.numpy as jnp
from jax.experimental import pallas as pl
from jax.experimental.pallas import tpu as pltpu

BN_EPS = 1e-5


# --------------------------------------------------------------------------
# Fused Pallas kernel: conv3x3+BN+SiLU -> conv3x3+BN+SiLU -> MHSA (+residual)
# --------------------------------------------------------------------------
def _fused_bottleneck_mhsa_kernel(x_ref, w1_ref, b1_ref, w2_ref, b2_ref,
                                  wqkv_ref, bqkv_ref, o_ref,
                                  xp1_ref, xp2_ref, *, heads, add):
    # x_ref   : (N, H, W, C1)       input, f32
    # w1_ref  : (9*C1, Cmid) bf16   im2col conv1 weight (BN scale folded)
    # b1_ref  : (1, Cmid) f32       folded BN bias
    # w2_ref  : (9*Cmid, C) bf16
    # b2_ref  : (1, C) f32
    # wqkv_ref: (C, 3*C) bf16       [Wq^T | Wk^T | Wv^T]
    # bqkv_ref: (1, 3*C) f32
    # o_ref   : (N, S, C)           S = H*W, row-major spatial flatten
    # xp*_ref : VMEM scratch for the zero-padded conv inputs
    N, H, W, C1 = x_ref.shape
    Cmid = w1_ref.shape[1]
    C = w2_ref.shape[1]
    S = H * W
    d = C // heads
    f32, bf16 = jnp.float32, jnp.bfloat16

    def conv3x3_bn_silu(xpad_ref, w_ref, b_ref, x_nhwc):
        # Zero-pad into VMEM scratch, build im2col patches, one MXU matmul, +bias, SiLU.
        Cin = x_nhwc.shape[-1]
        xpad_ref[...] = jnp.zeros_like(xpad_ref)
        xpad_ref[:, 1:H + 1, 1:W + 1, :] = x_nhwc.astype(bf16)
        xp = xpad_ref[...]                               # (N, H+2, W+2, Cin) bf16
        cols = [xp[:, dy:dy + H, dx:dx + W, :].reshape(N * S, Cin)
                for dy in range(3) for dx in range(3)]
        patches = jnp.concatenate(cols, axis=-1)         # (N*S, 9*Cin) bf16
        y = jnp.dot(patches, w_ref[...],
                    preferred_element_type=f32) + b_ref[...]
        return y * jax.nn.sigmoid(y)                     # SiLU in f32, (N*S, Cout)

    x = x_ref[...]                                                   # (N, H, W, C1)
    y1 = conv3x3_bn_silu(xp1_ref, w1_ref, b1_ref, x)                 # (N*S, Cmid)
    y2 = conv3x3_bn_silu(xp2_ref, w2_ref, b2_ref,
                         y1.reshape(N, H, W, Cmid))                  # (N*S, C)

    # Fused q/k/v projection: one matmul with a 3x wider N dimension.
    qkv = jnp.dot(y2.astype(bf16), wqkv_ref[...],
                  preferred_element_type=f32) + bqkv_ref[...]        # (N*S, 3C)
    qkv = qkv.reshape(N, S, 3 * C)

    if add:
        res = x.astype(f32).reshape(N, S, C)                         # residual (C1 == C)

    # Per-head attention, batched over N on the MXU (static head unroll).
    for h in range(heads):
        qh = qkv[:, :, h * d:(h + 1) * d].astype(bf16)               # (N, S, d)
        kh = qkv[:, :, C + h * d:C + (h + 1) * d].astype(bf16)
        vh = qkv[:, :, 2 * C + h * d:2 * C + (h + 1) * d].astype(bf16)

        # energy[n, i, j] = <q_i, k_j>   (== torch.matmul(q^T, k))
        energy = jnp.einsum('nsd,ntd->nst', qh, kh,
                            preferred_element_type=f32)              # (N, S, S)
        m = jnp.max(energy, axis=-1, keepdims=True)
        p = jnp.exp(energy - m)
        att = p * pl.reciprocal(jnp.sum(p, axis=-1, keepdims=True), approx=True)

        # out_h[n, i, c] = sum_j att[n, i, j] * v[n, j, c]  (== torch.matmul(v, att^T))
        out_h = jnp.einsum('nst,ntd->nsd', att.astype(bf16), vh,
                           preferred_element_type=f32)               # (N, S, d)
        if add:
            out_h = out_h + res[:, :, h * d:(h + 1) * d]
        # Write the head slice directly (no concatenate of head outputs).
        o_ref[:, :, h * d:(h + 1) * d] = out_h.astype(o_ref.dtype)


# --------------------------------------------------------------------------
# Wrapper: BN folding, weight packing, NCHW <-> NHWC glue, pallas_call
# --------------------------------------------------------------------------
def fold_conv_bn_im2col(w_oihw, bn_params):
    """Fold BN into the conv weight, emit an im2col (9*Cin, Cout) bf16 matrix."""
    gamma, beta, mean, var = bn_params
    scale = gamma / jnp.sqrt(var + BN_EPS)                          # (Cout,)
    # (O, I, KH, KW) -> (KH, KW, I, O); row index = (dy*3 + dx)*Cin + cin
    w = jnp.transpose(w_oihw, (2, 3, 1, 0)) * scale[None, None, None, :]
    cin = w_oihw.shape[1]
    w_mat = w.reshape(9 * cin, w_oihw.shape[0]).astype(jnp.bfloat16)
    bias = (beta - mean * scale)[None, :].astype(jnp.float32)       # (1, Cout)
    return w_mat, bias


def mhsa_bottleneck_forward(x_nchw, params, *, heads=4, shortcut=True):
    N, C1, H, W = x_nchw.shape
    C2 = params["w2"].shape[0]
    add = bool(shortcut and (C1 == C2))
    S = H * W

    w1m, b1 = fold_conv_bn_im2col(params["w1"], params["bn1"])       # (9*C1, Cmid)
    w2m, b2 = fold_conv_bn_im2col(params["w2"], params["bn2"])       # (9*Cmid, C2)
    Cmid = w1m.shape[1]

    # Fused qkv weight: x @ [Wq^T | Wk^T | Wv^T] + [bq | bk | bv]
    wqkv = jnp.concatenate(
        [params["wq"].T, params["wk"].T, params["wv"].T], axis=1
    ).astype(jnp.bfloat16)                                           # (C2, 3*C2)
    bqkv = jnp.concatenate(
        [params["bq"], params["bk"], params["bv"]]
    )[None, :].astype(jnp.float32)                                   # (1, 3*C2)

    x_nhwc = jnp.transpose(x_nchw, (0, 2, 3, 1))                     # NCHW -> NHWC

    kernel = functools.partial(_fused_bottleneck_mhsa_kernel,
                               heads=heads, add=add)
    out_flat = pl.pallas_call(
        kernel,
        out_shape=jax.ShapeDtypeStruct((N, S, C2), x_nchw.dtype),
        grid=(1,),   # whole (small) problem in one step; tile batch/spatial for big inputs
        in_specs=[
            pl.BlockSpec((N, H, W, C1), lambda i: (0, 0, 0, 0)),
            pl.BlockSpec((9 * C1, Cmid), lambda i: (0, 0)),
            pl.BlockSpec((1, Cmid), lambda i: (0, 0)),
            pl.BlockSpec((9 * Cmid, C2), lambda i: (0, 0)),
            pl.BlockSpec((1, C2), lambda i: (0, 0)),
            pl.BlockSpec((C2, 3 * C2), lambda i: (0, 0)),
            pl.BlockSpec((1, 3 * C2), lambda i: (0, 0)),
        ],
        out_specs=pl.BlockSpec((N, S, C2), lambda i: (0, 0, 0)),
        scratch_shapes=[
            pltpu.VMEM((N, H + 2, W + 2, C1), jnp.bfloat16),         # padded cv1 input
            pltpu.VMEM((N, H + 2, W + 2, Cmid), jnp.bfloat16),       # padded cv2 input
        ],
        compiler_params=pltpu.CompilerParams(
            dimension_semantics=("arbitrary",)),
    )(x_nhwc, w1m, b1, w2m, b2, wqkv, bqkv)

    out = out_flat.reshape(N, H, W, C2)
    return jnp.transpose(out, (0, 3, 1, 2))                          # NHWC -> NCHW


# --------------------------------------------------------------------------
# Parameter setup (deterministic, synthetic)
# --------------------------------------------------------------------------
def make_params(key, c1, c2, e=0.5):
    c_ = int(c2 * e)
    ks = jax.random.split(key, 12)

    def conv_w(k, co, ci, kh, kw):
        return 0.1 * jax.random.normal(k, (co, ci, kh, kw), jnp.float32)

    def bn(k, c):
        k1, k2, k3, k4 = jax.random.split(k, 4)
        gamma = 1.0 + 0.1 * jax.random.normal(k1, (c,), jnp.float32)
        beta = 0.1 * jax.random.normal(k2, (c,), jnp.float32)
        mean = 0.1 * jax.random.normal(k3, (c,), jnp.float32)
        var = 1.0 + 0.1 * jax.random.uniform(k4, (c,), jnp.float32)
        return gamma, beta, mean, var

    params = {
        "w1": conv_w(ks[0], c_, c1, 3, 3), "bn1": bn(ks[1], c_),
        "w2": conv_w(ks[2], c2, c_, 3, 3), "bn2": bn(ks[3], c2),
        "wq": 0.1 * jax.random.normal(ks[4], (c2, c2), jnp.float32),
        "bq": 0.1 * jax.random.normal(ks[5], (c2,), jnp.float32),
        "wk": 0.1 * jax.random.normal(ks[6], (c2, c2), jnp.float32),
        "bk": 0.1 * jax.random.normal(ks[7], (c2,), jnp.float32),
        "wv": 0.1 * jax.random.normal(ks[8], (c2, c2), jnp.float32),
        "bv": 0.1 * jax.random.normal(ks[9], (c2,), jnp.float32),
    }
    return params, c_


# --------------------------------------------------------------------------
# Pure-JAX f32 reference (mirrors the PyTorch forward) for correctness check
# --------------------------------------------------------------------------
def _ref_conv_bn_silu(x_nchw, w, bn_params):
    gamma, beta, mean, var = bn_params
    y = jax.lax.conv_general_dilated(
        x_nchw, w, window_strides=(1, 1), padding=((1, 1), (1, 1)),
        dimension_numbers=("NCHW", "OIHW", "NCHW"))
    scale = gamma / jnp.sqrt(var + BN_EPS)
    y = y * scale[None, :, None, None] + (beta - mean * scale)[None, :, None, None]
    return y * jax.nn.sigmoid(y)


def _ref_mhsa(x_nchw, p, heads):
    N, C, H, W = x_nchw.shape
    d = C // heads

    def conv1x1(x, w, b):
        return jnp.einsum("nchw,oc->nohw", x, w) + b[None, :, None, None]

    q = conv1x1(x_nchw, p["wq"], p["bq"]).reshape(N, heads, d, H * W)
    k = conv1x1(x_nchw, p["wk"], p["bk"]).reshape(N, heads, d, H * W)
    v = conv1x1(x_nchw, p["wv"], p["bv"]).reshape(N, heads, d, H * W)
    energy = jnp.einsum("nhds,nhdt->nhst", q, k)
    att = jax.nn.softmax(energy, axis=-1)
    out = jnp.einsum("nhdt,nhst->nhds", v, att)
    return out.reshape(N, C, H, W)


def ref_forward(x_nchw, params, *, heads=4, shortcut=True):
    c1, c2 = x_nchw.shape[1], params["w2"].shape[0]
    y = _ref_conv_bn_silu(x_nchw, params["w1"], params["bn1"])
    y = _ref_conv_bn_silu(y, params["w2"], params["bn2"])
    y = _ref_mhsa(y, params, heads)
    return x_nchw + y if (shortcut and c1 == c2) else y


# --------------------------------------------------------------------------
if __name__ == "__main__":
    N, C1, C2, H, W = 2, 16, 16, 8, 8      # c1 == c2 -> residual add active
    key = jax.random.PRNGKey(0)
    kx, kp = jax.random.split(key)

    x = jax.random.normal(kx, (N, C1, H, W), jnp.float32)            # NCHW input
    params, c_hidden = make_params(kp, C1, C2, e=0.5)

    fwd = jax.jit(functools.partial(mhsa_bottleneck_forward, heads=4, shortcut=True))
    out = jax.block_until_ready(fwd(x, params))

    ref = jax.block_until_ready(ref_forward(x, params, heads=4, shortcut=True))
    assert out.shape == (N, C2, H, W), out.shape
    # bf16 MXU operands + approx reciprocal -> relaxed tolerance vs the f32 reference.
    max_err = float(jnp.max(jnp.abs(out - ref)))
    assert max_err < 5e-2, max_err

    print("KERNEL_OK")
</pallas_src>

<mosaic_0001>
module attributes {stable_mosaic.version = 11 : i64} {
  func.func @_fused_bottleneck_mhsa_kernel(%arg0: i32, %arg1: memref<2x8x8x16xf32, #tpu.memory_space<vmem>>, %arg2: memref<144x8xbf16, #tpu.memory_space<vmem>>, %arg3: memref<1x8xf32, #tpu.memory_space<vmem>>, %arg4: memref<72x16xbf16, #tpu.memory_space<vmem>>, %arg5: memref<1x16xf32, #tpu.memory_space<vmem>>, %arg6: memref<16x48xbf16, #tpu.memory_space<vmem>>, %arg7: memref<1x48xf32, #tpu.memory_space<vmem>>, %arg8: memref<2x64x16xf32, #tpu.memory_space<vmem>>, %arg9: memref<2x10x10x16xbf16, #tpu.memory_space<vmem>>, %arg10: memref<2x10x10x8xbf16, #tpu.memory_space<vmem>>) attributes {dimension_semantics = [#tpu.dimension_semantics<arbitrary>], iteration_bounds = array<i64: 1>, scalar_prefetch = 0 : i64, scratch_operands = 2 : i64, tpu.core_type = #tpu.core_type<tc>, window_params = [{pipeline_mode = #tpu.pipeline_mode<synchronous>, transform_indices = @transform_0, window_bounds = array<i64: 2, 8, 8, 16>}, {pipeline_mode = #tpu.pipeline_mode<synchronous>, transform_indices = @transform_1, window_bounds = array<i64: 144, 8>}, {pipeline_mode = #tpu.pipeline_mode<synchronous>, transform_indices = @transform_2, window_bounds = array<i64: 1, 8>}, {pipeline_mode = #tpu.pipeline_mode<synchronous>, transform_indices = @transform_3, window_bounds = array<i64: 72, 16>}, {pipeline_mode = #tpu.pipeline_mode<synchronous>, transform_indices = @transform_4, window_bounds = array<i64: 1, 16>}, {pipeline_mode = #tpu.pipeline_mode<synchronous>, transform_indices = @transform_5, window_bounds = array<i64: 16, 48>}, {pipeline_mode = #tpu.pipeline_mode<synchronous>, transform_indices = @transform_6, window_bounds = array<i64: 1, 48>}, {pipeline_mode = #tpu.pipeline_mode<synchronous>, transform_indices = @transform_7, window_bounds = array<i64: 2, 64, 16>}]} {
    %c0 = arith.constant 0 : index
    %c0_0 = arith.constant 0 : index
    %c0_1 = arith.constant 0 : index
    %c0_2 = arith.constant 0 : index
    %0 = vector.load %arg1[%c0, %c0_0, %c0_1, %c0_2] : memref<2x8x8x16xf32, #tpu.memory_space<vmem>>, vector<2x8x8x16xf32>
    %cst = arith.constant 0.000000e+00 : bf16
    %1 = vector.broadcast %cst : bf16 to vector<2x10x10x16xbf16>
    %c0_3 = arith.constant 0 : index
    %c0_4 = arith.constant 0 : index
    %c0_5 = arith.constant 0 : index
    %c0_6 = arith.constant 0 : index
    %2 = vector.load %arg9[%c0_3, %c0_4, %c0_5, %c0_6] : memref<2x10x10x16xbf16, #tpu.memory_space<vmem>>, vector<2x10x10x16xbf16>
    tpu.vector_store %arg9[%c0_3, %c0_4, %c0_5, %c0_6], %1 {strides = array<i32>} : memref<2x10x10x16xbf16, #tpu.memory_space<vmem>>, vector<2x10x10x16xbf16>,
    %3 = arith.truncf %0 : vector<2x8x8x16xf32> to vector<2x8x8x16xbf16>
    %c0_7 = arith.constant 0 : index
    %c1 = arith.constant 1 : index
    %c1_8 = arith.constant 1 : index
    %c0_9 = arith.constant 0 : index
    %4 = vector.load %arg9[%c0_7, %c1, %c1_8, %c0_9] : memref<2x10x10x16xbf16, #tpu.memory_space<vmem>>, vector<2x8x8x16xbf16>
    tpu.vector_store %arg9[%c0_7, %c1, %c1_8, %c0_9], %3 {strides = array<i32>} : memref<2x10x10x16xbf16, #tpu.memory_space<vmem>>, vector<2x8x8x16xbf16>,
    %c0_10 = arith.constant 0 : index
    %c0_11 = arith.constant 0 : index
    %c0_12 = arith.constant 0 : index
    %c0_13 = arith.constant 0 : index
    %5 = vector.load %arg9[%c0_10, %c0_11, %c0_12, %c0_13] : memref<2x10x10x16xbf16, #tpu.memory_space<vmem>>, vector<2x10x10x16xbf16>
    %6 = vector.extract_strided_slice %5 {offsets = [0, 0, 0, 0], sizes = [2, 8, 8, 16], strides = [1, 1, 1, 1]} : vector<2x10x10x16xbf16> to vector<2x8x8x16xbf16>
    %7 = vector.shape_cast %6 : vector<2x8x8x16xbf16> to vector<128x16xbf16>
    %8 = vector.extract_strided_slice %5 {offsets = [0, 0, 1, 0], sizes = [2, 8, 8, 16], strides = [1, 1, 1, 1]} : vector<2x10x10x16xbf16> to vector<2x8x8x16xbf16>
    %9 = vector.shape_cast %8 : vector<2x8x8x16xbf16> to vector<128x16xbf16>
    %10 = vector.extract_strided_slice %5 {offsets = [0, 0, 2, 0], sizes = [2, 8, 8, 16], strides = [1, 1, 1, 1]} : vector<2x10x10x16xbf16> to vector<2x8x8x16xbf16>
    %11 = vector.shape_cast %10 : vector<2x8x8x16xbf16> to vector<128x16xbf16>
    %12 = vector.extract_strided_slice %5 {offsets = [0, 1, 0, 0], sizes = [2, 8, 8, 16], strides = [1, 1, 1, 1]} : vector<2x10x10x16xbf16> to vector<2x8x8x16xbf16>
    %13 = vector.shape_cast %12 : vector<2x8x8x16xbf16> to vector<128x16xbf16>
    %14 = vector.extract_strided_slice %5 {offsets = [0, 1, 1, 0], sizes = [2, 8, 8, 16], strides = [1, 1, 1, 1]} : vector<2x10x10x16xbf16> to vector<2x8x8x16xbf16>
    %15 = vector.shape_cast %14 : vector<2x8x8x16xbf16> to vector<128x16xbf16>
    %16 = vector.extract_strided_slice %5 {offsets = [0, 1, 2, 0], sizes = [2, 8, 8, 16], strides = [1, 1, 1, 1]} : vector<2x10x10x16xbf16> to vector<2x8x8x16xbf16>
    %17 = vector.shape_cast %16 : vector<2x8x8x16xbf16> to vector<128x16xbf16>
    %18 = vector.extract_strided_slice %5 {offsets = [0, 2, 0, 0], sizes = [2, 8, 8, 16], strides = [1, 1, 1, 1]} : vector<2x10x10x16xbf16> to vector<2x8x8x16xbf16>
    %19 = vector.shape_cast %18 : vector<2x8x8x16xbf16> to vector<128x16xbf16>
    %20 = vector.extract_strided_slice %5 {offsets = [0, 2, 1, 0], sizes = [2, 8, 8, 16], strides = [1, 1, 1, 1]} : vector<2x10x10x16xbf16> to vector<2x8x8x16xbf16>
    %21 = vector.shape_cast %20 : vector<2x8x8x16xbf16> to vector<128x16xbf16>
    %22 = vector.extract_strided_slice %5 {offsets = [0, 2, 2, 0], sizes = [2, 8, 8, 16], strides = [1, 1, 1, 1]} : vector<2x10x10x16xbf16> to vector<2x8x8x16xbf16>
    %23 = vector.shape_cast %22 : vector<2x8x8x16xbf16> to vector<128x16xbf16>
    %24 = tpu.concatenate %7, %9, %11, %13, %15, %17, %19, %21, %23 in 1 : vector<128x16xbf16>, vector<128x16xbf16>, vector<128x16xbf16>, vector<128x16xbf16>, vector<128x16xbf16>, vector<128x16xbf16>, vector<128x16xbf16>, vector<128x16xbf16>, vector<128x16xbf16> -> vector<128x144xbf16>
    %c0_14 = arith.constant 0 : index
    %c0_15 = arith.constant 0 : index
    %25 = vector.load %arg2[%c0_14, %c0_15] : memref<144x8xbf16, #tpu.memory_space<vmem>>, vector<144x8xbf16>
    %cst_16 = arith.constant dense<0.000000e+00> : vector<128x8xf32>
    %26 = tpu.matmul %24, %25, %cst_16 {dimension_numbers = #tpu.dot_dimension_numbers<[1], [0], [0], [1], [0, 0, 1, 1], [], []>} : vector<128x144xbf16>, vector<144x8xbf16>, vector<128x8xf32> -> vector<128x8xf32>
    %c0_17 = arith.constant 0 : index
    %c0_18 = arith.constant 0 : index
    %27 = vector.load %arg3[%c0_17, %c0_18] : memref<1x8xf32, #tpu.memory_space<vmem>>, vector<1x8xf32>
    %28 = vector.broadcast %27 : vector<1x8xf32> to vector<128x8xf32>
    %29 = arith.addf %26, %28 : vector<128x8xf32>
    %30 = arith.negf %29 : vector<128x8xf32>
    %31 = math.exp %30 : vector<128x8xf32>
    %cst_19 = arith.constant 1.000000e+00 : f32
    %32 = vector.broadcast %cst_19 : f32 to vector<128x8xf32>
    %33 = arith.addf %32, %31 : vector<128x8xf32>
    %34 = arith.divf %32, %33 : vector<128x8xf32>
    %35 = arith.mulf %29, %34 : vector<128x8xf32>
    %36 = vector.shape_cast %35 : vector<128x8xf32> to vector<2x8x8x8xf32>
    %cst_20 = arith.constant 0.000000e+00 : bf16
    %37 = vector.broadcast %cst_20 : bf16 to vector<2x10x10x8xbf16>
    %c0_21 = arith.constant 0 : index
    %c0_22 = arith.constant 0 : index
    %c0_23 = arith.constant 0 : index
    %c0_24 = arith.constant 0 : index
    %38 = vector.load %arg10[%c0_21, %c0_22, %c0_23, %c0_24] : memref<2x10x10x8xbf16, #tpu.memory_space<vmem>>, vector<2x10x10x8xbf16>
    tpu.vector_store %arg10[%c0_21, %c0_22, %c0_23, %c0_24], %37 {strides = array<i32>} : memref<2x10x10x8xbf16, #tpu.memory_space<vmem>>, vector<2x10x10x8xbf16>,
    %39 = arith.truncf %36 : vector<2x8x8x8xf32> to vector<2x8x8x8xbf16>
    %c0_25 = arith.constant 0 : index
    %c1_26 = arith.constant 1 : index
    %c1_27 = arith.constant 1 : index
    %c0_28 = arith.constant 0 : index
    %40 = vector.load %arg10[%c0_25, %c1_26, %c1_27, %c0_28] : memref<2x10x10x8xbf16, #tpu.memory_space<vmem>>, vector<2x8x8x8xbf16>
    tpu.vector_store %arg10[%c0_25, %c1_26, %c1_27, %c0_28], %39 {strides = array<i32>} : memref<2x10x10x8xbf16, #tpu.memory_space<vmem>>, vector<2x8x8x8xbf16>,
    %c0_29 = arith.constant 0 : index
    %c0_30 = arith.constant 0 : index
    %c0_31 = arith.constant 0 : index
    %c0_32 = arith.constant 0 : index
    %41 = vector.load %arg10[%c0_29, %c0_30, %c0_31, %c0_32] : memref<2x10x10x8xbf16, #tpu.memory_space<vmem>>, vector<2x10x10x8xbf16>
    %42 = vector.extract_strided_slice %41 {offsets = [0, 0, 0, 0], sizes = [2, 8, 8, 8], strides = [1, 1, 1, 1]} : vector<2x10x10x8xbf16> to vector<2x8x8x8xbf16>
    %43 = vector.shape_cast %42 : vector<2x8x8x8xbf16> to vector<128x8xbf16>
    %44 = vector.extract_strided_slice %41 {offsets = [0, 0, 1, 0], sizes = [2, 8, 8, 8], strides = [1, 1, 1, 1]} : vector<2x10x10x8xbf16> to vector<2x8x8x8xbf16>
    %45 = vector.shape_cast %44 : vector<2x8x8x8xbf16> to vector<128x8xbf16>
    %46 = vector.extract_strided_slice %41 {offsets = [0, 0, 2, 0], sizes = [2, 8, 8, 8], strides = [1, 1, 1, 1]} : vector<2x10x10x8xbf16> to vector<2x8x8x8xbf16>
    %47 = vector.shape_cast %46 : vector<2x8x8x8xbf16> to vector<128x8xbf16>
    %48 = vector.extract_strided_slice %41 {offsets = [0, 1, 0, 0], sizes = [2, 8, 8, 8], strides = [1, 1, 1, 1]} : vector<2x10x10x8xbf16> to vector<2x8x8x8xbf16>
    %49 = vector.shape_cast %48 : vector<2x8x8x8xbf16> to vector<128x8xbf16>
    %50 = vector.extract_strided_slice %41 {offsets = [0, 1, 1, 0], sizes = [2, 8, 8, 8], strides = [1, 1, 1, 1]} : vector<2x10x10x8xbf16> to vector<2x8x8x8xbf16>
    %51 = vector.shape_cast %50 : vector<2x8x8x8xbf16> to vector<128x8xbf16>
    %52 = vector.extract_strided_slice %41 {offsets = [0, 1, 2, 0], sizes = [2, 8, 8, 8], strides = [1, 1, 1, 1]} : vector<2x10x10x8xbf16> to vector<2x8x8x8xbf16>
    %53 = vector.shape_cast %52 : vector<2x8x8x8xbf16> to vector<128x8xbf16>
    %54 = vector.extract_strided_slice %41 {offsets = [0, 2, 0, 0], sizes = [2, 8, 8, 8], strides = [1, 1, 1, 1]} : vector<2x10x10x8xbf16> to vector<2x8x8x8xbf16>
    %55 = vector.shape_cast %54 : vector<2x8x8x8xbf16> to vector<128x8xbf16>
    %56 = vector.extract_strided_slice %41 {offsets = [0, 2, 1, 0], sizes = [2, 8, 8, 8], strides = [1, 1, 1, 1]} : vector<2x10x10x8xbf16> to vector<2x8x8x8xbf16>
    %57 = vector.shape_cast %56 : vector<2x8x8x8xbf16> to vector<128x8xbf16>
    %58 = vector.extract_strided_slice %41 {offsets = [0, 2, 2, 0], sizes = [2, 8, 8, 8], strides = [1, 1, 1, 1]} : vector<2x10x10x8xbf16> to vector<2x8x8x8xbf16>
    %59 = vector.shape_cast %58 : vector<2x8x8x8xbf16> to vector<128x8xbf16>
    %60 = tpu.concatenate %43, %45, %47, %49, %51, %53, %55, %57, %59 in 1 : vector<128x8xbf16>, vector<128x8xbf16>, vector<128x8xbf16>, vector<128x8xbf16>, vector<128x8xbf16>, vector<128x8xbf16>, vector<128x8xbf16>, vector<128x8xbf16>, vector<128x8xbf16> -> vector<128x72xbf16>
    %c0_33 = arith.constant 0 : index
    %c0_34 = arith.constant 0 : index
    %61 = vector.load %arg4[%c0_33, %c0_34] : memref<72x16xbf16, #tpu.memory_space<vmem>>, vector<72x16xbf16>
    %cst_35 = arith.constant dense<0.000000e+00> : vector<128x16xf32>
    %62 = tpu.matmul %60, %61, %cst_35 {dimension_numbers = #tpu.dot_dimension_numbers<[1], [0], [0], [1], [0, 0, 1, 1], [], []>} : vector<128x72xbf16>, vector<72x16xbf16>, vector<128x16xf32> -> vector<128x16xf32>
    %c0_36 = arith.constant 0 : index
    %c0_37 = arith.constant 0 : index
    %63 = vector.load %arg5[%c0_36, %c0_37] : memref<1x16xf32, #tpu.memory_space<vmem>>, vector<1x16xf32>
    %64 = vector.broadcast %63 : vector<1x16xf32> to vector<128x16xf32>
    %65 = arith.addf %62, %64 : vector<128x16xf32>
    %66 = arith.negf %65 : vector<128x16xf32>
    %67 = math.exp %66 : vector<128x16xf32>
    %cst_38 = arith.constant 1.000000e+00 : f32
    %68 = vector.broadcast %cst_38 : f32 to vector<128x16xf32>
    %69 = arith.addf %68, %67 : vector<128x16xf32>
    %70 = arith.divf %68, %69 : vector<128x16xf32>
    %71 = arith.mulf %65, %70 : vector<128x16xf32>
    %72 = arith.truncf %71 : vector<128x16xf32> to vector<128x16xbf16>
    %c0_39 = arith.constant 0 : index
    %c0_40 = arith.constant 0 : index
    %73 = vector.load %arg6[%c0_39, %c0_40] : memref<16x48xbf16, #tpu.memory_space<vmem>>, vector<16x48xbf16>
    %cst_41 = arith.constant dense<0.000000e+00> : vector<128x48xf32>
    %74 = tpu.matmul %72, %73, %cst_41 {dimension_numbers = #tpu.dot_dimension_numbers<[1], [0], [0], [1], [0, 0, 1, 1], [], []>} : vector<128x16xbf16>, vector<16x48xbf16>, vector<128x48xf32> -> vector<128x48xf32>
    %c0_42 = arith.constant 0 : index
    %c0_43 = arith.constant 0 : index
    %75 = vector.load %arg7[%c0_42, %c0_43] : memref<1x48xf32, #tpu.memory_space<vmem>>, vector<1x48xf32>
    %76 = vector.broadcast %75 : vector<1x48xf32> to vector<128x48xf32>
    %77 = arith.addf %74, %76 : vector<128x48xf32>
    %78 = vector.shape_cast %77 : vector<128x48xf32> to vector<2x64x48xf32>
    %79 = vector.shape_cast %0 : vector<2x8x8x16xf32> to vector<2x64x16xf32>
    %80 = vector.extract_strided_slice %78 {offsets = [0, 0, 0], sizes = [2, 64, 4], strides = [1, 1, 1]} : vector<2x64x48xf32> to vector<2x64x4xf32>
    %81 = arith.truncf %80 : vector<2x64x4xf32> to vector<2x64x4xbf16>
    %82 = vector.extract_strided_slice %78 {offsets = [0, 0, 16], sizes = [2, 64, 4], strides = [1, 1, 1]} : vector<2x64x48xf32> to vector<2x64x4xf32>
    %83 = arith.truncf %82 : vector<2x64x4xf32> to vector<2x64x4xbf16>
    %84 = vector.extract_strided_slice %78 {offsets = [0, 0, 32], sizes = [2, 64, 4], strides = [1, 1, 1]} : vector<2x64x48xf32> to vector<2x64x4xf32>
    %85 = arith.truncf %84 : vector<2x64x4xf32> to vector<2x64x4xbf16>
    "tpu.trace_start"() <{level = 10 : i32, message = "nsd,ntd->nst"}> : () -> ()
    %cst_44 = arith.constant dense<0.000000e+00> : vector<2x64x64xf32>
    %86 = tpu.matmul %81, %83, %cst_44 {dimension_numbers = #tpu.dot_dimension_numbers<[2], [2], [1], [1], [0, 0, 0, 1, 1, 1], [0], [0]>} : vector<2x64x4xbf16>, vector<2x64x4xbf16>, vector<2x64x64xf32> -> vector<2x64x64xf32>
    "tpu.trace_stop"() : () -> ()
    %cst_45 = arith.constant dense<0xFF800000> : vector<2x64xf32>
    %87 = vector.multi_reduction <maximumf>, %86, %cst_45 [2] : vector<2x64x64xf32> to vector<2x64xf32>
    %88 = vector.shape_cast %87 : vector<2x64xf32> to vector<2x64x1xf32>
    %89 = vector.broadcast %88 : vector<2x64x1xf32> to vector<2x64x64xf32>
    %90 = arith.subf %86, %89 : vector<2x64x64xf32>
    %91 = math.exp %90 : vector<2x64x64xf32>
    %cst_46 = arith.constant dense<0.000000e+00> : vector<2x64xf32>
    %92 = vector.multi_reduction <add>, %91, %cst_46 [2] : vector<2x64x64xf32> to vector<2x64xf32>
    %93 = vector.shape_cast %92 : vector<2x64xf32> to vector<2x64x1xf32>
    %94 = tpu.reciprocal %93 {approx = true} : vector<2x64x1xf32> -> vector<2x64x1xf32>
    %95 = vector.broadcast %94 : vector<2x64x1xf32> to vector<2x64x64xf32>
    %96 = arith.mulf %91, %95 : vector<2x64x64xf32>
    %97 = arith.truncf %96 : vector<2x64x64xf32> to vector<2x64x64xbf16>
    "tpu.trace_start"() <{level = 10 : i32, message = "nst,ntd->nsd"}> : () -> ()
    %cst_47 = arith.constant dense<0.000000e+00> : vector<2x64x4xf32>
    %98 = tpu.matmul %97, %85, %cst_47 {dimension_numbers = #tpu.dot_dimension_numbers<[2], [1], [1], [2], [0, 0, 0, 1, 1, 2], [0], [0]>} : vector<2x64x64xbf16>, vector<2x64x4xbf16>, vector<2x64x4xf32> -> vector<2x64x4xf32>
    "tpu.trace_stop"() : () -> ()
    %99 = vector.extract_strided_slice %79 {offsets = [0, 0, 0], sizes = [2, 64, 4], strides = [1, 1, 1]} : vector<2x64x16xf32> to vector<2x64x4xf32>
    %100 = arith.addf %98, %99 : vector<2x64x4xf32>
    %c0_48 = arith.constant 0 : index
    %c0_49 = arith.constant 0 : index
    %c0_50 = arith.constant 0 : index
    %101 = vector.load %arg8[%c0_48, %c0_49, %c0_50] : memref<2x64x16xf32, #tpu.memory_space<vmem>>, vector<2x64x4xf32>
    tpu.vector_store %arg8[%c0_48, %c0_49, %c0_50], %100 {strides = array<i32>} : memref<2x64x16xf32, #tpu.memory_space<vmem>>, vector<2x64x4xf32>,
    %102 = vector.extract_strided_slice %78 {offsets = [0, 0, 4], sizes = [2, 64, 4], strides = [1, 1, 1]} : vector<2x64x48xf32> to vector<2x64x4xf32>
    %103 = arith.truncf %102 : vector<2x64x4xf32> to vector<2x64x4xbf16>
    %104 = vector.extract_strided_slice %78 {offsets = [0, 0, 20], sizes = [2, 64, 4], strides = [1, 1, 1]} : vector<2x64x48xf32> to vector<2x64x4xf32>
    %105 = arith.truncf %104 : vector<2x64x4xf32> to vector<2x64x4xbf16>
    %106 = vector.extract_strided_slice %78 {offsets = [0, 0, 36], sizes = [2, 64, 4], strides = [1, 1, 1]} : vector<2x64x48xf32> to vector<2x64x4xf32>
    %107 = arith.truncf %106 : vector<2x64x4xf32> to vector<2x64x4xbf16>
    "tpu.trace_start"() <{level = 10 : i32, message = "nsd,ntd->nst"}> : () -> ()
    %cst_51 = arith.constant dense<0.000000e+00> : vector<2x64x64xf32>
    %108 = tpu.matmul %103, %105, %cst_51 {dimension_numbers = #tpu.dot_dimension_numbers<[2], [2], [1], [1], [0, 0, 0, 1, 1, 1], [0], [0]>} : vector<2x64x4xbf16>, vector<2x64x4xbf16>, vector<2x64x64xf32> -> vector<2x64x64xf32>
    "tpu.trace_stop"() : () -> ()
    %cst_52 = arith.constant dense<0xFF800000> : vector<2x64xf32>
    %109 = vector.multi_reduction <maximumf>, %108, %cst_52 [2] : vector<2x64x64xf32> to vector<2x64xf32>
    %110 = vector.shape_cast %109 : vector<2x64xf32> to vector<2x64x1xf32>
    %111 = vector.broadcast %110 : vector<2x64x1xf32> to vector<2x64x64xf32>
    %112 = arith.subf %108, %111 : vector<2x64x64xf32>
    %113 = math.exp %112 : vector<2x64x64xf32>
    %cst_53 = arith.constant dense<0.000000e+00> : vector<2x64xf32>
    %114 = vector.multi_reduction <add>, %113, %cst_53 [2] : vector<2x64x64xf32> to vector<2x64xf32>
    %115 = vector.shape_cast %114 : vector<2x64xf32> to vector<2x64x1xf32>
    %116 = tpu.reciprocal %115 {approx = true} : vector<2x64x1xf32> -> vector<2x64x1xf32>
    %117 = vector.broadcast %116 : vector<2x64x1xf32> to vector<2x64x64xf32>
    %118 = arith.mulf %113, %117 : vector<2x64x64xf32>
    %119 = arith.truncf %118 : vector<2x64x64xf32> to vector<2x64x64xbf16>
    "tpu.trace_start"() <{level = 10 : i32, message = "nst,ntd->nsd"}> : () -> ()
    %cst_54 = arith.constant dense<0.000000e+00> : vector<2x64x4xf32>
    %120 = tpu.matmul %119, %107, %cst_54 {dimension_numbers = #tpu.dot_dimension_numbers<[2], [1], [1], [2], [0, 0, 0, 1, 1, 2], [0], [0]>} : vector<2x64x64xbf16>, vector<2x64x4xbf16>, vector<2x64x4xf32> -> vector<2x64x4xf32>
    "tpu.trace_stop"() : () -> ()
    %121 = vector.extract_strided_slice %79 {offsets = [0, 0, 4], sizes = [2, 64, 4], strides = [1, 1, 1]} : vector<2x64x16xf32> to vector<2x64x4xf32>
    %122 = arith.addf %120, %121 : vector<2x64x4xf32>
    %c0_55 = arith.constant 0 : index
    %c0_56 = arith.constant 0 : index
    %c4 = arith.constant 4 : index
    %123 = vector.load %arg8[%c0_55, %c0_56, %c4] : memref<2x64x16xf32, #tpu.memory_space<vmem>>, vector<2x64x4xf32>
    tpu.vector_store %arg8[%c0_55, %c0_56, %c4], %122 {strides = array<i32>} : memref<2x64x16xf32, #tpu.memory_space<vmem>>, vector<2x64x4xf32>,
    %124 = vector.extract_strided_slice %78 {offsets = [0, 0, 8], sizes = [2, 64, 4], strides = [1, 1, 1]} : vector<2x64x48xf32> to vector<2x64x4xf32>
    %125 = arith.truncf %124 : vector<2x64x4xf32> to vector<2x64x4xbf16>
    %126 = vector.extract_strided_slice %78 {offsets = [0, 0, 24], sizes = [2, 64, 4], strides = [1, 1, 1]} : vector<2x64x48xf32> to vector<2x64x4xf32>
    %127 = arith.truncf %126 : vector<2x64x4xf32> to vector<2x64x4xbf16>
    %128 = vector.extract_strided_slice %78 {offsets = [0, 0, 40], sizes = [2, 64, 4], strides = [1, 1, 1]} : vector<2x64x48xf32> to vector<2x64x4xf32>
    %129 = arith.truncf %128 : vector<2x64x4xf32> to vector<2x64x4xbf16>
    "tpu.trace_start"() <{level = 10 : i32, message = "nsd,ntd->nst"}> : () -> ()
    %cst_57 = arith.constant dense<0.000000e+00> : vector<2x64x64xf32>
    %130 = tpu.matmul %125, %127, %cst_57 {dimension_numbers = #tpu.dot_dimension_numbers<[2], [2], [1], [1], [0, 0, 0, 1, 1, 1], [0], [0]>} : vector<2x64x4xbf16>, vector<2x64x4xbf16>, vector<2x64x64xf32> -> vector<2x64x64xf32>
    "tpu.trace_stop"() : () -> ()
    %cst_58 = arith.constant dense<0xFF800000> : vector<2x64xf32>
    %131 = vector.multi_reduction <maximumf>, %130, %cst_58 [2] : vector<2x64x64xf32> to vector<2x64xf32>
    %132 = vector.shape_cast %131 : vector<2x64xf32> to vector<2x64x1xf32>
    %133 = vector.broadcast %132 : vector<2x64x1xf32> to vector<2x64x64xf32>
    %134 = arith.subf %130, %133 : vector<2x64x64xf32>
    %135 = math.exp %134 : vector<2x64x64xf32>
    %cst_59 = arith.constant dense<0.000000e+00> : vector<2x64xf32>
    %136 = vector.multi_reduction <add>, %135, %cst_59 [2] : vector<2x64x64xf32> to vector<2x64xf32>
    %137 = vector.shape_cast %136 : vector<2x64xf32> to vector<2x64x1xf32>
    %138 = tpu.reciprocal %137 {approx = true} : vector<2x64x1xf32> -> vector<2x64x1xf32>
    %139 = vector.broadcast %138 : vector<2x64x1xf32> to vector<2x64x64xf32>
    %140 = arith.mulf %135, %139 : vector<2x64x64xf32>
    %141 = arith.truncf %140 : vector<2x64x64xf32> to vector<2x64x64xbf16>
    "tpu.trace_start"() <{level = 10 : i32, message = "nst,ntd->nsd"}> : () -> ()
    %cst_60 = arith.constant dense<0.000000e+00> : vector<2x64x4xf32>
    %142 = tpu.matmul %141, %129, %cst_60 {dimension_numbers = #tpu.dot_dimension_numbers<[2], [1], [1], [2], [0, 0, 0, 1, 1, 2], [0], [0]>} : vector<2x64x64xbf16>, vector<2x64x4xbf16>, vector<2x64x4xf32> -> vector<2x64x4xf32>
    "tpu.trace_stop"() : () -> ()
    %143 = vector.extract_strided_slice %79 {offsets = [0, 0, 8], sizes = [2, 64, 4], strides = [1, 1, 1]} : vector<2x64x16xf32> to vector<2x64x4xf32>
    %144 = arith.addf %142, %143 : vector<2x64x4xf32>
    %c0_61 = arith.constant 0 : index
    %c0_62 = arith.constant 0 : index
    %c8 = arith.constant 8 : index
    %145 = vector.load %arg8[%c0_61, %c0_62, %c8] : memref<2x64x16xf32, #tpu.memory_space<vmem>>, vector<2x64x4xf32>
    tpu.vector_store %arg8[%c0_61, %c0_62, %c8], %144 {strides = array<i32>} : memref<2x64x16xf32, #tpu.memory_space<vmem>>, vector<2x64x4xf32>,
    %146 = vector.extract_strided_slice %78 {offsets = [0, 0, 12], sizes = [2, 64, 4], strides = [1, 1, 1]} : vector<2x64x48xf32> to vector<2x64x4xf32>
    %147 = arith.truncf %146 : vector<2x64x4xf32> to vector<2x64x4xbf16>
    %148 = vector.extract_strided_slice %78 {offsets = [0, 0, 28], sizes = [2, 64, 4], strides = [1, 1, 1]} : vector<2x64x48xf32> to vector<2x64x4xf32>
    %149 = arith.truncf %148 : vector<2x64x4xf32> to vector<2x64x4xbf16>
    %150 = vector.extract_strided_slice %78 {offsets = [0, 0, 44], sizes = [2, 64, 4], strides = [1, 1, 1]} : vector<2x64x48xf32> to vector<2x64x4xf32>
    %151 = arith.truncf %150 : vector<2x64x4xf32> to vector<2x64x4xbf16>
    "tpu.trace_start"() <{level = 10 : i32, message = "nsd,ntd->nst"}> : () -> ()
    %cst_63 = arith.constant dense<0.000000e+00> : vector<2x64x64xf32>
    %152 = tpu.matmul %147, %149, %cst_63 {dimension_numbers = #tpu.dot_dimension_numbers<[2], [2], [1], [1], [0, 0, 0, 1, 1, 1], [0], [0]>} : vector<2x64x4xbf16>, vector<2x64x4xbf16>, vector<2x64x64xf32> -> vector<2x64x64xf32>
    "tpu.trace_stop"() : () -> ()
    %cst_64 = arith.constant dense<0xFF800000> : vector<2x64xf32>
    %153 = vector.multi_reduction <maximumf>, %152, %cst_64 [2] : vector<2x64x64xf32> to vector<2x64xf32>
    %154 = vector.shape_cast %153 : vector<2x64xf32> to vector<2x64x1xf32>
    %155 = vector.broadcast %154 : vector<2x64x1xf32> to vector<2x64x64xf32>
    %156 = arith.subf %152, %155 : vector<2x64x64xf32>
    %157 = math.exp %156 : vector<2x64x64xf32>
    %cst_65 = arith.constant dense<0.000000e+00> : vector<2x64xf32>
    %158 = vector.multi_reduction <add>, %157, %cst_65 [2] : vector<2x64x64xf32> to vector<2x64xf32>
    %159 = vector.shape_cast %158 : vector<2x64xf32> to vector<2x64x1xf32>
    %160 = tpu.reciprocal %159 {approx = true} : vector<2x64x1xf32> -> vector<2x64x1xf32>
    %161 = vector.broadcast %160 : vector<2x64x1xf32> to vector<2x64x64xf32>
    %162 = arith.mulf %157, %161 : vector<2x64x64xf32>
    %163 = arith.truncf %162 : vector<2x64x64xf32> to vector<2x64x64xbf16>
    "tpu.trace_start"() <{level = 10 : i32, message = "nst,ntd->nsd"}> : () -> ()
    %cst_66 = arith.constant dense<0.000000e+00> : vector<2x64x4xf32>
    %164 = tpu.matmul %163, %151, %cst_66 {dimension_numbers = #tpu.dot_dimension_numbers<[2], [1], [1], [2], [0, 0, 0, 1, 1, 2], [0], [0]>} : vector<2x64x64xbf16>, vector<2x64x4xbf16>, vector<2x64x4xf32> -> vector<2x64x4xf32>
    "tpu.trace_stop"() : () -> ()
    %165 = vector.extract_strided_slice %79 {offsets = [0, 0, 12], sizes = [2, 64, 4], strides = [1, 1, 1]} : vector<2x64x16xf32> to vector<2x64x4xf32>
    %166 = arith.addf %164, %165 : vector<2x64x4xf32>
    %c0_67 = arith.constant 0 : index
    %c0_68 = arith.constant 0 : index
    %c12 = arith.constant 12 : index
    %167 = vector.load %arg8[%c0_67, %c0_68, %c12] : memref<2x64x16xf32, #tpu.memory_space<vmem>>, vector<2x64x4xf32>
    tpu.vector_store %arg8[%c0_67, %c0_68, %c12], %166 {strides = array<i32>} : memref<2x64x16xf32, #tpu.memory_space<vmem>>, vector<2x64x4xf32>,
    return
  }
  func.func @transform_0(%arg0: i32) -> (i32, i32, i32, i32) {
    %c0_i32 = arith.constant 0 : i32
    %c0_i32_0 = arith.constant 0 : i32
    %c0_i32_1 = arith.constant 0 : i32
    %c0_i32_2 = arith.constant 0 : i32
    %c0_i32_3 = arith.constant 0 : i32
    return %c0_i32, %c0_i32_0, %c0_i32_1, %c0_i32_2 : i32, i32, i32, i32
  }
  func.func @transform_1(%arg0: i32) -> (i32, i32) {
    %c0_i32 = arith.constant 0 : i32
    %c0_i32_0 = arith.constant 0 : i32
    %c0_i32_1 = arith.constant 0 : i32
    return %c0_i32, %c0_i32_0 : i32, i32
  }
  func.func @transform_2(%arg0: i32) -> (i32, i32) {
    %c0_i32 = arith.constant 0 : i32
    %c0_i32_0 = arith.constant 0 : i32
    %c0_i32_1 = arith.constant 0 : i32
    return %c0_i32, %c0_i32_0 : i32, i32
  }
  func.func @transform_3(%arg0: i32) -> (i32, i32) {
    %c0_i32 = arith.constant 0 : i32
    %c0_i32_0 = arith.constant 0 : i32
    %c0_i32_1 = arith.constant 0 : i32
    return %c0_i32, %c0_i32_0 : i32, i32
  }
  func.func @transform_4(%arg0: i32) -> (i32, i32) {
    %c0_i32 = arith.constant 0 : i32
    %c0_i32_0 = arith.constant 0 : i32
    %c0_i32_1 = arith.constant 0 : i32
    return %c0_i32, %c0_i32_0 : i32, i32
  }
  func.func @transform_5(%arg0: i32) -> (i32, i32) {
    %c0_i32 = arith.constant 0 : i32
    %c0_i32_0 = arith.constant 0 : i32
    %c0_i32_1 = arith.constant 0 : i32
    return %c0_i32, %c0_i32_0 : i32, i32
  }
  func.func @transform_6(%arg0: i32) -> (i32, i32) {
    %c0_i32 = arith.constant 0 : i32
    %c0_i32_0 = arith.constant 0 : i32
    %c0_i32_1 = arith.constant 0 : i32
    return %c0_i32, %c0_i32_0 : i32, i32
  }
  func.func @transform_7(%arg0: i32) -> (i32, i32, i32) {
    %c0_i32 = arith.constant 0 : i32
    %c0_i32_0 = arith.constant 0 : i32
    %c0_i32_1 = arith.constant 0 : i32
    %c0_i32_2 = arith.constant 0 : i32
    return %c0_i32, %c0_i32_0, %c0_i32_1 : i32, i32, i32
  }
}

</mosaic_0001>

<llo_original>
// kernel: mhsa_bottleneck_forward.1
$region0: #{mhsa_bottleneck_forward.1}
  #allocation0 [shape = 'u32[]', space=smem, size = 0x4, offset = 0x4, fixed_abs, tag = 'smem constant byte address 0x4 - core index']
  #allocation1 [shape = 'u32[144,128]{1,0:T(1,128)}', space=vmem, size = 0x12000, scoped, tag = 'internal scratch']
  #allocation2 [shape = 'bf16[2,10,10,16]{3,2,1,0:T(8,128)(2,1)}', space=vmem, size = 0x14000, scoped, tag = 'scratch operand']
  #allocation3 [shape = 'bf16[2,10,10,8]{3,2,1,0:T(8,128)(2,1)}', space=vmem, size = 0x14000, scoped, tag = 'scratch operand']
  %s0 = inlined_call_operand.vmem [shape: f32[2,8,8,16], index: 0, kind: input, shape index: {}]
  %s1 = inlined_call_operand.vmem [shape: bf16[144,8], index: 1, kind: input, shape index: {}]
  %s2 = inlined_call_operand.vmem [shape: f32[1,8], index: 2, kind: input, shape index: {}]
  %s3 = inlined_call_operand.vmem [shape: bf16[72,16], index: 3, kind: input, shape index: {}]
  %s4 = inlined_call_operand.vmem [shape: f32[1,16], index: 4, kind: input, shape index: {}]
  %s5 = inlined_call_operand.vmem [shape: bf16[16,48], index: 5, kind: input, shape index: {}]
  %s6 = inlined_call_operand.vmem [shape: f32[1,48], index: 6, kind: input, shape index: {}]
  %s7 = inlined_call_operand.hbm [shape: f32[2,64,16], index: 7, kind: output, shape index: {}]
  %s8 = sld [smem:[#allocation0]]
  $region38: #{mhsa_bottleneck_forward.1} parent=0
    _
  %s10 = ssub.s32 1, %s8
  %s11 = scalar_select 0, %s10, %s8
  $region1: #{mhsa_bottleneck_forward.1} parent=0
    #allocation4 [shape = 'u8[65536]{0}', space=vmem, size = 0x10000, scoped, tag = 'output window, operand 0, single buffered']
    #allocation5 [shape = 's32[1]{0}', space=sflag, size = 0x4, scoped, tag = 'scoped memory for mhsa_bottleneck_forward.1']
    %12 = vsyncpa [#allocation5], 0
    // Predicated region
    $region2: #{mhsa_bottleneck_forward.1} parent=1 // pred_check
      _
    $region3: #{mhsa_bottleneck_forward.1} parent=1 // pred_check_branch
      %14 = sbr.rel (0) target = $region5
    $region4: #{mhsa_bottleneck_forward.1} parent=1 // pred_region
      _
    $region5: #{mhsa_bottleneck_forward.1} parent=1 // pred_fallthru
      _
    // Predicated region
    $region6: #{mhsa_bottleneck_forward.1} parent=1 // pred_check
      _
    $region7: #{mhsa_bottleneck_forward.1} parent=1 // pred_check_branch
      %16 = sbr.rel (0) target = $region9
    $region8: #{mhsa_bottleneck_forward.1} parent=1 // pred_region
      _
    $region9: #{mhsa_bottleneck_forward.1} parent=1 // pred_fallthru
      _
    // Predicated region
    $region10: #{mhsa_bottleneck_forward.1} parent=1 // pred_check
      _
    $region11: #{mhsa_bottleneck_forward.1} parent=1 // pred_check_branch
      %18 = sbr.rel (0) target = $region13
    $region12: #{mhsa_bottleneck_forward.1} parent=1 // pred_region
      _
    $region13: #{mhsa_bottleneck_forward.1} parent=1 // pred_fallthru
      _
    // Predicated region
    $region14: #{mhsa_bottleneck_forward.1} parent=1 // pred_check
      _
    $region15: #{mhsa_bottleneck_forward.1} parent=1 // pred_check_branch
      %20 = sbr.rel (0) target = $region17
    $region16: #{mhsa_bottleneck_forward.1} parent=1 // pred_region
      _
    $region17: #{mhsa_bottleneck_forward.1} parent=1 // pred_fallthru
      _
    // Predicated region
    $region18: #{mhsa_bottleneck_forward.1} parent=1 // pred_check
      _
    $region19: #{mhsa_bottleneck_forward.1} parent=1 // pred_check_branch
      %22 = sbr.rel (0) target = $region21
    $region20: #{mhsa_bottleneck_forward.1} parent=1 // pred_region
      _
    $region21: #{mhsa_bottleneck_forward.1} parent=1 // pred_fallthru
      _
    // Predicated region
    $region22: #{mhsa_bottleneck_forward.1} parent=1 // pred_check
      _
    $region23: #{mhsa_bottleneck_forward.1} parent=1 // pred_check_branch
      %24 = sbr.rel (0) target = $region25
    $region24: #{mhsa_bottleneck_forward.1} parent=1 // pred_region
      _
    $region25: #{mhsa_bottleneck_forward.1} parent=1 // pred_fallthru
      _
    // Predicated region
    $region26: #{mhsa_bottleneck_forward.1} parent=1 // pred_check
      _
    $region27: #{mhsa_bottleneck_forward.1} parent=1 // pred_check_branch
      %26 = sbr.rel (0) target = $region29
    $region28: #{mhsa_bottleneck_forward.1} parent=1 // pred_region
      _
    $region29: #{mhsa_bottleneck_forward.1} parent=1 // pred_fallthru
      _
    %v28 = vld [vmem:[%s0] sm:$0xff]
    %v29 = vld [vmem:[%s0 + $0x8] sm:$0xff]
    %v30 = vld [vmem:[%s0 + $0x10] sm:$0xff]
    %v31 = vld [vmem:[%s0 + $0x18] sm:$0xff]
    %v32 = vld [vmem:[%s0 + $0x20] sm:$0xff]
    %v33 = vld [vmem:[%s0 + $0x28] sm:$0xff]
    %v34 = vld [vmem:[%s0 + $0x30] sm:$0xff]
    %v35 = vld [vmem:[%s0 + $0x38] sm:$0xff]
    %v36 = vld [vmem:[%s0 + $0x40] sm:$0xff]
    %v37 = vld [vmem:[%s0 + $0x48] sm:$0xff]
    %v38 = vld [vmem:[%s0 + $0x50] sm:$0xff]
    %v39 = vld [vmem:[%s0 + $0x58] sm:$0xff]
    %v40 = vld [vmem:[%s0 + $0x60] sm:$0xff]
    %v41 = vld [vmem:[%s0 + $0x68] sm:$0xff]
    %v42 = vld [vmem:[%s0 + $0x70] sm:$0xff]
    %v43 = vld [vmem:[%s0 + $0x78] sm:$0xff]
    %vm44 = vcmask 125952
    %45 = vst.msk [vmem:[#allocation2] sm:$0xf] %vm44, 0
    %vm46 = vcmask 122880
    %47 = vst.msk [vmem:[#allocation2 + $0x4] sm:$0x1] %vm46, 0
    %48 = vst.msk [vmem:[#allocation2 + $0x8] sm:$0xf] %vm44, 0
    %49 = vst.msk [vmem:[#allocation2 + $0xc] sm:$0x1] %vm46, 0
    %50 = vst.msk [vmem:[#allocation2 + $0x10] sm:$0xf] %vm44, 0
    %51 = vst.msk [vmem:[#allocation2 + $0x14] sm:$0x1] %vm46, 0
    %52 = vst.msk [vmem:[#allocation2 + $0x18] sm:$0xf] %vm44, 0
    %53 = vst.msk [vmem:[#allocation2 + $0x1c] sm:$0x1] %vm46, 0
    %54 = vst.msk [vmem:[#allocation2 + $0x20] sm:$0xf] %vm44, 0
    %55 = vst.msk [vmem:[#allocation2 + $0x24] sm:$0x1] %vm46, 0
    %56 = vst.msk [vmem:[#allocation2 + $0x28] sm:$0xf] %vm44, 0
    %57 = vst.msk [vmem:[#allocation2 + $0x2c] sm:$0x1] %vm46, 0
    %58 = vst.msk [vmem:[#allocation2 + $0x30] sm:$0xf] %vm44, 0
    %59 = vst.msk [vmem:[#allocation2 + $0x34] sm:$0x1] %vm46, 0
    %60 = vst.msk [vmem:[#allocation2 + $0x38] sm:$0xf] %vm44, 0
    %61 = vst.msk [vmem:[#allocation2 + $0x3c] sm:$0x1] %vm46, 0
    %62 = vst.msk [vmem:[#allocation2 + $0x40] sm:$0xf] %vm44, 0
    %63 = vst.msk [vmem:[#allocation2 + $0x44] sm:$0x1] %vm46, 0
    %64 = vst.msk [vmem:[#allocation2 + $0x48] sm:$0xf] %vm44, 0
    %65 = vst.msk [vmem:[#allocation2 + $0x4c] sm:$0x1] %vm46, 0
    %66 = vst.msk [vmem:[#allocation2 + $0x50] sm:$0xf] %vm44, 0
    %67 = vst.msk [vmem:[#allocation2 + $0x54] sm:$0x1] %vm46, 0
    %68 = vst.msk [vmem:[#allocation2 + $0x58] sm:$0xf] %vm44, 0
    %69 = vst.msk [vmem:[#allocation2 + $0x5c] sm:$0x1] %vm46, 0
    %70 = vst.msk [vmem:[#allocation2 + $0x60] sm:$0xf] %vm44, 0
    %71 = vst.msk [vmem:[#allocation2 + $0x64] sm:$0x1] %vm46, 0
    %72 = vst.msk [vmem:[#allocation2 + $0x68] sm:$0xf] %vm44, 0
    %73 = vst.msk [vmem:[#allocation2 + $0x6c] sm:$0x1] %vm46, 0
    %74 = vst.msk [vmem:[#allocation2 + $0x70] sm:$0xf] %vm44, 0
    %75 = vst.msk [vmem:[#allocation2 + $0x74] sm:$0x1] %vm46, 0
    %76 = vst.msk [vmem:[#allocation2 + $0x78] sm:$0xf] %vm44, 0
    %77 = vst.msk [vmem:[#allocation2 + $0x7c] sm:$0x1] %vm46, 0
    %78 = vst.msk [vmem:[#allocation2 + $0x80] sm:$0xf] %vm44, 0
    %79 = vst.msk [vmem:[#allocation2 + $0x84] sm:$0x1] %vm46, 0
    %80 = vst.msk [vmem:[#allocation2 + $0x88] sm:$0xf] %vm44, 0
    %81 = vst.msk [vmem:[#allocation2 + $0x8c] sm:$0x1] %vm46, 0
    %82 = vst.msk [vmem:[#allocation2 + $0x90] sm:$0xf] %vm44, 0
    %83 = vst.msk [vmem:[#allocation2 + $0x94] sm:$0x1] %vm46, 0
    %84 = vst.msk [vmem:[#allocation2 + $0x98] sm:$0xf] %vm44, 0
    %85 = vst.msk [vmem:[#allocation2 + $0x9c] sm:$0x1] %vm46, 0
    %v86 = vpack.c.bf16 %v28, %v28
    %v87 = vpack.c.bf16 %v29, %v29
    %v88 = vpack.c.bf16 %v30, %v30
    %v89 = vpack.c.bf16 %v31, %v31
    %v90 = vpack.c.bf16 %v32, %v32
    %v91 = vpack.c.bf16 %v33, %v33
    %v92 = vpack.c.bf16 %v34, %v34
    %v93 = vpack.c.bf16 %v35, %v35
    %v94 = vpack.c.bf16 %v36, %v36
    %v95 = vpack.c.bf16 %v37, %v37
    %v96 = vpack.c.bf16 %v38, %v38
    %v97 = vpack.c.bf16 %v39, %v39
    %v98 = vpack.c.bf16 %v40, %v40
    %v99 = vpack.c.bf16 %v41, %v41
    %v100 = vpack.c.bf16 %v42, %v42
    %v101 = vpack.c.bf16 %v43, %v43
    %v118 = vunpack.c.l.b16 %v86
    %v119 = vunpack.c.l.b16 %v87
    %v120 = vunpack.c.l.b16 %v88
    %v121 = vunpack.c.l.b16 %v89
    %v122 = vunpack.c.l.b16 %v90
    %v123 = vunpack.c.l.b16 %v91
    %v124 = vunpack.c.l.b16 %v92
    %v125 = vunpack.c.l.b16 %v93
    %v126 = vunpack.c.l.b16 %v94
    %v127 = vunpack.c.l.b16 %v95
    %v128 = vunpack.c.l.b16 %v96
    %v129 = vunpack.c.l.b16 %v97
    %v130 = vunpack.c.l.b16 %v98
    %v131 = vunpack.c.l.b16 %v99
    %v132 = vunpack.c.l.b16 %v100
    %v133 = vunpack.c.l.b16 %v101
    %v134 = vpack.c.b16 %v118, %v118
    %v135 = vpack.c.b16 %v119, %v119
    %v136 = vpack.c.b16 %v120, %v120
    %v137 = vpack.c.b16 %v121, %v121
    %v138 = vpack.c.b16 %v122, %v122
    %v139 = vpack.c.b16 %v123, %v123
    %v140 = vpack.c.b16 %v124, %v124
    %v141 = vpack.c.b16 %v125, %v125
    %v142 = vpack.c.b16 %v126, %v126
    %v143 = vpack.c.b16 %v127, %v127
    %v144 = vpack.c.b16 %v128, %v128
    %v145 = vpack.c.b16 %v129, %v129
    %v146 = vpack.c.b16 %v130, %v130
    %v147 = vpack.c.b16 %v131, %v131
    %v148 = vpack.c.b16 %v132, %v132
    %v149 = vpack.c.b16 %v133, %v133
    %v151 = vshrl.u32 %v134, 16
    %v153 = vrot.slane %v151, 7
    %v154 = vshll.u32 %v134, 16
    %v156 = vor.u32 %v153, %v154
    %v157 = vrot.slane %v153, 4
    %v159 = vshrl.u32 %v135, 16
    %v161 = vrot.slane %v159, 7
    %v162 = vshll.u32 %v135, 16
    %v164 = vor.u32 %v161, %v162
    %v165 = vrot.slane %v161, 4
    %v167 = vshrl.u32 %v136, 16
    %v169 = vrot.slane %v167, 7
    %v170 = vshll.u32 %v136, 16
    %v172 = vor.u32 %v169, %v170
    %v173 = vrot.slane %v169, 4
    %v175 = vshrl.u32 %v137, 16
    %v177 = vrot.slane %v175, 7
    %v178 = vshll.u32 %v137, 16
    %v180 = vor.u32 %v177, %v178
    %v181 = vrot.slane %v177, 4
    %v183 = vshrl.u32 %v138, 16
    %v185 = vrot.slane %v183, 7
    %v186 = vshll.u32 %v138, 16
    %v188 = vor.u32 %v185, %v186
    %v189 = vrot.slane %v185, 4
    %v191 = vshrl.u32 %v139, 16
    %v193 = vrot.slane %v191, 7
    %v194 = vshll.u32 %v139, 16
    %v196 = vor.u32 %v193, %v194
    %v197 = vrot.slane %v193, 4
    %v199 = vshrl.u32 %v140, 16
    %v201 = vrot.slane %v199, 7
    %v202 = vshll.u32 %v140, 16
    %v204 = vor.u32 %v201, %v202
    %v205 = vrot.slane %v201, 4
    %v207 = vshrl.u32 %v141, 16
    %v209 = vrot.slane %v207, 7
    %v210 = vshll.u32 %v141, 16
    %v212 = vor.u32 %v209, %v210
    %v213 = vrot.slane %v209, 4
    %v215 = vshrl.u32 %v142, 16
    %v217 = vrot.slane %v215, 7
    %v218 = vshll.u32 %v142, 16
    %v220 = vor.u32 %v217, %v218
    %v221 = vrot.slane %v217, 4
    %v223 = vshrl.u32 %v143, 16
    %v225 = vrot.slane %v223, 7
    %v226 = vshll.u32 %v143, 16
    %v228 = vor.u32 %v225, %v226
    %v229 = vrot.slane %v225, 4
    %v231 = vshrl.u32 %v144, 16
    %v233 = vrot.slane %v231, 7
    %v234 = vshll.u32 %v144, 16
    %v236 = vor.u32 %v233, %v234
    %v237 = vrot.slane %v233, 4
    %v239 = vshrl.u32 %v145, 16
    %v241 = vrot.slane %v239, 7
    %v242 = vshll.u32 %v145, 16
    %v244 = vor.u32 %v241, %v242
    %v245 = vrot.slane %v241, 4
    %v247 = vshrl.u32 %v146, 16
    %v249 = vrot.slane %v247, 7
    %v250 = vshll.u32 %v146, 16
    %v252 = vor.u32 %v249, %v250
    %v253 = vrot.slane %v249, 4
    %v255 = vshrl.u32 %v147, 16
    %v257 = vrot.slane %v255, 7
    %v258 = vshll.u32 %v147, 16
    %v260 = vor.u32 %v257, %v258
    %v261 = vrot.slane %v257, 4
    %v263 = vshrl.u32 %v148, 16
    %v265 = vrot.slane %v263, 7
    %v266 = vshll.u32 %v148, 16
    %v268 = vor.u32 %v265, %v266
    %v269 = vrot.slane %v265, 4
    %v271 = vshrl.u32 %v149, 16
    %v273 = vrot.slane %v271, 7
    %v274 = vshll.u32 %v149, 16
    %v276 = vor.u32 %v273, %v274
    %v277 = vrot.slane %v273, 4
    %s310 = scalar_lea.vmem [#allocation2], 8
    %vm311 = vcmask 125952
    %vm312 = vsmask.f32 7938
    %vm313 = vmand %vm311, %vm312
    %v314 = vld [vmem:[%s310] sm:$0xf]
    %v315 = vsel %vm313, %v156, %v314
    %316 = vst [vmem:[%s310] sm:$0xf] %v315
    %vm317 = vcmask 122880
    %vm318 = vsmask.f32 256
    %vm319 = vmand %vm317, %vm318
    %v320 = vld [vmem:[%s310 + $0x4] sm:$0x1]
    %v321 = vsel %vm319, %v157, %v320
    %322 = vst [vmem:[%s310 + $0x4] sm:$0x1] %v321
    %v323 = vld [vmem:[%s310 + $0x8] sm:$0xf]
    %v324 = vsel %vm313, %v164, %v323
    %325 = vst [vmem:[%s310 + $0x8] sm:$0xf] %v324
    %v326 = vld [vmem:[%s310 + $0xc] sm:$0x1]
    %v327 = vsel %vm319, %v165, %v326
    %328 = vst [vmem:[%s310 + $0xc] sm:$0x1] %v327
    %v329 = vld [vmem:[%s310 + $0x10] sm:$0xf]
    %v330 = vsel %vm313, %v172, %v329
    %331 = vst [vmem:[%s310 + $0x10] sm:$0xf] %v330
    %v332 = vld [vmem:[%s310 + $0x14] sm:$0x1]
    %v333 = vsel %vm319, %v173, %v332
    %334 = vst [vmem:[%s310 + $0x14] sm:$0x1] %v333
    %v335 = vld [vmem:[%s310 + $0x18] sm:$0xf]
    %v336 = vsel %vm313, %v180, %v335
    %337 = vst [vmem:[%s310 + $0x18] sm:$0xf] %v336
    %v338 = vld [vmem:[%s310 + $0x1c] sm:$0x1]
    %v339 = vsel %vm319, %v181, %v338
    %340 = vst [vmem:[%s310 + $0x1c] sm:$0x1] %v339
    %v341 = vld [vmem:[%s310 + $0x20] sm:$0xf]
    %v342 = vsel %vm313, %v188, %v341
    %343 = vst [vmem:[%s310 + $0x20] sm:$0xf] %v342
    %v344 = vld [vmem:[%s310 + $0x24] sm:$0x1]
    %v345 = vsel %vm319, %v189, %v344
    %346 = vst [vmem:[%s310 + $0x24] sm:$0x1] %v345
    %v347 = vld [vmem:[%s310 + $0x28] sm:$0xf]
    %v348 = vsel %vm313, %v196, %v347
    %349 = vst [vmem:[%s310 + $0x28] sm:$0xf] %v348
    %v350 = vld [vmem:[%s310 + $0x2c] sm:$0x1]
    %v351 = vsel %vm319, %v197, %v350
    %352 = vst [vmem:[%s310 + $0x2c] sm:$0x1] %v351
    %v353 = vld [vmem:[%s310 + $0x30] sm:$0xf]
    %v354 = vsel %vm313, %v204, %v353
    %355 = vst [vmem:[%s310 + $0x30] sm:$0xf] %v354
    %v356 = vld [vmem:[%s310 + $0x34] sm:$0x1]
    %v357 = vsel %vm319, %v205, %v356
    %358 = vst [vmem:[%s310 + $0x34] sm:$0x1] %v357
    %v359 = vld [vmem:[%s310 + $0x38] sm:$0xf]
    %v360 = vsel %vm313, %v212, %v359
    %361 = vst [vmem:[%s310 + $0x38] sm:$0xf] %v360
    %v362 = vld [vmem:[%s310 + $0x3c] sm:$0x1]
    %v363 = vsel %vm319, %v213, %v362
    %364 = vst [vmem:[%s310 + $0x3c] sm:$0x1] %v363
    %v365 = vld [vmem:[%s310 + $0x50] sm:$0xf]
    %v366 = vsel %vm313, %v220, %v365
    %367 = vst [vmem:[%s310 + $0x50] sm:$0xf] %v366
    %v368 = vld [vmem:[%s310 + $0x54] sm:$0x1]
    %v369 = vsel %vm319, %v221, %v368
    %370 = vst [vmem:[%s310 + $0x54] sm:$0x1] %v369
    %v371 = vld [vmem:[%s310 + $0x58] sm:$0xf]
    %v372 = vsel %vm313, %v228, %v371
    %373 = vst [vmem:[%s310 + $0x58] sm:$0xf] %v372
    %v374 = vld [vmem:[%s310 + $0x5c] sm:$0x1]
    %v375 = vsel %vm319, %v229, %v374
    %376 = vst [vmem:[%s310 + $0x5c] sm:$0x1] %v375
    %v377 = vld [vmem:[%s310 + $0x60] sm:$0xf]
    %v378 = vsel %vm313, %v236, %v377
    %379 = vst [vmem:[%s310 + $0x60] sm:$0xf] %v378
    %v380 = vld [vmem:[%s310 + $0x64] sm:$0x1]
    %v381 = vsel %vm319, %v237, %v380
    %382 = vst [vmem:[%s310 + $0x64] sm:$0x1] %v381
    %v383 = vld [vmem:[%s310 + $0x68] sm:$0xf]
    %v384 = vsel %vm313, %v244, %v383
    %385 = vst [vmem:[%s310 + $0x68] sm:$0xf] %v384
    %v386 = vld [vmem:[%s310 + $0x6c] sm:$0x1]
    %v387 = vsel %vm319, %v245, %v386
    %388 = vst [vmem:[%s310 + $0x6c] sm:$0x1] %v387
    %v389 = vld [vmem:[%s310 + $0x70] sm:$0xf]
    %v390 = vsel %vm313, %v252, %v389
    %391 = vst [vmem:[%s310 + $0x70] sm:$0xf] %v390
    %v392 = vld [vmem:[%s310 + $0x74] sm:$0x1]
    %v393 = vsel %vm319, %v253, %v392
    %394 = vst [vmem:[%s310 + $0x74] sm:$0x1] %v393
    %v395 = vld [vmem:[%s310 + $0x78] sm:$0xf]
    %v396 = vsel %vm313, %v260, %v395
    %397 = vst [vmem:[%s310 + $0x78] sm:$0xf] %v396
    %v398 = vld [vmem:[%s310 + $0x7c] sm:$0x1]
    %v399 = vsel %vm319, %v261, %v398
    %400 = vst [vmem:[%s310 + $0x7c] sm:$0x1] %v399
    %v401 = vld [vmem:[%s310 + $0x80] sm:$0xf]
    %v402 = vsel %vm313, %v268, %v401
    %403 = vst [vmem:[%s310 + $0x80] sm:$0xf] %v402
    %v404 = vld [vmem:[%s310 + $0x84] sm:$0x1]
    %v405 = vsel %vm319, %v269, %v404
    %406 = vst [vmem:[%s310 + $0x84] sm:$0x1] %v405
    %v407 = vld [vmem:[%s310 + $0x88] sm:$0xf]
    %v408 = vsel %vm313, %v276, %v407
    %409 = vst [vmem:[%s310 + $0x88] sm:$0xf] %v408
    %v410 = vld [vmem:[%s310 + $0x8c] sm:$0x1]
    %v411 = vsel %vm319, %v277, %v410
    %412 = vst [vmem:[%s310 + $0x8c] sm:$0x1] %v411
    %v413 = vld [vmem:[#allocation2] sm:$0xf]
    %v414 = vld [vmem:[#allocation2 + $0x4] sm:$0x1]
    %v415 = vld [vmem:[#allocation2 + $0x8] sm:$0xf]
    %v416 = vld [vmem:[#allocation2 + $0xc] sm:$0x1]
    %v417 = vld [vmem:[#allocation2 + $0x10] sm:$0xf]
    %v418 = vld [vmem:[#allocation2 + $0x14] sm:$0x1]
    %v419 = vld [vmem:[#allocation2 + $0x18] sm:$0xf]
    %v420 = vld [vmem:[#allocation2 + $0x1c] sm:$0x1]
    %v421 = vld [vmem:[#allocation2 + $0x20] sm:$0xf]
    %v422 = vld [vmem:[#allocation2 + $0x24] sm:$0x1]
    %v423 = vld [vmem:[#allocation2 + $0x28] sm:$0xf]
    %v424 = vld [vmem:[#allocation2 + $0x2c] sm:$0x1]
    %v425 = vld [vmem:[#allocation2 + $0x30] sm:$0xf]
    %v426 = vld [vmem:[#allocation2 + $0x34] sm:$0x1]
    %v427 = vld [vmem:[#allocation2 + $0x38] sm:$0xf]
    %v428 = vld [vmem:[#allocation2 + $0x3c] sm:$0x1]
    %v429 = vld [vmem:[#allocation2 + $0x40] sm:$0xf]
    %v430 = vld [vmem:[#allocation2 + $0x44] sm:$0x1]
    %v431 = vld [vmem:[#allocation2 + $0x48] sm:$0xf]
    %v432 = vld [vmem:[#allocation2 + $0x4c] sm:$0x1]
    %v433 = vld [vmem:[#allocation2 + $0x50] sm:$0xf]
    %v434 = vld [vmem:[#allocation2 + $0x54] sm:$0x1]
    %v435 = vld [vmem:[#allocation2 + $0x58] sm:$0xf]
    %v436 = vld [vmem:[#allocation2 + $0x5c] sm:$0x1]
    %v437 = vld [vmem:[#allocation2 + $0x60] sm:$0xf]
    %v438 = vld [vmem:[#allocation2 + $0x64] sm:$0x1]
    %v439 = vld [vmem:[#allocation2 + $0x68] sm:$0xf]
    %v440 = vld [vmem:[#allocation2 + $0x6c] sm:$0x1]
    %v441 = vld [vmem:[#allocation2 + $0x70] sm:$0xf]
    %v442 = vld [vmem:[#allocation2 + $0x74] sm:$0x1]
    %v443 = vld [vmem:[#allocation2 + $0x78] sm:$0xf]
    %v444 = vld [vmem:[#allocation2 + $0x7c] sm:$0x1]
    %v445 = vld [vmem:[#allocation2 + $0x80] sm:$0xf]
    %v446 = vld [vmem:[#allocation2 + $0x84] sm:$0x1]
    %v447 = vld [vmem:[#allocation2 + $0x88] sm:$0xf]
    %v448 = vld [vmem:[#allocation2 + $0x8c] sm:$0x1]
    %v449 = vld [vmem:[#allocation2 + $0x90] sm:$0xf]
    %v450 = vld [vmem:[#allocation2 + $0x94] sm:$0x1]
    %v451 = vld [vmem:[#allocation2 + $0x98] sm:$0xf]
    %v452 = vld [vmem:[#allocation2 + $0x9c] sm:$0x1]
    %vm453 = vsmask.f32 3328
    %vm454 = vsmask.f32 7440
    %vm455 = vmor %vm453, %vm454
    %v457 = vshrl.u32 %v413, 16
    %v459 = vrot.slane %v457, 4
    %v460 = vshll.u32 %v413, 16
    %v462 = vrot.slane %v460, 5
    %v463 = vor.u32 %v459, %v462
    %v464 = vrot.slane %v463, 4
    %v466 = vshll.u32 %v414, 16
    %v468 = vrot.slane %v466, 5
    %v469 = vsel %vm455, %v464, %v468
    %v471 = vshrl.u32 %v415, 16
    %v473 = vrot.slane %v471, 4
    %v474 = vshll.u32 %v415, 16
    %v476 = vrot.slane %v474, 5
    %v477 = vor.u32 %v473, %v476
    %v478 = vrot.slane %v477, 4
    %v480 = vshll.u32 %v416, 16
    %v482 = vrot.slane %v480, 5
    %v483 = vsel %vm455, %v478, %v482
    %v485 = vshrl.u32 %v417, 16
    %v487 = vrot.slane %v485, 4
    %v488 = vshll.u32 %v417, 16
    %v490 = vrot.slane %v488, 5
    %v491 = vor.u32 %v487, %v490
    %v492 = vrot.slane %v491, 4
    %v494 = vshll.u32 %v418, 16
    %v496 = vrot.slane %v494, 5
    %v497 = vsel %vm455, %v492, %v496
    %v499 = vshrl.u32 %v419, 16
    %v501 = vrot.slane %v499, 4
    %v502 = vshll.u32 %v419, 16
    %v504 = vrot.slane %v502, 5
    %v505 = vor.u32 %v501, %v504
    %v506 = vrot.slane %v505, 4
    %v508 = vshll.u32 %v420, 16
    %v510 = vrot.slane %v508, 5
    %v511 = vsel %vm455, %v506, %v510
    %v513 = vshrl.u32 %v421, 16
    %v515 = vrot.slane %v513, 4
    %v516 = vshll.u32 %v421, 16
    %v518 = vrot.slane %v516, 5
    %v519 = vor.u32 %v515, %v518
    %v520 = vrot.slane %v519, 4
    %v522 = vshll.u32 %v422, 16
    %v524 = vrot.slane %v522, 5
    %v525 = vsel %vm455, %v520, %v524
    %v527 = vshrl.u32 %v423, 16
    %v529 = vrot.slane %v527, 4
    %v530 = vshll.u32 %v423, 16
    %v532 = vrot.slane %v530, 5
    %v533 = vor.u32 %v529, %v532
    %v534 = vrot.slane %v533, 4
    %v536 = vshll.u32 %v424, 16
    %v538 = vrot.slane %v536, 5
    %v539 = vsel %vm455, %v534, %v538
    %v541 = vshrl.u32 %v425, 16
    %v543 = vrot.slane %v541, 4
    %v544 = vshll.u32 %v425, 16
    %v546 = vrot.slane %v544, 5
    %v547 = vor.u32 %v543, %v546
    %v548 = vrot.slane %v547, 4
    %v550 = vshll.u32 %v426, 16
    %v552 = vrot.slane %v550, 5
    %v553 = vsel %vm455, %v548, %v552
    %v555 = vshrl.u32 %v427, 16
    %v557 = vrot.slane %v555, 4
    %v558 = vshll.u32 %v427, 16
    %v560 = vrot.slane %v558, 5
    %v561 = vor.u32 %v557, %v560
    %v562 = vrot.slane %v561, 4
    %v564 = vshll.u32 %v428, 16
    %v566 = vrot.slane %v564, 5
    %v567 = vsel %vm455, %v562, %v566
    %v569 = vshrl.u32 %v433, 16
    %v571 = vrot.slane %v569, 4
    %v572 = vshll.u32 %v433, 16
    %v574 = vrot.slane %v572, 5
    %v575 = vor.u32 %v571, %v574
    %v576 = vrot.slane %v575, 4
    %v578 = vshll.u32 %v434, 16
    %v580 = vrot.slane %v578, 5
    %v581 = vsel %vm455, %v576, %v580
    %v583 = vshrl.u32 %v435, 16
    %v585 = vrot.slane %v583, 4
    %v586 = vshll.u32 %v435, 16
    %v588 = vrot.slane %v586, 5
    %v589 = vor.u32 %v585, %v588
    %v590 = vrot.slane %v589, 4
    %v592 = vshll.u32 %v436, 16
    %v594 = vrot.slane %v592, 5
    %v595 = vsel %vm455, %v590, %v594
    %v597 = vshrl.u32 %v437, 16
    %v599 = vrot.slane %v597, 4
    %v600 = vshll.u32 %v437, 16
    %v602 = vrot.slane %v600, 5
    %v603 = vor.u32 %v599, %v602
    %v604 = vrot.slane %v603, 4
    %v606 = vshll.u32 %v438, 16
    %v608 = vrot.slane %v606, 5
    %v609 = vsel %vm455, %v604, %v608
    %v611 = vshrl.u32 %v439, 16
    %v613 = vrot.slane %v611, 4
    %v614 = vshll.u32 %v439, 16
    %v616 = vrot.slane %v614, 5
    %v617 = vor.u32 %v613, %v616
    %v618 = vrot.slane %v617, 4
    %v620 = vshll.u32 %v440, 16
    %v622 = vrot.slane %v620, 5
    %v623 = vsel %vm455, %v618, %v622
    %v625 = vshrl.u32 %v441, 16
    %v627 = vrot.slane %v625, 4
    %v628 = vshll.u32 %v441, 16
    %v630 = vrot.slane %v628, 5
    %v631 = vor.u32 %v627, %v630
    %v632 = vrot.slane %v631, 4
    %v634 = vshll.u32 %v442, 16
    %v636 = vrot.slane %v634, 5
    %v637 = vsel %vm455, %v632, %v636
    %v639 = vshrl.u32 %v443, 16
    %v641 = vrot.slane %v639, 4
    %v642 = vshll.u32 %v443, 16
    %v644 = vrot.slane %v642, 5
    %v645 = vor.u32 %v641, %v644
    %v646 = vrot.slane %v645, 4
    %v648 = vshll.u32 %v444, 16
    %v650 = vrot.slane %v648, 5
    %v651 = vsel %vm455, %v646, %v650
    %v653 = vshrl.u32 %v445, 16
    %v655 = vrot.slane %v653, 4
    %v656 = vshll.u32 %v445, 16
    %v658 = vrot.slane %v656, 5
    %v659 = vor.u32 %v655, %v658
    %v660 = vrot.slane %v659, 4
    %v662 = vshll.u32 %v446, 16
    %v664 = vrot.slane %v662, 5
    %v665 = vsel %vm455, %v660, %v664
    %v667 = vshrl.u32 %v447, 16
    %v669 = vrot.slane %v667, 4
    %v670 = vshll.u32 %v447, 16
    %v672 = vrot.slane %v670, 5
    %v673 = vor.u32 %v669, %v672
    %v674 = vrot.slane %v673, 4
    %v676 = vshll.u32 %v448, 16
    %v678 = vrot.slane %v676, 5
    %v679 = vsel %vm455, %v674, %v678
    %vm712 = vcmask 1042432
    %vm713 = vcmask 1046532
    %vm714 = vmor %vm712, %vm713
    %v715 = vrot.slane %v413, 5
    %v716 = vrot.slane %v715, 4
    %v717 = vrot.slane %v414, 5
    %v718 = vsel %vm714, %v716, %v717
    %v719 = vrot.slane %v415, 5
    %v720 = vrot.slane %v719, 4
    %v721 = vrot.slane %v416, 5
    %v722 = vsel %vm714, %v720, %v721
    %v723 = vrot.slane %v417, 5
    %v724 = vrot.slane %v723, 4
    %v725 = vrot.slane %v418, 5
    %v726 = vsel %vm714, %v724, %v725
    %v727 = vrot.slane %v419, 5
    %v728 = vrot.slane %v727, 4
    %v729 = vrot.slane %v420, 5
    %v730 = vsel %vm714, %v728, %v729
    %v731 = vrot.slane %v421, 5
    %v732 = vrot.slane %v731, 4
    %v733 = vrot.slane %v422, 5
    %v734 = vsel %vm714, %v732, %v733
    %v735 = vrot.slane %v423, 5
    %v736 = vrot.slane %v735, 4
    %v737 = vrot.slane %v424, 5
    %v738 = vsel %vm714, %v736, %v737
    %v739 = vrot.slane %v425, 5
    %v740 = vrot.slane %v739, 4
    %v741 = vrot.slane %v426, 5
    %v742 = vsel %vm714, %v740, %v741
    %v743 = vrot.slane %v427, 5
    %v744 = vrot.slane %v743, 4
    %v745 = vrot.slane %v428, 5
    %v746 = vsel %vm714, %v744, %v745
    %v747 = vrot.slane %v433, 5
    %v748 = vrot.slane %v747, 4
    %v749 = vrot.slane %v434, 5
    %v750 = vsel %vm714, %v748, %v749
    %v751 = vrot.slane %v435, 5
    %v752 = vrot.slane %v751, 4
    %v753 = vrot.slane %v436, 5
    %v754 = vsel %vm714, %v752, %v753
    %v755 = vrot.slane %v437, 5
    %v756 = vrot.slane %v755, 4
    %v757 = vrot.slane %v438, 5
    %v758 = vsel %vm714, %v756, %v757
    %v759 = vrot.slane %v439, 5
    %v760 = vrot.slane %v759, 4
    %v761 = vrot.slane %v440, 5
    %v762 = vsel %vm714, %v760, %v761
    %v763 = vrot.slane %v441, 5
    %v764 = vrot.slane %v763, 4
    %v765 = vrot.slane %v442, 5
    %v766 = vsel %vm714, %v764, %v765
    %v767 = vrot.slane %v443, 5
    %v768 = vrot.slane %v767, 4
    %v769 = vrot.slane %v444, 5
    %v770 = vsel %vm714, %v768, %v769
    %v771 = vrot.slane %v445, 5
    %v772 = vrot.slane %v771, 4
    %v773 = vrot.slane %v446, 5
    %v774 = vsel %vm714, %v772, %v773
    %v775 = vrot.slane %v447, 5
    %v776 = vrot.slane %v775, 4
    %v777 = vrot.slane %v448, 5
    %v778 = vsel %vm714, %v776, %v777
    %v780 = vshrl.u32 %v429, 16
    %v782 = vrot.slane %v780, 4
    %v783 = vshll.u32 %v429, 16
    %v785 = vrot.slane %v783, 5
    %v786 = vor.u32 %v782, %v785
    %v787 = vrot.slane %v786, 4
    %v789 = vshll.u32 %v430, 16
    %v791 = vrot.slane %v789, 5
    %v792 = vsel %vm455, %v787, %v791
    %v794 = vshrl.u32 %v449, 16
    %v796 = vrot.slane %v794, 4
    %v797 = vshll.u32 %v449, 16
    %v799 = vrot.slane %v797, 5
    %v800 = vor.u32 %v796, %v799
    %v801 = vrot.slane %v800, 4
    %v803 = vshll.u32 %v450, 16
    %v805 = vrot.slane %v803, 5
    %v806 = vsel %vm455, %v801, %v805
    %v811 = vrot.slane %v429, 5
    %v812 = vrot.slane %v811, 4
    %v813 = vrot.slane %v430, 5
    %v814 = vsel %vm714, %v812, %v813
    %v815 = vrot.slane %v449, 5
    %v816 = vrot.slane %v815, 4
    %v817 = vrot.slane %v450, 5
    %v818 = vsel %vm714, %v816, %v817
    %v820 = vshrl.u32 %v431, 16
    %v822 = vrot.slane %v820, 4
    %v823 = vshll.u32 %v431, 16
    %v825 = vrot.slane %v823, 5
    %v826 = vor.u32 %v822, %v825
    %v827 = vrot.slane %v826, 4
    %v829 = vshll.u32 %v432, 16
    %v831 = vrot.slane %v829, 5
    %v832 = vsel %vm455, %v827, %v831
    %v834 = vshrl.u32 %v451, 16
    %v836 = vrot.slane %v834, 4
    %v837 = vshll.u32 %v451, 16
    %v839 = vrot.slane %v837, 5
    %v840 = vor.u32 %v836, %v839
    %v841 = vrot.slane %v840, 4
    %v843 = vshll.u32 %v452, 16
    %v845 = vrot.slane %v843, 5
    %v846 = vsel %vm455, %v841, %v845
    %v851 = vrot.slane %v431, 5
    %v852 = vrot.slane %v851, 4
    %v853 = vrot.slane %v432, 5
    %v854 = vsel %vm714, %v852, %v853
    %v855 = vrot.slane %v451, 5
    %v856 = vrot.slane %v855, 4
    %v857 = vrot.slane %v452, 5
    %v858 = vsel %vm714, %v856, %v857
    %v859 = vunpack.c.l.b16 %v413
    %v860 = vunpack.c.l.b16 %v415
    %v861 = vunpack.c.l.b16 %v417
    %v862 = vunpack.c.l.b16 %v419
    %v863 = vunpack.c.l.b16 %v421
    %v864 = vunpack.c.l.b16 %v423
    %v865 = vunpack.c.l.b16 %v425
    %v866 = vunpack.c.l.b16 %v427
    %v867 = vunpack.c.l.b16 %v433
    %v868 = vunpack.c.l.b16 %v435
    %v869 = vunpack.c.l.b16 %v437
    %v870 = vunpack.c.l.b16 %v439
    %v871 = vunpack.c.l.b16 %v441
    %v872 = vunpack.c.l.b16 %v443
    %v873 = vunpack.c.l.b16 %v445
    %v874 = vunpack.c.l.b16 %v447
    %v875 = vpack.c.b16 %v860, %v859
    %v876 = vpack.c.b16 %v862, %v861
    %v877 = vpack.c.b16 %v864, %v863
    %v878 = vpack.c.b16 %v866, %v865
    %v879 = vpack.c.b16 %v868, %v867
    %v880 = vpack.c.b16 %v870, %v869
    %v881 = vpack.c.b16 %v872, %v871
    %v882 = vpack.c.b16 %v874, %v873
    %v883 = vunpack.c.l.b16 %v469
    %v884 = vunpack.c.l.b16 %v483
    %v885 = vunpack.c.l.b16 %v497
    %v886 = vunpack.c.l.b16 %v511
    %v887 = vunpack.c.l.b16 %v525
    %v888 = vunpack.c.l.b16 %v539
    %v889 = vunpack.c.l.b16 %v553
    %v890 = vunpack.c.l.b16 %v567
    %v891 = vunpack.c.l.b16 %v581
    %v892 = vunpack.c.l.b16 %v595
    %v893 = vunpack.c.l.b16 %v609
    %v894 = vunpack.c.l.b16 %v623
    %v895 = vunpack.c.l.b16 %v637
    %v896 = vunpack.c.l.b16 %v651
    %v897 = vunpack.c.l.b16 %v665
    %v898 = vunpack.c.l.b16 %v679
    %v899 = vpack.c.b16 %v884, %v883
    %v900 = vpack.c.b16 %v886, %v885
    %v901 = vpack.c.b16 %v888, %v887
    %v902 = vpack.c.b16 %v890, %v889
    %v903 = vpack.c.b16 %v892, %v891
    %v904 = vpack.c.b16 %v894, %v893
    %v905 = vpack.c.b16 %v896, %v895
    %v906 = vpack.c.b16 %v898, %v897
    %907 = vrot.lane.b32.xlu0 %v899, 16
    %v908 = vpop.permute.xlu0 %907
    %909 = vrot.lane.b32.xlu0 %v900, 16
    %v910 = vpop.permute.xlu0 %909
    %911 = vrot.lane.b32.xlu0 %v901, 16
    %v912 = vpop.permute.xlu0 %911
    %913 = vrot.lane.b32.xlu0 %v902, 16
    %v914 = vpop.permute.xlu0 %913
    %915 = vrot.lane.b32.xlu0 %v903, 16
    %v916 = vpop.permute.xlu0 %915
    %917 = vrot.lane.b32.xlu0 %v904, 16
    %v918 = vpop.permute.xlu0 %917
    %919 = vrot.lane.b32.xlu0 %v905, 16
    %v920 = vpop.permute.xlu0 %919
    %921 = vrot.lane.b32.xlu0 %v906, 16
    %v922 = vpop.permute.xlu0 %921
    %v923 = vunpack.c.l.b16 %v718
    %v924 = vunpack.c.l.b16 %v722
    %v925 = vunpack.c.l.b16 %v726
    %v926 = vunpack.c.l.b16 %v730
    %v927 = vunpack.c.l.b16 %v734
    %v928 = vunpack.c.l.b16 %v738
    %v929 = vunpack.c.l.b16 %v742
    %v930 = vunpack.c.l.b16 %v746
    %v931 = vunpack.c.l.b16 %v750
    %v932 = vunpack.c.l.b16 %v754
    %v933 = vunpack.c.l.b16 %v758
    %v934 = vunpack.c.l.b16 %v762
    %v935 = vunpack.c.l.b16 %v766
    %v936 = vunpack.c.l.b16 %v770
    %v937 = vunpack.c.l.b16 %v774
    %v938 = vunpack.c.l.b16 %v778
    %v939 = vpack.c.b16 %v924, %v923
    %v940 = vpack.c.b16 %v926, %v925
    %v941 = vpack.c.b16 %v928, %v927
    %v942 = vpack.c.b16 %v930, %v929
    %v943 = vpack.c.b16 %v932, %v931
    %v944 = vpack.c.b16 %v934, %v933
    %v945 = vpack.c.b16 %v936, %v935
    %v946 = vpack.c.b16 %v938, %v937
    %947 = vrot.lane.b32.xlu0 %v939, 32
    %v948 = vpop.permute.xlu0 %947
    %949 = vrot.lane.b32.xlu0 %v940, 32
    %v950 = vpop.permute.xlu0 %949
    %951 = vrot.lane.b32.xlu0 %v941, 32
    %v952 = vpop.permute.xlu0 %951
    %953 = vrot.lane.b32.xlu0 %v942, 32
    %v954 = vpop.permute.xlu0 %953
    %955 = vrot.lane.b32.xlu0 %v943, 32
    %v956 = vpop.permute.xlu0 %955
    %957 = vrot.lane.b32.xlu0 %v944, 32
    %v958 = vpop.permute.xlu0 %957
    %959 = vrot.lane.b32.xlu0 %v945, 32
    %v960 = vpop.permute.xlu0 %959
    %961 = vrot.lane.b32.xlu0 %v946, 32
    %v962 = vpop.permute.xlu0 %961
    %v963 = vunpack.c.l.b16 %v429
    %v964 = vunpack.c.l.b16 %v449
    %v965 = vpack.c.b16 %v861, %v860
    %v966 = vpack.c.b16 %v863, %v862
    %v967 = vpack.c.b16 %v865, %v864
    %v968 = vpack.c.b16 %v963, %v866
    %v969 = vpack.c.b16 %v869, %v868
    %v970 = vpack.c.b16 %v871, %v870
    %v971 = vpack.c.b16 %v873, %v872
    %v972 = vpack.c.b16 %v964, %v874
    %973 = vrot.lane.b32.xlu0 %v965, 48
    %v974 = vpop.permute.xlu0 %973
    %975 = vrot.lane.b32.xlu0 %v966, 48
    %v976 = vpop.permute.xlu0 %975
    %977 = vrot.lane.b32.xlu0 %v967, 48
    %v978 = vpop.permute.xlu0 %977
    %979 = vrot.lane.b32.xlu0 %v968, 48
    %v980 = vpop.permute.xlu0 %979
    %981 = vrot.lane.b32.xlu0 %v969, 48
    %v982 = vpop.permute.xlu0 %981
    %983 = vrot.lane.b32.xlu0 %v970, 48
    %v984 = vpop.permute.xlu0 %983
    %985 = vrot.lane.b32.xlu0 %v971, 48
    %v986 = vpop.permute.xlu0 %985
    %987 = vrot.lane.b32.xlu0 %v972, 48
    %v988 = vpop.permute.xlu0 %987
    %v989 = vunpack.c.l.b16 %v792
    %v990 = vunpack.c.l.b16 %v806
    %v991 = vpack.c.b16 %v885, %v884
    %v992 = vpack.c.b16 %v887, %v886
    %v993 = vpack.c.b16 %v889, %v888
    %v994 = vpack.c.b16 %v989, %v890
    %v995 = vpack.c.b16 %v893, %v892
    %v996 = vpack.c.b16 %v895, %v894
    %v997 = vpack.c.b16 %v897, %v896
    %v998 = vpack.c.b16 %v990, %v898
    %999 = vrot.lane.b32.xlu0 %v991, 64
    %v1000 = vpop.permute.xlu0 %999
    %1001 = vrot.lane.b32.xlu0 %v992, 64
    %v1002 = vpop.permute.xlu0 %1001
    %1003 = vrot.lane.b32.xlu0 %v993, 64
    %v1004 = vpop.permute.xlu0 %1003
    %1005 = vrot.lane.b32.xlu0 %v994, 64
    %v1006 = vpop.permute.xlu0 %1005
    %1007 = vrot.lane.b32.xlu0 %v995, 64
    %v1008 = vpop.permute.xlu0 %1007
    %1009 = vrot.lane.b32.xlu0 %v996, 64
    %v1010 = vpop.permute.xlu0 %1009
    %1011 = vrot.lane.b32.xlu0 %v997, 64
    %v1012 = vpop.permute.xlu0 %1011
    %1013 = vrot.lane.b32.xlu0 %v998, 64
    %v1014 = vpop.permute.xlu0 %1013
    %v1015 = vunpack.c.l.b16 %v814
    %v1016 = vunpack.c.l.b16 %v818
    %v1017 = vpack.c.b16 %v925, %v924
    %v1018 = vpack.c.b16 %v927, %v926
    %v1019 = vpack.c.b16 %v929, %v928
    %v1020 = vpack.c.b16 %v1015, %v930
    %v1021 = vpack.c.b16 %v933, %v932
    %v1022 = vpack.c.b16 %v935, %v934
    %v1023 = vpack.c.b16 %v937, %v936
    %v1024 = vpack.c.b16 %v1016, %v938
    %1025 = vrot.lane.b32.xlu0 %v1017, 80
    %v1026 = vpop.permute.xlu0 %1025
    %1027 = vrot.lane.b32.xlu0 %v1018, 80
    %v1028 = vpop.permute.xlu0 %1027
    %1029 = vrot.lane.b32.xlu0 %v1019, 80
    %v1030 = vpop.permute.xlu0 %1029
    %1031 = vrot.lane.b32.xlu0 %v1020, 80
    %v1032 = vpop.permute.xlu0 %1031
    %1033 = vrot.lane.b32.xlu0 %v1021, 80
    %v1034 = vpop.permute.xlu0 %1033
    %1035 = vrot.lane.b32.xlu0 %v1022, 80
    %v1036 = vpop.permute.xlu0 %1035
    %1037 = vrot.lane.b32.xlu0 %v1023, 80
    %v1038 = vpop.permute.xlu0 %1037
    %1039 = vrot.lane.b32.xlu0 %v1024, 80
    %v1040 = vpop.permute.xlu0 %1039
    %v1041 = vunpack.c.l.b16 %v431
    %v1042 = vunpack.c.l.b16 %v451
    %v1043 = vpack.c.b16 %v1041, %v963
    %v1044 = vpack.c.b16 %v1042, %v964
    %1045 = vrot.lane.b32.xlu0 %v876, 96
    %v1046 = vpop.permute.xlu0 %1045
    %1047 = vrot.lane.b32.xlu0 %v877, 96
    %v1048 = vpop.permute.xlu0 %1047
    %1049 = vrot.lane.b32.xlu0 %v878, 96
    %v1050 = vpop.permute.xlu0 %1049
    %1051 = vrot.lane.b32.xlu0 %v1043, 96
    %v1052 = vpop.permute.xlu0 %1051
    %1053 = vrot.lane.b32.xlu0 %v880, 96
    %v1054 = vpop.permute.xlu0 %1053
    %1055 = vrot.lane.b32.xlu0 %v881, 96
    %v1056 = vpop.permute.xlu0 %1055
    %1057 = vrot.lane.b32.xlu0 %v882, 96
    %v1058 = vpop.permute.xlu0 %1057
    %1059 = vrot.lane.b32.xlu0 %v1044, 96
    %v1060 = vpop.permute.xlu0 %1059
    %v1061 = vunpack.c.l.b16 %v832
    %v1062 = vunpack.c.l.b16 %v846
    %v1063 = vpack.c.b16 %v1061, %v989
    %v1064 = vpack.c.b16 %v1062, %v990
    %1065 = vrot.lane.b32.xlu0 %v900, 112
    %v1066 = vpop.permute.xlu0 %1065
    %1067 = vrot.lane.b32.xlu0 %v901, 112
    %v1068 = vpop.permute.xlu0 %1067
    %1069 = vrot.lane.b32.xlu0 %v902, 112
    %v1070 = vpop.permute.xlu0 %1069
    %1071 = vrot.lane.b32.xlu0 %v1063, 112
    %v1072 = vpop.permute.xlu0 %1071
    %1073 = vrot.lane.b32.xlu0 %v904, 112
    %v1074 = vpop.permute.xlu0 %1073
    %1075 = vrot.lane.b32.xlu0 %v905, 112
    %v1076 = vpop.permute.xlu0 %1075
    %1077 = vrot.lane.b32.xlu0 %v906, 112
    %v1078 = vpop.permute.xlu0 %1077
    %1079 = vrot.lane.b32.xlu0 %v1064, 112
    %v1080 = vpop.permute.xlu0 %1079
    %v1081 = vunpack.c.l.b16 %v854
    %v1082 = vunpack.c.l.b16 %v858
    %v1083 = vpack.c.b16 %v1081, %v1015
    %v1084 = vpack.c.b16 %v1082, %v1016
    %vm1085 = vcmask 130048
    %v1088 = vsel %vm1085, %v875, %v908
    %v1091 = vsel %vm1085, %v876, %v910
    %v1094 = vsel %vm1085, %v877, %v912
    %v1097 = vsel %vm1085, %v878, %v914
    %v1100 = vsel %vm1085, %v879, %v916
    %v1103 = vsel %vm1085, %v880, %v918
    %v1106 = vsel %vm1085, %v881, %v920
    %v1109 = vsel %vm1085, %v882, %v922
    %vm1110 = vcmask 261120
    %v1112 = vsel %vm1110, %v1088, %v948
    %v1114 = vsel %vm1110, %v1091, %v950
    %v1116 = vsel %vm1110, %v1094, %v952
    %v1118 = vsel %vm1110, %v1097, %v954
    %v1120 = vsel %vm1110, %v1100, %v956
    %v1122 = vsel %vm1110, %v1103, %v958
    %v1124 = vsel %vm1110, %v1106, %v960
    %v1126 = vsel %vm1110, %v1109, %v962
    %vm1127 = vcmask 392192
    %v1129 = vsel %vm1127, %v1112, %v974
    %v1131 = vsel %vm1127, %v1114, %v976
    %v1133 = vsel %vm1127, %v1116, %v978
    %v1135 = vsel %vm1127, %v1118, %v980
    %v1137 = vsel %vm1127, %v1120, %v982
    %v1139 = vsel %vm1127, %v1122, %v984
    %v1141 = vsel %vm1127, %v1124, %v986
    %v1143 = vsel %vm1127, %v1126, %v988
    %vm1144 = vcmask 523264
    %v1146 = vsel %vm1144, %v1129, %v1000
    %v1148 = vsel %vm1144, %v1131, %v1002
    %v1150 = vsel %vm1144, %v1133, %v1004
    %v1152 = vsel %vm1144, %v1135, %v1006
    %v1154 = vsel %vm1144, %v1137, %v1008
    %v1156 = vsel %vm1144, %v1139, %v1010
    %v1158 = vsel %vm1144, %v1141, %v1012
    %v1160 = vsel %vm1144, %v1143, %v1014
    %vm1161 = vcmask 654336
    %v1163 = vsel %vm1161, %v1146, %v1026
    %v1165 = vsel %vm1161, %v1148, %v1028
    %v1167 = vsel %vm1161, %v1150, %v1030
    %v1169 = vsel %vm1161, %v1152, %v1032
    %v1171 = vsel %vm1161, %v1154, %v1034
    %v1173 = vsel %vm1161, %v1156, %v1036
    %v1175 = vsel %vm1161, %v1158, %v1038
    %v1177 = vsel %vm1161, %v1160, %v1040
    %vm1178 = vcmask 785408
    %v1180 = vsel %vm1178, %v1163, %v1046
    %v1182 = vsel %vm1178, %v1165, %v1048
    %v1184 = vsel %vm1178, %v1167, %v1050
    %v1186 = vsel %vm1178, %v1169, %v1052
    %v1188 = vsel %vm1178, %v1171, %v1054
    %v1190 = vsel %vm1178, %v1173, %v1056
    %v1192 = vsel %vm1178, %v1175, %v1058
    %v1194 = vsel %vm1178, %v1177, %v1060
    %vm1195 = vcmask 916480
    %v1197 = vsel %vm1195, %v1180, %v1066
    %v1200 = vsel %vm1195, %v1182, %v1068
    %v1203 = vsel %vm1195, %v1184, %v1070
    %v1206 = vsel %vm1195, %v1186, %v1072
    %v1209 = vsel %vm1195, %v1188, %v1074
    %v1212 = vsel %vm1195, %v1190, %v1076
    %v1215 = vsel %vm1195, %v1192, %v1078
    %v1218 = vsel %vm1195, %v1194, %v1080
    %v1220 = vld [vmem:[%s1] sm:$0xf]
    %v1221 = vld [vmem:[%s1 + $0x4] sm:$0xf]
    %v1222 = vld [vmem:[%s1 + $0x8] sm:$0xf]
    %v1223 = vld [vmem:[%s1 + $0xc] sm:$0xf]
    %v1224 = vld [vmem:[%s1 + $0x10] sm:$0xf]
    %v1225 = vld [vmem:[%s1 + $0x14] sm:$0xf]
    %v1226 = vld [vmem:[%s1 + $0x18] sm:$0xf]
    %v1227 = vld [vmem:[%s1 + $0x1c] sm:$0xf]
    %v1228 = vld [vmem:[%s1 + $0x20] sm:$0xf]
    %v1229 = vld [vmem:[%s1 + $0x24] sm:$0xf]
    %v1230 = vld [vmem:[%s1 + $0x28] sm:$0xf]
    %v1231 = vld [vmem:[%s1 + $0x2c] sm:$0xf]
    %v1232 = vld [vmem:[%s1 + $0x30] sm:$0xf]
    %v1233 = vld [vmem:[%s1 + $0x34] sm:$0xf]
    %v1234 = vld [vmem:[%s1 + $0x38] sm:$0xf]
    %v1235 = vld [vmem:[%s1 + $0x3c] sm:$0xf]
    %v1236 = vld [vmem:[%s1 + $0x40] sm:$0xf]
    %v1237 = vld [vmem:[%s1 + $0x44] sm:$0xf]
    %v1238 = vld [vmem:[%s2] sm:$0x1]
    %v1240 = vlaneseq
    %v1241 = vshrl.u32 %v1240, 7
    %v1242 = vsub.s32 0, %v1241
    %v1243 = vrot.slane %v1238, %v1242
    %v1263 = vunpack.c.l.b16 %v1220
    %v1264 = vunpack.c.l.b16 %v1221
    %v1265 = vunpack.c.l.b16 %v1222
    %v1266 = vunpack.c.l.b16 %v1223
    %v1267 = vunpack.c.l.b16 %v1224
    %v1268 = vunpack.c.l.b16 %v1225
    %v1269 = vunpack.c.l.b16 %v1226
    %v1270 = vunpack.c.l.b16 %v1227
    %v1271 = vunpack.c.l.b16 %v1228
    %v1272 = vunpack.c.l.b16 %v1229
    %v1273 = vunpack.c.l.b16 %v1230
    %v1274 = vunpack.c.l.b16 %v1231
    %v1275 = vunpack.c.l.b16 %v1232
    %v1276 = vunpack.c.l.b16 %v1233
    %v1277 = vunpack.c.l.b16 %v1234
    %v1278 = vunpack.c.l.b16 %v1235
    %v1279 = vunpack.c.l.b16 %v1236
    %v1280 = vunpack.c.l.b16 %v1237
    %v1281 = vpack.c.b16 %v1264, %v1263
    %v1282 = vpack.c.b16 %v1266, %v1265
    %v1283 = vpack.c.b16 %v1268, %v1267
    %v1284 = vpack.c.b16 %v1270, %v1269
    %v1285 = vpack.c.b16 %v1272, %v1271
    %v1286 = vpack.c.b16 %v1274, %v1273
    %v1287 = vpack.c.b16 %v1276, %v1275
    %v1288 = vpack.c.b16 %v1278, %v1277
    %v1289 = vpack.c.b16 %v1280, %v1279
    %v1300 = vsel %vm1085, %v940, 0
    %v1303 = vsel %vm1085, %v941, 0
    %v1306 = vsel %vm1085, %v942, 0
    %v1309 = vsel %vm1085, %v1083, 0
    %v1312 = vsel %vm1085, %v944, 0
    %v1315 = vsel %vm1085, %v945, 0
    %v1318 = vsel %vm1085, %v946, 0
    %v1321 = vsel %vm1085, %v1084, 0
    %1323 = vmatprep.subr.bf16.mxu0 0
    %1324 = vmatpush1.bf16.msra.mxu0 %v1281
    %1325 = vmatprep.subr.bf16.mxu0 0
    %1326 = vmatpush1.bf16.msra.mxu0 %v1282
    %1327 = vmatprep.subr.bf16.mxu0 0
    %1328 = vmatpush1.bf16.msra.mxu0 %v1283
    %1329 = vmatprep.subr.bf16.mxu0 0
    %1330 = vmatpush1.bf16.msra.mxu0 %v1284
    %1331 = vmatprep.subr.bf16.mxu0 0
    %1332 = vmatpush1.bf16.msra.mxu0 %v1285
    %1333 = vmatprep.subr.bf16.mxu0 0
    %1334 = vmatpush1.bf16.msra.mxu0 %v1286
    %1335 = vmatprep.subr.bf16.mxu0 0
    %1336 = vmatpush1.bf16.msra.mxu0 %v1287
    %1337 = vmatprep.subr.bf16.mxu0 0
    %1338 = vmatpush1.bf16.msra.mxu0 %v1288
    %1339 = vmatprep.subr.bf16.mxu0 0
    %1340 = vmatpush1.bf16.msra.mxu0 %v1289
    %1341 = vmatprep.subr.bf16.mxu0 0
    %1342 = vmatpush1.bf16.msra.mxu0 0
    %1343 = vmatprep.subr.bf16.mxu0 0
    %1344 = vmatpush1.bf16.msra.mxu0 0
    %1345 = vmatprep.subr.bf16.mxu0 0
    %1346 = vmatpush1.bf16.msra.mxu0 0
    %1347 = vmatprep.subr.bf16.mxu0 0
    %1348 = vmatpush1.bf16.msra.mxu0 0
    %1349 = vmatprep.subr.bf16.mxu0 0
    %1350 = vmatpush1.bf16.msra.mxu0 0
    %1351 = vmatprep.subr.bf16.mxu0 0
    %1352 = vmatpush1.bf16.msra.mxu0 0
    %1353 = vmatprep.subr.bf16.mxu0 0
    %1354 = vmatpush1.bf16.msra.mxu0 0
    %1355 = vmatprep.mubr.bf16.mxu0 %v1300
    %1356 = vmatmul.mubr.bf16.gmra.mrb[0].mxu0 %v1197
    %v1357 = vpop.f32.mrb[0].mxu0
    %v1358 = vadd.f32 %v1243, %v1357
    %v1359 = vpop.f32.mrb[0].mxu0
    %v1360 = vpop.f32.mrb[0].mxu0
    %v1361 = vadd.f32 %v1243, %v1360
    %v1362 = vpop.f32.mrb[0].mxu0
    %1363 = vmatprep.mubr.bf16.mxu0 %v1303
    %1364 = vmatmul.mubr.bf16.gmra.mrb[0].mxu0 %v1200
    %v1365 = vpop.f32.mrb[0].mxu0
    %v1366 = vadd.f32 %v1243, %v1365
    %v1367 = vpop.f32.mrb[0].mxu0
    %v1368 = vpop.f32.mrb[0].mxu0
    %v1369 = vadd.f32 %v1243, %v1368
    %v1370 = vpop.f32.mrb[0].mxu0
    %1371 = vmatprep.mubr.bf16.mxu0 %v1306
    %1372 = vmatmul.mubr.bf16.gmra.mrb[0].mxu0 %v1203
    %v1373 = vpop.f32.mrb[0].mxu0
    %v1374 = vadd.f32 %v1243, %v1373
    %v1375 = vpop.f32.mrb[0].mxu0
    %v1376 = vpop.f32.mrb[0].mxu0
    %v1377 = vadd.f32 %v1243, %v1376
    %v1378 = vpop.f32.mrb[0].mxu0
    %1379 = vmatprep.mubr.bf16.mxu0 %v1309
    %1380 = vmatmul.mubr.bf16.gmra.mrb[0].mxu0 %v1206
    %v1381 = vpop.f32.mrb[0].mxu0
    %v1382 = vadd.f32 %v1243, %v1381
    %v1383 = vpop.f32.mrb[0].mxu0
    %v1384 = vpop.f32.mrb[0].mxu0
    %v1385 = vadd.f32 %v1243, %v1384
    %v1386 = vpop.f32.mrb[0].mxu0
    %1387 = vmatprep.mubr.bf16.mxu0 %v1312
    %1388 = vmatmul.mubr.bf16.gmra.mrb[0].mxu0 %v1209
    %v1389 = vpop.f32.mrb[0].mxu0
    %v1390 = vadd.f32 %v1243, %v1389
    %v1391 = vpop.f32.mrb[0].mxu0
    %v1392 = vpop.f32.mrb[0].mxu0
    %v1393 = vadd.f32 %v1243, %v1392
    %v1394 = vpop.f32.mrb[0].mxu0
    %1395 = vmatprep.mubr.bf16.mxu0 %v1315
    %1396 = vmatmul.mubr.bf16.gmra.mrb[0].mxu0 %v1212
    %v1397 = vpop.f32.mrb[0].mxu0
    %v1398 = vadd.f32 %v1243, %v1397
    %v1399 = vpop.f32.mrb[0].mxu0
    %v1400 = vpop.f32.mrb[0].mxu0
    %v1401 = vadd.f32 %v1243, %v1400
    %v1402 = vpop.f32.mrb[0].mxu0
    %1403 = vmatprep.mubr.bf16.mxu0 %v1318
    %1404 = vmatmul.mubr.bf16.gmra.mrb[0].mxu0 %v1215
    %v1405 = vpop.f32.mrb[0].mxu0
    %v1406 = vadd.f32 %v1243, %v1405
    %v1407 = vpop.f32.mrb[0].mxu0
    %v1408 = vpop.f32.mrb[0].mxu0
    %v1409 = vadd.f32 %v1243, %v1408
    %v1410 = vpop.f32.mrb[0].mxu0
    %1411 = vmatprep.mubr.bf16.mxu0 %v1321
    %1412 = vmatmul.mubr.bf16.gmra.mrb[0].mxu0 %v1218
    %v1413 = vpop.f32.mrb[0].mxu0
    %v1414 = vadd.f32 %v1243, %v1413
    %v1415 = vpop.f32.mrb[0].mxu0
    %v1416 = vpop.f32.mrb[0].mxu0
    %v1417 = vadd.f32 %v1243, %v1416
    %v1418 = vpop.f32.mrb[0].mxu0
    %1419 = vdwg.mxu0
    %v1420 = vxor.u32 %v1358, 2147483648
    %v1421 = vxor.u32 %v1361, 2147483648
    %v1422 = vxor.u32 %v1366, 2147483648
    %v1423 = vxor.u32 %v1369, 2147483648
    %v1424 = vxor.u32 %v1374, 2147483648
    %v1425 = vxor.u32 %v1377, 2147483648
    %v1426 = vxor.u32 %v1382, 2147483648
    %v1427 = vxor.u32 %v1385, 2147483648
    %v1428 = vxor.u32 %v1390, 2147483648
    %v1429 = vxor.u32 %v1393, 2147483648
    %v1430 = vxor.u32 %v1398, 2147483648
    %v1431 = vxor.u32 %v1401, 2147483648
    %v1432 = vxor.u32 %v1406, 2147483648
    %v1433 = vxor.u32 %v1409, 2147483648
    %v1434 = vxor.u32 %v1414, 2147483648
    %v1435 = vxor.u32 %v1417, 2147483648
    %v1436 = vmul.f32 %v1420, 1.442695
    %v1437 = vpow.pop %v1436
    %v1438 = vmul.f32 %v1421, 1.442695
    %v1439 = vpow.pop %v1438
    %v1440 = vmul.f32 %v1422, 1.442695
    %v1441 = vpow.pop %v1440
    %v1442 = vmul.f32 %v1423, 1.442695
    %v1443 = vpow.pop %v1442
    %v1444 = vmul.f32 %v1424, 1.442695
    %v1445 = vpow.pop %v1444
    %v1446 = vmul.f32 %v1425, 1.442695
    %v1447 = vpow.pop %v1446
    %v1448 = vmul.f32 %v1426, 1.442695
    %v1449 = vpow.pop %v1448
    %v1450 = vmul.f32 %v1427, 1.442695
    %v1451 = vpow.pop %v1450
    %v1452 = vmul.f32 %v1428, 1.442695
    %v1453 = vpow.pop %v1452
    %v1454 = vmul.f32 %v1429, 1.442695
    %v1455 = vpow.pop %v1454
    %v1456 = vmul.f32 %v1430, 1.442695
    %v1457 = vpow.pop %v1456
    %v1458 = vmul.f32 %v1431, 1.442695
    %v1459 = vpow.pop %v1458
    %v1460 = vmul.f32 %v1432, 1.442695
    %v1461 = vpow.pop %v1460
    %v1462 = vmul.f32 %v1433, 1.442695
    %v1463 = vpow.pop %v1462
    %v1464 = vmul.f32 %v1434, 1.442695
    %v1465 = vpow.pop %v1464
    %v1466 = vmul.f32 %v1435, 1.442695
    %v1467 = vpow.pop %v1466
    %v1468 = vadd.f32 %v1437, 1.0
    %v1469 = vadd.f32 %v1439, 1.0
    %v1470 = vadd.f32 %v1441, 1.0
    %v1471 = vadd.f32 %v1443, 1.0
    %v1472 = vadd.f32 %v1445, 1.0
    %v1473 = vadd.f32 %v1447, 1.0
    %v1474 = vadd.f32 %v1449, 1.0
    %v1475 = vadd.f32 %v1451, 1.0
    %v1476 = vadd.f32 %v1453, 1.0
    %v1477 = vadd.f32 %v1455, 1.0
    %v1478 = vadd.f32 %v1457, 1.0
    %v1479 = vadd.f32 %v1459, 1.0
    %v1480 = vadd.f32 %v1461, 1.0
    %v1481 = vadd.f32 %v1463, 1.0
    %v1482 = vadd.f32 %v1465, 1.0
    %v1483 = vadd.f32 %v1467, 1.0
    %v1484 = vrcp.pop %v1468
    %v1485 = vmul.f32 1.0, %v1484
    %v1486 = vrcp.pop %v1469
    %v1487 = vmul.f32 1.0, %v1486
    %v1488 = vrcp.pop %v1470
    %v1489 = vmul.f32 1.0, %v1488
    %v1490 = vrcp.pop %v1471
    %v1491 = vmul.f32 1.0, %v1490
    %v1492 = vrcp.pop %v1472
    %v1493 = vmul.f32 1.0, %v1492
    %v1494 = vrcp.pop %v1473
    %v1495 = vmul.f32 1.0, %v1494
    %v1496 = vrcp.pop %v1474
    %v1497 = vmul.f32 1.0, %v1496
    %v1498 = vrcp.pop %v1475
    %v1499 = vmul.f32 1.0, %v1498
    %v1500 = vrcp.pop %v1476
    %v1501 = vmul.f32 1.0, %v1500
    %v1502 = vrcp.pop %v1477
    %v1503 = vmul.f32 1.0, %v1502
    %v1504 = vrcp.pop %v1478
    %v1505 = vmul.f32 1.0, %v1504
    %v1506 = vrcp.pop %v1479
    %v1507 = vmul.f32 1.0, %v1506
    %v1508 = vrcp.pop %v1480
    %v1509 = vmul.f32 1.0, %v1508
    %v1510 = vrcp.pop %v1481
    %v1511 = vmul.f32 1.0, %v1510
    %v1512 = vrcp.pop %v1482
    %v1513 = vmul.f32 1.0, %v1512
    %v1514 = vrcp.pop %v1483
    %v1515 = vmul.f32 1.0, %v1514
    %v1516 = vmul.f32 %v1358, %v1485
    %v1517 = vmul.f32 %v1361, %v1487
    %v1518 = vmul.f32 %v1366, %v1489
    %v1519 = vmul.f32 %v1369, %v1491
    %v1520 = vmul.f32 %v1374, %v1493
    %v1521 = vmul.f32 %v1377, %v1495
    %v1522 = vmul.f32 %v1382, %v1497
    %v1523 = vmul.f32 %v1385, %v1499
    %v1524 = vmul.f32 %v1390, %v1501
    %v1525 = vmul.f32 %v1393, %v1503
    %v1526 = vmul.f32 %v1398, %v1505
    %v1527 = vmul.f32 %v1401, %v1507
    %v1528 = vmul.f32 %v1406, %v1509
    %v1529 = vmul.f32 %v1409, %v1511
    %v1530 = vmul.f32 %v1414, %v1513
    %v1531 = vmul.f32 %v1417, %v1515
    %vm1532 = vcmask 60416
    %1533 = vst.msk [vmem:[#allocation3] sm:$0xf] %vm1532, 0
    %vm1534 = vcmask 57344
    %1535 = vst.msk [vmem:[#allocation3 + $0x4] sm:$0x1] %vm1534, 0
    %1536 = vst.msk [vmem:[#allocation3 + $0x8] sm:$0xf] %vm1532, 0
    %1537 = vst.msk [vmem:[#allocation3 + $0xc] sm:$0x1] %vm1534, 0
    %1538 = vst.msk [vmem:[#allocation3 + $0x10] sm:$0xf] %vm1532, 0
    %1539 = vst.msk [vmem:[#allocation3 + $0x14] sm:$0x1] %vm1534, 0
    %1540 = vst.msk [vmem:[#allocation3 + $0x18] sm:$0xf] %vm1532, 0
    %1541 = vst.msk [vmem:[#allocation3 + $0x1c] sm:$0x1] %vm1534, 0
    %1542 = vst.msk [vmem:[#allocation3 + $0x20] sm:$0xf] %vm1532, 0
    %1543 = vst.msk [vmem:[#allocation3 + $0x24] sm:$0x1] %vm1534, 0
    %1544 = vst.msk [vmem:[#allocation3 + $0x28] sm:$0xf] %vm1532, 0
    %1545 = vst.msk [vmem:[#allocation3 + $0x2c] sm:$0x1] %vm1534, 0
    %1546 = vst.msk [vmem:[#allocation3 + $0x30] sm:$0xf] %vm1532, 0
    %1547 = vst.msk [vmem:[#allocation3 + $0x34] sm:$0x1] %vm1534, 0
    %1548 = vst.msk [vmem:[#allocation3 + $0x38] sm:$0xf] %vm1532, 0
    %1549 = vst.msk [vmem:[#allocation3 + $0x3c] sm:$0x1] %vm1534, 0
    %1550 = vst.msk [vmem:[#allocation3 + $0x40] sm:$0xf] %vm1532, 0
    %1551 = vst.msk [vmem:[#allocation3 + $0x44] sm:$0x1] %vm1534, 0
    %1552 = vst.msk [vmem:[#allocation3 + $0x48] sm:$0xf] %vm1532, 0
    %1553 = vst.msk [vmem:[#allocation3 + $0x4c] sm:$0x1] %vm1534, 0
    %1554 = vst.msk [vmem:[#allocation3 + $0x50] sm:$0xf] %vm1532, 0
    %1555 = vst.msk [vmem:[#allocation3 + $0x54] sm:$0x1] %vm1534, 0
    %1556 = vst.msk [vmem:[#allocation3 + $0x58] sm:$0xf] %vm1532, 0
    %1557 = vst.msk [vmem:[#allocation3 + $0x5c] sm:$0x1] %vm1534, 0
    %1558 = vst.msk [vmem:[#allocation3 + $0x60] sm:$0xf] %vm1532, 0
    %1559 = vst.msk [vmem:[#allocation3 + $0x64] sm:$0x1] %vm1534, 0
    %1560 = vst.msk [vmem:[#allocation3 + $0x68] sm:$0xf] %vm1532, 0
    %1561 = vst.msk [vmem:[#allocation3 + $0x6c] sm:$0x1] %vm1534, 0
    %1562 = vst.msk [vmem:[#allocation3 + $0x70] sm:$0xf] %vm1532, 0
    %1563 = vst.msk [vmem:[#allocation3 + $0x74] sm:$0x1] %vm1534, 0
    %1564 = vst.msk [vmem:[#allocation3 + $0x78] sm:$0xf] %vm1532, 0
    %1565 = vst.msk [vmem:[#allocation3 + $0x7c] sm:$0x1] %vm1534, 0
    %1566 = vst.msk [vmem:[#allocation3 + $0x80] sm:$0xf] %vm1532, 0
    %1567 = vst.msk [vmem:[#allocation3 + $0x84] sm:$0x1] %vm1534, 0
    %1568 = vst.msk [vmem:[#allocation3 + $0x88] sm:$0xf] %vm1532, 0
    %1569 = vst.msk [vmem:[#allocation3 + $0x8c] sm:$0x1] %vm1534, 0
    %1570 = vst.msk [vmem:[#allocation3 + $0x90] sm:$0xf] %vm1532, 0
    %1571 = vst.msk [vmem:[#allocation3 + $0x94] sm:$0x1] %vm1534, 0
    %1572 = vst.msk [vmem:[#allocation3 + $0x98] sm:$0xf] %vm1532, 0
    %1573 = vst.msk [vmem:[#allocation3 + $0x9c] sm:$0x1] %vm1534, 0
    %v1574 = vpack.c.bf16 %v1516, %v1516
    %v1575 = vpack.c.bf16 %v1517, %v1517
    %v1576 = vpack.c.bf16 %v1518, %v1518
    %v1577 = vpack.c.bf16 %v1519, %v1519
    %v1578 = vpack.c.bf16 %v1520, %v1520
    %v1579 = vpack.c.bf16 %v1521, %v1521
    %v1580 = vpack.c.bf16 %v1522, %v1522
    %v1581 = vpack.c.bf16 %v1523, %v1523
    %v1582 = vpack.c.bf16 %v1524, %v1524
    %v1583 = vpack.c.bf16 %v1525, %v1525
    %v1584 = vpack.c.bf16 %v1526, %v1526
    %v1585 = vpack.c.bf16 %v1527, %v1527
    %v1586 = vpack.c.bf16 %v1528, %v1528
    %v1587 = vpack.c.bf16 %v1529, %v1529
    %v1588 = vpack.c.bf16 %v1530, %v1530
    %v1589 = vpack.c.bf16 %v1531, %v1531
    %v1606 = vunpack.c.l.b16 %v1574
    %v1607 = vunpack.c.l.b16 %v1575
    %v1608 = vunpack.c.l.b16 %v1576
    %v1609 = vunpack.c.l.b16 %v1577
    %v1610 = vunpack.c.l.b16 %v1578
    %v1611 = vunpack.c.l.b16 %v1579
    %v1612 = vunpack.c.l.b16 %v1580
    %v1613 = vunpack.c.l.b16 %v1581
    %v1614 = vunpack.c.l.b16 %v1582
    %v1615 = vunpack.c.l.b16 %v1583
    %v1616 = vunpack.c.l.b16 %v1584
    %v1617 = vunpack.c.l.b16 %v1585
    %v1618 = vunpack.c.l.b16 %v1586
    %v1619 = vunpack.c.l.b16 %v1587
    %v1620 = vunpack.c.l.b16 %v1588
    %v1621 = vunpack.c.l.b16 %v1589
    %v1622 = vpack.c.b16 %v1606, %v1606
    %v1623 = vpack.c.b16 %v1607, %v1607
    %v1624 = vpack.c.b16 %v1608, %v1608
    %v1625 = vpack.c.b16 %v1609, %v1609
    %v1626 = vpack.c.b16 %v1610, %v1610
    %v1627 = vpack.c.b16 %v1611, %v1611
    %v1628 = vpack.c.b16 %v1612, %v1612
    %v1629 = vpack.c.b16 %v1613, %v1613
    %v1630 = vpack.c.b16 %v1614, %v1614
    %v1631 = vpack.c.b16 %v1615, %v1615
    %v1632 = vpack.c.b16 %v1616, %v1616
    %v1633 = vpack.c.b16 %v1617, %v1617
    %v1634 = vpack.c.b16 %v1618, %v1618
    %v1635 = vpack.c.b16 %v1619, %v1619
    %v1636 = vpack.c.b16 %v1620, %v1620
    %v1637 = vpack.c.b16 %v1621, %v1621
    %v1639 = vshrl.u32 %v1622, 16
    %v1641 = vrot.slane %v1639, 7
    %v1642 = vshll.u32 %v1622, 16
    %v1644 = vor.u32 %v1641, %v1642
    %v1645 = vrot.slane %v1641, 4
    %v1647 = vshrl.u32 %v1623, 16
    %v1649 = vrot.slane %v1647, 7
    %v1650 = vshll.u32 %v1623, 16
    %v1652 = vor.u32 %v1649, %v1650
    %v1653 = vrot.slane %v1649, 4
    %v1655 = vshrl.u32 %v1624, 16
    %v1657 = vrot.slane %v1655, 7
    %v1658 = vshll.u32 %v1624, 16
    %v1660 = vor.u32 %v1657, %v1658
    %v1661 = vrot.slane %v1657, 4
    %v1663 = vshrl.u32 %v1625, 16
    %v1665 = vrot.slane %v1663, 7
    %v1666 = vshll.u32 %v1625, 16
    %v1668 = vor.u32 %v1665, %v1666
    %v1669 = vrot.slane %v1665, 4
    %v1671 = vshrl.u32 %v1626, 16
    %v1673 = vrot.slane %v1671, 7
    %v1674 = vshll.u32 %v1626, 16
    %v1676 = vor.u32 %v1673, %v1674
    %v1677 = vrot.slane %v1673, 4
    %v1679 = vshrl.u32 %v1627, 16
    %v1681 = vrot.slane %v1679, 7
    %v1682 = vshll.u32 %v1627, 16
    %v1684 = vor.u32 %v1681, %v1682
    %v1685 = vrot.slane %v1681, 4
    %v1687 = vshrl.u32 %v1628, 16
    %v1689 = vrot.slane %v1687, 7
    %v1690 = vshll.u32 %v1628, 16
    %v1692 = vor.u32 %v1689, %v1690
    %v1693 = vrot.slane %v1689, 4
    %v1695 = vshrl.u32 %v1629, 16
    %v1697 = vrot.slane %v1695, 7
    %v1698 = vshll.u32 %v1629, 16
    %v1700 = vor.u32 %v1697, %v1698
    %v1701 = vrot.slane %v1697, 4
    %v1703 = vshrl.u32 %v1630, 16
    %v1705 = vrot.slane %v1703, 7
    %v1706 = vshll.u32 %v1630, 16
    %v1708 = vor.u32 %v1705, %v1706
    %v1709 = vrot.slane %v1705, 4
    %v1711 = vshrl.u32 %v1631, 16
    %v1713 = vrot.slane %v1711, 7
    %v1714 = vshll.u32 %v1631, 16
    %v1716 = vor.u32 %v1713, %v1714
    %v1717 = vrot.slane %v1713, 4
    %v1719 = vshrl.u32 %v1632, 16
    %v1721 = vrot.slane %v1719, 7
    %v1722 = vshll.u32 %v1632, 16
    %v1724 = vor.u32 %v1721, %v1722
    %v1725 = vrot.slane %v1721, 4
    %v1727 = vshrl.u32 %v1633, 16
    %v1729 = vrot.slane %v1727, 7
    %v1730 = vshll.u32 %v1633, 16
    %v1732 = vor.u32 %v1729, %v1730
    %v1733 = vrot.slane %v1729, 4
    %v1735 = vshrl.u32 %v1634, 16
    %v1737 = vrot.slane %v1735, 7
    %v1738 = vshll.u32 %v1634, 16
    %v1740 = vor.u32 %v1737, %v1738
    %v1741 = vrot.slane %v1737, 4
    %v1743 = vshrl.u32 %v1635, 16
    %v1745 = vrot.slane %v1743, 7
    %v1746 = vshll.u32 %v1635, 16
    %v1748 = vor.u32 %v1745, %v1746
    %v1749 = vrot.slane %v1745, 4
    %v1751 = vshrl.u32 %v1636, 16
    %v1753 = vrot.slane %v1751, 7
    %v1754 = vshll.u32 %v1636, 16
    %v1756 = vor.u32 %v1753, %v1754
    %v1757 = vrot.slane %v1753, 4
    %v1759 = vshrl.u32 %v1637, 16
    %v1761 = vrot.slane %v1759, 7
    %v1762 = vshll.u32 %v1637, 16
    %v1764 = vor.u32 %v1761, %v1762
    %v1765 = vrot.slane %v1761, 4
    %s1798 = scalar_lea.vmem [#allocation3], 8
    %vm1799 = vcmask 60416
    %vm1800 = vmand %vm1799, %vm312
    %v1801 = vld [vmem:[%s1798] sm:$0xf]
    %v1802 = vsel %vm1800, %v1644, %v1801
    %1803 = vst [vmem:[%s1798] sm:$0xf] %v1802
    %vm1804 = vcmask 57344
    %vm1805 = vmand %vm1804, %vm318
    %v1806 = vld [vmem:[%s1798 + $0x4] sm:$0x1]
    %v1807 = vsel %vm1805, %v1645, %v1806
    %1808 = vst [vmem:[%s1798 + $0x4] sm:$0x1] %v1807
    %v1809 = vld [vmem:[%s1798 + $0x8] sm:$0xf]
    %v1810 = vsel %vm1800, %v1652, %v1809
    %1811 = vst [vmem:[%s1798 + $0x8] sm:$0xf] %v1810
    %v1812 = vld [vmem:[%s1798 + $0xc] sm:$0x1]
    %v1813 = vsel %vm1805, %v1653, %v1812
    %1814 = vst [vmem:[%s1798 + $0xc] sm:$0x1] %v1813
    %v1815 = vld [vmem:[%s1798 + $0x10] sm:$0xf]
    %v1816 = vsel %vm1800, %v1660, %v1815
    %1817 = vst [vmem:[%s1798 + $0x10] sm:$0xf] %v1816
    %v1818 = vld [vmem:[%s1798 + $0x14] sm:$0x1]
    %v1819 = vsel %vm1805, %v1661, %v1818
    %1820 = vst [vmem:[%s1798 + $0x14] sm:$0x1] %v1819
    %v1821 = vld [vmem:[%s1798 + $0x18] sm:$0xf]
    %v1822 = vsel %vm1800, %v1668, %v1821
    %1823 = vst [vmem:[%s1798 + $0x18] sm:$0xf] %v1822
    %v1824 = vld [vmem:[%s1798 + $0x1c] sm:$0x1]
    %v1825 = vsel %vm1805, %v1669, %v1824
    %1826 = vst [vmem:[%s1798 + $0x1c] sm:$0x1] %v1825
    %v1827 = vld [vmem:[%s1798 + $0x20] sm:$0xf]
    %v1828 = vsel %vm1800, %v1676, %v1827
    %1829 = vst [vmem:[%s1798 + $0x20] sm:$0xf] %v1828
    %v1830 = vld [vmem:[%s1798 + $0x24] sm:$0x1]
    %v1831 = vsel %vm1805, %v1677, %v1830
    %1832 = vst [vmem:[%s1798 + $0x24] sm:$0x1] %v1831
    %v1833 = vld [vmem:[%s1798 + $0x28] sm:$0xf]
    %v1834 = vsel %vm1800, %v1684, %v1833
    %1835 = vst [vmem:[%s1798 + $0x28] sm:$0xf] %v1834
    %v1836 = vld [vmem:[%s1798 + $0x2c] sm:$0x1]
    %v1837 = vsel %vm1805, %v1685, %v1836
    %1838 = vst [vmem:[%s1798 + $0x2c] sm:$0x1] %v1837
    %v1839 = vld [vmem:[%s1798 + $0x30] sm:$0xf]
    %v1840 = vsel %vm1800, %v1692, %v1839
    %1841 = vst [vmem:[%s1798 + $0x30] sm:$0xf] %v1840
    %v1842 = vld [vmem:[%s1798 + $0x34] sm:$0x1]
    %v1843 = vsel %vm1805, %v1693, %v1842
    %1844 = vst [vmem:[%s1798 + $0x34] sm:$0x1] %v1843
    %v1845 = vld [vmem:[%s1798 + $0x38] sm:$0xf]
    %v1846 = vsel %vm1800, %v1700, %v1845
    %1847 = vst [vmem:[%s1798 + $0x38] sm:$0xf] %v1846
    %v1848 = vld [vmem:[%s1798 + $0x3c] sm:$0x1]
    %v1849 = vsel %vm1805, %v1701, %v1848
    %1850 = vst [vmem:[%s1798 + $0x3c] sm:$0x1] %v1849
    %v1851 = vld [vmem:[%s1798 + $0x50] sm:$0xf]
    %v1852 = vsel %vm1800, %v1708, %v1851
    %1853 = vst [vmem:[%s1798 + $0x50] sm:$0xf] %v1852
    %v1854 = vld [vmem:[%s1798 + $0x54] sm:$0x1]
    %v1855 = vsel %vm1805, %v1709, %v1854
    %1856 = vst [vmem:[%s1798 + $0x54] sm:$0x1] %v1855
    %v1857 = vld [vmem:[%s1798 + $0x58] sm:$0xf]
    %v1858 = vsel %vm1800, %v1716, %v1857
    %1859 = vst [vmem:[%s1798 + $0x58] sm:$0xf] %v1858
    %v1860 = vld [vmem:[%s1798 + $0x5c] sm:$0x1]
    %v1861 = vsel %vm1805, %v1717, %v1860
    %1862 = vst [vmem:[%s1798 + $0x5c] sm:$0x1] %v1861
    %v1863 = vld [vmem:[%s1798 + $0x60] sm:$0xf]
    %v1864 = vsel %vm1800, %v1724, %v1863
    %1865 = vst [vmem:[%s1798 + $0x60] sm:$0xf] %v1864
    %v1866 = vld [vmem:[%s1798 + $0x64] sm:$0x1]
    %v1867 = vsel %vm1805, %v1725, %v1866
    %1868 = vst [vmem:[%s1798 + $0x64] sm:$0x1] %v1867
    %v1869 = vld [vmem:[%s1798 + $0x68] sm:$0xf]
    %v1870 = vsel %vm1800, %v1732, %v1869
    %1871 = vst [vmem:[%s1798 + $0x68] sm:$0xf] %v1870
    %v1872 = vld [vmem:[%s1798 + $0x6c] sm:$0x1]
    %v1873 = vsel %vm1805, %v1733, %v1872
    %1874 = vst [vmem:[%s1798 + $0x6c] sm:$0x1] %v1873
    %v1875 = vld [vmem:[%s1798 + $0x70] sm:$0xf]
    %v1876 = vsel %vm1800, %v1740, %v1875
    %1877 = vst [vmem:[%s1798 + $0x70] sm:$0xf] %v1876
    %v1878 = vld [vmem:[%s1798 + $0x74] sm:$0x1]
    %v1879 = vsel %vm1805, %v1741, %v1878
    %1880 = vst [vmem:[%s1798 + $0x74] sm:$0x1] %v1879
    %v1881 = vld [vmem:[%s1798 + $0x78] sm:$0xf]
    %v1882 = vsel %vm1800, %v1748, %v1881
    %1883 = vst [vmem:[%s1798 + $0x78] sm:$0xf] %v1882
    %v1884 = vld [vmem:[%s1798 + $0x7c] sm:$0x1]
    %v1885 = vsel %vm1805, %v1749, %v1884
    %1886 = vst [vmem:[%s1798 + $0x7c] sm:$0x1] %v1885
    %v1887 = vld [vmem:[%s1798 + $0x80] sm:$0xf]
    %v1888 = vsel %vm1800, %v1756, %v1887
    %1889 = vst [vmem:[%s1798 + $0x80] sm:$0xf] %v1888
    %v1890 = vld [vmem:[%s1798 + $0x84] sm:$0x1]
    %v1891 = vsel %vm1805, %v1757, %v1890
    %1892 = vst [vmem:[%s1798 + $0x84] sm:$0x1] %v1891
    %v1893 = vld [vmem:[%s1798 + $0x88] sm:$0xf]
    %v1894 = vsel %vm1800, %v1764, %v1893
    %1895 = vst [vmem:[%s1798 + $0x88] sm:$0xf] %v1894
    %v1896 = vld [vmem:[%s1798 + $0x8c] sm:$0x1]
    %v1897 = vsel %vm1805, %v1765, %v1896
    %1898 = vst [vmem:[%s1798 + $0x8c] sm:$0x1] %v1897
    %v1899 = vld [vmem:[#allocation3] sm:$0xf]
    %v1900 = vld [vmem:[#allocation3 + $0x4] sm:$0x1]
    %v1901 = vld [vmem:[#allocation3 + $0x8] sm:$0xf]
    %v1902 = vld [vmem:[#allocation3 + $0xc] sm:$0x1]
    %v1903 = vld [vmem:[#allocation3 + $0x10] sm:$0xf]
    %v1904 = vld [vmem:[#allocation3 + $0x14] sm:$0x1]
    %v1905 = vld [vmem:[#allocation3 + $0x18] sm:$0xf]
    %v1906 = vld [vmem:[#allocation3 + $0x1c] sm:$0x1]
    %v1907 = vld [vmem:[#allocation3 + $0x20] sm:$0xf]
    %v1908 = vld [vmem:[#allocation3 + $0x24] sm:$0x1]
    %v1909 = vld [vmem:[#allocation3 + $0x28] sm:$0xf]
    %v1910 = vld [vmem:[#allocation3 + $0x2c] sm:$0x1]
    %v1911 = vld [vmem:[#allocation3 + $0x30] sm:$0xf]
    %v1912 = vld [vmem:[#allocation3 + $0x34] sm:$0x1]
    %v1913 = vld [vmem:[#allocation3 + $0x38] sm:$0xf]
    %v1914 = vld [vmem:[#allocation3 + $0x3c] sm:$0x1]
    %v1915 = vld [vmem:[#allocation3 + $0x40] sm:$0xf]
    %v1916 = vld [vmem:[#allocation3 + $0x44] sm:$0x1]
    %v1917 = vld [vmem:[#allocation3 + $0x48] sm:$0xf]
    %v1918 = vld [vmem:[#allocation3 + $0x4c] sm:$0x1]
    %v1919 = vld [vmem:[#allocation3 + $0x50] sm:$0xf]
    %v1920 = vld [vmem:[#allocation3 + $0x54] sm:$0x1]
    %v1921 = vld [vmem:[#allocation3 + $0x58] sm:$0xf]
    %v1922 = vld [vmem:[#allocation3 + $0x5c] sm:$0x1]
    %v1923 = vld [vmem:[#allocation3 + $0x60] sm:$0xf]
    %v1924 = vld [vmem:[#allocation3 + $0x64] sm:$0x1]
    %v1925 = vld [vmem:[#allocation3 + $0x68] sm:$0xf]
    %v1926 = vld [vmem:[#allocation3 + $0x6c] sm:$0x1]
    %v1927 = vld [vmem:[#allocation3 + $0x70] sm:$0xf]
    %v1928 = vld [vmem:[#allocation3 + $0x74] sm:$0x1]
    %v1929 = vld [vmem:[#allocation3 + $0x78] sm:$0xf]
    %v1930 = vld [vmem:[#allocation3 + $0x7c] sm:$0x1]
    %v1931 = vld [vmem:[#allocation3 + $0x80] sm:$0xf]
    %v1932 = vld [vmem:[#allocation3 + $0x84] sm:$0x1]
    %v1933 = vld [vmem:[#allocation3 + $0x88] sm:$0xf]
    %v1934 = vld [vmem:[#allocation3 + $0x8c] sm:$0x1]
    %v1935 = vld [vmem:[#allocation3 + $0x90] sm:$0xf]
    %v1936 = vld [vmem:[#allocation3 + $0x94] sm:$0x1]
    %v1937 = vld [vmem:[#allocation3 + $0x98] sm:$0xf]
    %v1938 = vld [vmem:[#allocation3 + $0x9c] sm:$0x1]
    %v1940 = vshrl.u32 %v1899, 16
    %v1942 = vrot.slane %v1940, 4
    %v1943 = vshll.u32 %v1899, 16
    %v1945 = vrot.slane %v1943, 5
    %v1946 = vor.u32 %v1942, %v1945
    %v1947 = vrot.slane %v1946, 4
    %v1949 = vshll.u32 %v1900, 16
    %v1951 = vrot.slane %v1949, 5
    %v1952 = vsel %vm455, %v1947, %v1951
    %v1954 = vshrl.u32 %v1901, 16
    %v1956 = vrot.slane %v1954, 4
    %v1957 = vshll.u32 %v1901, 16
    %v1959 = vrot.slane %v1957, 5
    %v1960 = vor.u32 %v1956, %v1959
    %v1961 = vrot.slane %v1960, 4
    %v1963 = vshll.u32 %v1902, 16
    %v1965 = vrot.slane %v1963, 5
    %v1966 = vsel %vm455, %v1961, %v1965
    %v1968 = vshrl.u32 %v1903, 16
    %v1970 = vrot.slane %v1968, 4
    %v1971 = vshll.u32 %v1903, 16
    %v1973 = vrot.slane %v1971, 5
    %v1974 = vor.u32 %v1970, %v1973
    %v1975 = vrot.slane %v1974, 4
    %v1977 = vshll.u32 %v1904, 16
    %v1979 = vrot.slane %v1977, 5
    %v1980 = vsel %vm455, %v1975, %v1979
    %v1982 = vshrl.u32 %v1905, 16
    %v1984 = vrot.slane %v1982, 4
    %v1985 = vshll.u32 %v1905, 16
    %v1987 = vrot.slane %v1985, 5
    %v1988 = vor.u32 %v1984, %v1987
    %v1989 = vrot.slane %v1988, 4
    %v1991 = vshll.u32 %v1906, 16
    %v1993 = vrot.slane %v1991, 5
    %v1994 = vsel %vm455, %v1989, %v1993
    %v1996 = vshrl.u32 %v1907, 16
    %v1998 = vrot.slane %v1996, 4
    %v1999 = vshll.u32 %v1907, 16
    %v2001 = vrot.slane %v1999, 5
    %v2002 = vor.u32 %v1998, %v2001
    %v2003 = vrot.slane %v2002, 4
    %v2005 = vshll.u32 %v1908, 16
    %v2007 = vrot.slane %v2005, 5
    %v2008 = vsel %vm455, %v2003, %v2007
    %v2010 = vshrl.u32 %v1909, 16
    %v2012 = vrot.slane %v2010, 4
    %v2013 = vshll.u32 %v1909, 16
    %v2015 = vrot.slane %v2013, 5
    %v2016 = vor.u32 %v2012, %v2015
    %v2017 = vrot.slane %v2016, 4
    %v2019 = vshll.u32 %v1910, 16
    %v2021 = vrot.slane %v2019, 5
    %v2022 = vsel %vm455, %v2017, %v2021
    %v2024 = vshrl.u32 %v1911, 16
    %v2026 = vrot.slane %v2024, 4
    %v2027 = vshll.u32 %v1911, 16
    %v2029 = vrot.slane %v2027, 5
    %v2030 = vor.u32 %v2026, %v2029
    %v2031 = vrot.slane %v2030, 4
    %v2033 = vshll.u32 %v1912, 16
    %v2035 = vrot.slane %v2033, 5
    %v2036 = vsel %vm455, %v2031, %v2035
    %v2038 = vshrl.u32 %v1913, 16
    %v2040 = vrot.slane %v2038, 4
    %v2041 = vshll.u32 %v1913, 16
    %v2043 = vrot.slane %v2041, 5
    %v2044 = vor.u32 %v2040, %v2043
    %v2045 = vrot.slane %v2044, 4
    %v2047 = vshll.u32 %v1914, 16
    %v2049 = vrot.slane %v2047, 5
    %v2050 = vsel %vm455, %v2045, %v2049
    %v2052 = vshrl.u32 %v1919, 16
    %v2054 = vrot.slane %v2052, 4
    %v2055 = vshll.u32 %v1919, 16
    %v2057 = vrot.slane %v2055, 5
    %v2058 = vor.u32 %v2054, %v2057
    %v2059 = vrot.slane %v2058, 4
    %v2061 = vshll.u32 %v1920, 16
    %v2063 = vrot.slane %v2061, 5
    %v2064 = vsel %vm455, %v2059, %v2063
    %v2066 = vshrl.u32 %v1921, 16
    %v2068 = vrot.slane %v2066, 4
    %v2069 = vshll.u32 %v1921, 16
    %v2071 = vrot.slane %v2069, 5
    %v2072 = vor.u32 %v2068, %v2071
    %v2073 = vrot.slane %v2072, 4
    %v2075 = vshll.u32 %v1922, 16
    %v2077 = vrot.slane %v2075, 5
    %v2078 = vsel %vm455, %v2073, %v2077
    %v2080 = vshrl.u32 %v1923, 16
    %v2082 = vrot.slane %v2080, 4
    %v2083 = vshll.u32 %v1923, 16
    %v2085 = vrot.slane %v2083, 5
    %v2086 = vor.u32 %v2082, %v2085
    %v2087 = vrot.slane %v2086, 4
    %v2089 = vshll.u32 %v1924, 16
    %v2091 = vrot.slane %v2089, 5
    %v2092 = vsel %vm455, %v2087, %v2091
    %v2094 = vshrl.u32 %v1925, 16
    %v2096 = vrot.slane %v2094, 4
    %v2097 = vshll.u32 %v1925, 16
    %v2099 = vrot.slane %v2097, 5
    %v2100 = vor.u32 %v2096, %v2099
    %v2101 = vrot.slane %v2100, 4
    %v2103 = vshll.u32 %v1926, 16
    %v2105 = vrot.slane %v2103, 5
    %v2106 = vsel %vm455, %v2101, %v2105
    %v2108 = vshrl.u32 %v1927, 16
    %v2110 = vrot.slane %v2108, 4
    %v2111 = vshll.u32 %v1927, 16
    %v2113 = vrot.slane %v2111, 5
    %v2114 = vor.u32 %v2110, %v2113
    %v2115 = vrot.slane %v2114, 4
    %v2117 = vshll.u32 %v1928, 16
    %v2119 = vrot.slane %v2117, 5
    %v2120 = vsel %vm455, %v2115, %v2119
    %v2122 = vshrl.u32 %v1929, 16
    %v2124 = vrot.slane %v2122, 4
    %v2125 = vshll.u32 %v1929, 16
    %v2127 = vrot.slane %v2125, 5
    %v2128 = vor.u32 %v2124, %v2127
    %v2129 = vrot.slane %v2128, 4
    %v2131 = vshll.u32 %v1930, 16
    %v2133 = vrot.slane %v2131, 5
    %v2134 = vsel %vm455, %v2129, %v2133
    %v2136 = vshrl.u32 %v1931, 16
    %v2138 = vrot.slane %v2136, 4
    %v2139 = vshll.u32 %v1931, 16
    %v2141 = vrot.slane %v2139, 5
    %v2142 = vor.u32 %v2138, %v2141
    %v2143 = vrot.slane %v2142, 4
    %v2145 = vshll.u32 %v1932, 16
    %v2147 = vrot.slane %v2145, 5
    %v2148 = vsel %vm455, %v2143, %v2147
    %v2150 = vshrl.u32 %v1933, 16
    %v2152 = vrot.slane %v2150, 4
    %v2153 = vshll.u32 %v1933, 16
    %v2155 = vrot.slane %v2153, 5
    %v2156 = vor.u32 %v2152, %v2155
    %v2157 = vrot.slane %v2156, 4
    %v2159 = vshll.u32 %v1934, 16
    %v2161 = vrot.slane %v2159, 5
    %v2162 = vsel %vm455, %v2157, %v2161
    %v2195 = vrot.slane %v1899, 5
    %v2196 = vrot.slane %v2195, 4
    %v2197 = vrot.slane %v1900, 5
    %v2198 = vsel %vm714, %v2196, %v2197
    %v2199 = vrot.slane %v1901, 5
    %v2200 = vrot.slane %v2199, 4
    %v2201 = vrot.slane %v1902, 5
    %v2202 = vsel %vm714, %v2200, %v2201
    %v2203 = vrot.slane %v1903, 5
    %v2204 = vrot.slane %v2203, 4
    %v2205 = vrot.slane %v1904, 5
    %v2206 = vsel %vm714, %v2204, %v2205
    %v2207 = vrot.slane %v1905, 5
    %v2208 = vrot.slane %v2207, 4
    %v2209 = vrot.slane %v1906, 5
    %v2210 = vsel %vm714, %v2208, %v2209
    %v2211 = vrot.slane %v1907, 5
    %v2212 = vrot.slane %v2211, 4
    %v2213 = vrot.slane %v1908, 5
    %v2214 = vsel %vm714, %v2212, %v2213
    %v2215 = vrot.slane %v1909, 5
    %v2216 = vrot.slane %v2215, 4
    %v2217 = vrot.slane %v1910, 5
    %v2218 = vsel %vm714, %v2216, %v2217
    %v2219 = vrot.slane %v1911, 5
    %v2220 = vrot.slane %v2219, 4
    %v2221 = vrot.slane %v1912, 5
    %v2222 = vsel %vm714, %v2220, %v2221
    %v2223 = vrot.slane %v1913, 5
    %v2224 = vrot.slane %v2223, 4
    %v2225 = vrot.slane %v1914, 5
    %v2226 = vsel %vm714, %v2224, %v2225
    %v2227 = vrot.slane %v1919, 5
    %v2228 = vrot.slane %v2227, 4
    %v2229 = vrot.slane %v1920, 5
    %v2230 = vsel %vm714, %v2228, %v2229
    %v2231 = vrot.slane %v1921, 5
    %v2232 = vrot.slane %v2231, 4
    %v2233 = vrot.slane %v1922, 5
    %v2234 = vsel %vm714, %v2232, %v2233
    %v2235 = vrot.slane %v1923, 5
    %v2236 = vrot.slane %v2235, 4
    %v2237 = vrot.slane %v1924, 5
    %v2238 = vsel %vm714, %v2236, %v2237
    %v2239 = vrot.slane %v1925, 5
    %v2240 = vrot.slane %v2239, 4
    %v2241 = vrot.slane %v1926, 5
    %v2242 = vsel %vm714, %v2240, %v2241
    %v2243 = vrot.slane %v1927, 5
    %v2244 = vrot.slane %v2243, 4
    %v2245 = vrot.slane %v1928, 5
    %v2246 = vsel %vm714, %v2244, %v2245
    %v2247 = vrot.slane %v1929, 5
    %v2248 = vrot.slane %v2247, 4
    %v2249 = vrot.slane %v1930, 5
    %v2250 = vsel %vm714, %v2248, %v2249
    %v2251 = vrot.slane %v1931, 5
    %v2252 = vrot.slane %v2251, 4
    %v2253 = vrot.slane %v1932, 5
    %v2254 = vsel %vm714, %v2252, %v2253
    %v2255 = vrot.slane %v1933, 5
    %v2256 = vrot.slane %v2255, 4
    %v2257 = vrot.slane %v1934, 5
    %v2258 = vsel %vm714, %v2256, %v2257
    %v2260 = vshrl.u32 %v1915, 16
    %v2262 = vrot.slane %v2260, 4
    %v2263 = vshll.u32 %v1915, 16
    %v2265 = vrot.slane %v2263, 5
    %v2266 = vor.u32 %v2262, %v2265
    %v2267 = vrot.slane %v2266, 4
    %v2269 = vshll.u32 %v1916, 16
    %v2271 = vrot.slane %v2269, 5
    %v2272 = vsel %vm455, %v2267, %v2271
    %v2274 = vshrl.u32 %v1935, 16
    %v2276 = vrot.slane %v2274, 4
    %v2277 = vshll.u32 %v1935, 16
    %v2279 = vrot.slane %v2277, 5
    %v2280 = vor.u32 %v2276, %v2279
    %v2281 = vrot.slane %v2280, 4
    %v2283 = vshll.u32 %v1936, 16
    %v2285 = vrot.slane %v2283, 5
    %v2286 = vsel %vm455, %v2281, %v2285
    %v2291 = vrot.slane %v1915, 5
    %v2292 = vrot.slane %v2291, 4
    %v2293 = vrot.slane %v1916, 5
    %v2294 = vsel %vm714, %v2292, %v2293
    %v2295 = vrot.slane %v1935, 5
    %v2296 = vrot.slane %v2295, 4
    %v2297 = vrot.slane %v1936, 5
    %v2298 = vsel %vm714, %v2296, %v2297
    %v2300 = vshrl.u32 %v1917, 16
    %v2302 = vrot.slane %v2300, 4
    %v2303 = vshll.u32 %v1917, 16
    %v2305 = vrot.slane %v2303, 5
    %v2306 = vor.u32 %v2302, %v2305
    %v2307 = vrot.slane %v2306, 4
    %v2309 = vshll.u32 %v1918, 16
    %v2311 = vrot.slane %v2309, 5
    %v2312 = vsel %vm455, %v2307, %v2311
    %v2314 = vshrl.u32 %v1937, 16
    %v2316 = vrot.slane %v2314, 4
    %v2317 = vshll.u32 %v1937, 16
    %v2319 = vrot.slane %v2317, 5
    %v2320 = vor.u32 %v2316, %v2319
    %v2321 = vrot.slane %v2320, 4
    %v2323 = vshll.u32 %v1938, 16
    %v2325 = vrot.slane %v2323, 5
    %v2326 = vsel %vm455, %v2321, %v2325
    %v2331 = vrot.slane %v1917, 5
    %v2332 = vrot.slane %v2331, 4
    %v2333 = vrot.slane %v1918, 5
    %v2334 = vsel %vm714, %v2332, %v2333
    %v2335 = vrot.slane %v1937, 5
    %v2336 = vrot.slane %v2335, 4
    %v2337 = vrot.slane %v1938, 5
    %v2338 = vsel %vm714, %v2336, %v2337
    %v2339 = vunpack.c.l.b16 %v1899
    %v2340 = vunpack.c.l.b16 %v1901
    %v2341 = vunpack.c.l.b16 %v1903
    %v2342 = vunpack.c.l.b16 %v1905
    %v2343 = vunpack.c.l.b16 %v1907
    %v2344 = vunpack.c.l.b16 %v1909
    %v2345 = vunpack.c.l.b16 %v1911
    %v2346 = vunpack.c.l.b16 %v1913
    %v2347 = vunpack.c.l.b16 %v1919
    %v2348 = vunpack.c.l.b16 %v1921
    %v2349 = vunpack.c.l.b16 %v1923
    %v2350 = vunpack.c.l.b16 %v1925
    %v2351 = vunpack.c.l.b16 %v1927
    %v2352 = vunpack.c.l.b16 %v1929
    %v2353 = vunpack.c.l.b16 %v1931
    %v2354 = vunpack.c.l.b16 %v1933
    %v2355 = vpack.c.b16 %v2340, %v2339
    %v2356 = vpack.c.b16 %v2342, %v2341
    %v2357 = vpack.c.b16 %v2344, %v2343
    %v2358 = vpack.c.b16 %v2346, %v2345
    %v2359 = vpack.c.b16 %v2348, %v2347
    %v2360 = vpack.c.b16 %v2350, %v2349
    %v2361 = vpack.c.b16 %v2352, %v2351
    %v2362 = vpack.c.b16 %v2354, %v2353
    %v2363 = vunpack.c.l.b16 %v1952
    %v2364 = vunpack.c.l.b16 %v1966
    %v2365 = vunpack.c.l.b16 %v1980
    %v2366 = vunpack.c.l.b16 %v1994
    %v2367 = vunpack.c.l.b16 %v2008
    %v2368 = vunpack.c.l.b16 %v2022
    %v2369 = vunpack.c.l.b16 %v2036
    %v2370 = vunpack.c.l.b16 %v2050
    %v2371 = vunpack.c.l.b16 %v2064
    %v2372 = vunpack.c.l.b16 %v2078
    %v2373 = vunpack.c.l.b16 %v2092
    %v2374 = vunpack.c.l.b16 %v2106
    %v2375 = vunpack.c.l.b16 %v2120
    %v2376 = vunpack.c.l.b16 %v2134
    %v2377 = vunpack.c.l.b16 %v2148
    %v2378 = vunpack.c.l.b16 %v2162
    %v2379 = vpack.c.b16 %v2364, %v2363
    %v2380 = vpack.c.b16 %v2366, %v2365
    %v2381 = vpack.c.b16 %v2368, %v2367
    %v2382 = vpack.c.b16 %v2370, %v2369
    %v2383 = vpack.c.b16 %v2372, %v2371
    %v2384 = vpack.c.b16 %v2374, %v2373
    %v2385 = vpack.c.b16 %v2376, %v2375
    %v2386 = vpack.c.b16 %v2378, %v2377
    %2387 = vrot.lane.b32.xlu0 %v2379, 8
    %v2388 = vpop.permute.xlu0 %2387
    %2389 = vrot.lane.b32.xlu0 %v2380, 8
    %v2390 = vpop.permute.xlu0 %2389
    %2391 = vrot.lane.b32.xlu0 %v2381, 8
    %v2392 = vpop.permute.xlu0 %2391
    %2393 = vrot.lane.b32.xlu0 %v2382, 8
    %v2394 = vpop.permute.xlu0 %2393
    %2395 = vrot.lane.b32.xlu0 %v2383, 8
    %v2396 = vpop.permute.xlu0 %2395
    %2397 = vrot.lane.b32.xlu0 %v2384, 8
    %v2398 = vpop.permute.xlu0 %2397
    %2399 = vrot.lane.b32.xlu0 %v2385, 8
    %v2400 = vpop.permute.xlu0 %2399
    %2401 = vrot.lane.b32.xlu0 %v2386, 8
    %v2402 = vpop.permute.xlu0 %2401
    %v2403 = vunpack.c.l.b16 %v2198
    %v2404 = vunpack.c.l.b16 %v2202
    %v2405 = vunpack.c.l.b16 %v2206
    %v2406 = vunpack.c.l.b16 %v2210
    %v2407 = vunpack.c.l.b16 %v2214
    %v2408 = vunpack.c.l.b16 %v2218
    %v2409 = vunpack.c.l.b16 %v2222
    %v2410 = vunpack.c.l.b16 %v2226
    %v2411 = vunpack.c.l.b16 %v2230
    %v2412 = vunpack.c.l.b16 %v2234
    %v2413 = vunpack.c.l.b16 %v2238
    %v2414 = vunpack.c.l.b16 %v2242
    %v2415 = vunpack.c.l.b16 %v2246
    %v2416 = vunpack.c.l.b16 %v2250
    %v2417 = vunpack.c.l.b16 %v2254
    %v2418 = vunpack.c.l.b16 %v2258
    %v2419 = vpack.c.b16 %v2404, %v2403
    %v2420 = vpack.c.b16 %v2406, %v2405
    %v2421 = vpack.c.b16 %v2408, %v2407
    %v2422 = vpack.c.b16 %v2410, %v2409
    %v2423 = vpack.c.b16 %v2412, %v2411
    %v2424 = vpack.c.b16 %v2414, %v2413
    %v2425 = vpack.c.b16 %v2416, %v2415
    %v2426 = vpack.c.b16 %v2418, %v2417
    %2427 = vrot.lane.b32.xlu0 %v2419, 16
    %v2428 = vpop.permute.xlu0 %2427
    %2429 = vrot.lane.b32.xlu0 %v2420, 16
    %v2430 = vpop.permute.xlu0 %2429
    %2431 = vrot.lane.b32.xlu0 %v2421, 16
    %v2432 = vpop.permute.xlu0 %2431
    %2433 = vrot.lane.b32.xlu0 %v2422, 16
    %v2434 = vpop.permute.xlu0 %2433
    %2435 = vrot.lane.b32.xlu0 %v2423, 16
    %v2436 = vpop.permute.xlu0 %2435
    %2437 = vrot.lane.b32.xlu0 %v2424, 16
    %v2438 = vpop.permute.xlu0 %2437
    %2439 = vrot.lane.b32.xlu0 %v2425, 16
    %v2440 = vpop.permute.xlu0 %2439
    %2441 = vrot.lane.b32.xlu0 %v2426, 16
    %v2442 = vpop.permute.xlu0 %2441
    %v2443 = vunpack.c.l.b16 %v1915
    %v2444 = vunpack.c.l.b16 %v1935
    %v2445 = vpack.c.b16 %v2341, %v2340
    %v2446 = vpack.c.b16 %v2343, %v2342
    %v2447 = vpack.c.b16 %v2345, %v2344
    %v2448 = vpack.c.b16 %v2443, %v2346
    %v2449 = vpack.c.b16 %v2349, %v2348
    %v2450 = vpack.c.b16 %v2351, %v2350
    %v2451 = vpack.c.b16 %v2353, %v2352
    %v2452 = vpack.c.b16 %v2444, %v2354
    %2453 = vrot.lane.b32.xlu0 %v2445, 24
    %v2454 = vpop.permute.xlu0 %2453
    %2455 = vrot.lane.b32.xlu0 %v2446, 24
    %v2456 = vpop.permute.xlu0 %2455
    %2457 = vrot.lane.b32.xlu0 %v2447, 24
    %v2458 = vpop.permute.xlu0 %2457
    %2459 = vrot.lane.b32.xlu0 %v2448, 24
    %v2460 = vpop.permute.xlu0 %2459
    %2461 = vrot.lane.b32.xlu0 %v2449, 24
    %v2462 = vpop.permute.xlu0 %2461
    %2463 = vrot.lane.b32.xlu0 %v2450, 24
    %v2464 = vpop.permute.xlu0 %2463
    %2465 = vrot.lane.b32.xlu0 %v2451, 24
    %v2466 = vpop.permute.xlu0 %2465
    %2467 = vrot.lane.b32.xlu0 %v2452, 24
    %v2468 = vpop.permute.xlu0 %2467
    %v2469 = vunpack.c.l.b16 %v2272
    %v2470 = vunpack.c.l.b16 %v2286
    %v2471 = vpack.c.b16 %v2365, %v2364
    %v2472 = vpack.c.b16 %v2367, %v2366
    %v2473 = vpack.c.b16 %v2369, %v2368
    %v2474 = vpack.c.b16 %v2469, %v2370
    %v2475 = vpack.c.b16 %v2373, %v2372
    %v2476 = vpack.c.b16 %v2375, %v2374
    %v2477 = vpack.c.b16 %v2377, %v2376
    %v2478 = vpack.c.b16 %v2470, %v2378
    %2479 = vrot.lane.b32.xlu0 %v2471, 32
    %v2480 = vpop.permute.xlu0 %2479
    %2481 = vrot.lane.b32.xlu0 %v2472, 32
    %v2482 = vpop.permute.xlu0 %2481
    %2483 = vrot.lane.b32.xlu0 %v2473, 32
    %v2484 = vpop.permute.xlu0 %2483
    %2485 = vrot.lane.b32.xlu0 %v2474, 32
    %v2486 = vpop.permute.xlu0 %2485
    %2487 = vrot.lane.b32.xlu0 %v2475, 32
    %v2488 = vpop.permute.xlu0 %2487
    %2489 = vrot.lane.b32.xlu0 %v2476, 32
    %v2490 = vpop.permute.xlu0 %2489
    %2491 = vrot.lane.b32.xlu0 %v2477, 32
    %v2492 = vpop.permute.xlu0 %2491
    %2493 = vrot.lane.b32.xlu0 %v2478, 32
    %v2494 = vpop.permute.xlu0 %2493
    %v2495 = vunpack.c.l.b16 %v2294
    %v2496 = vunpack.c.l.b16 %v2298
    %v2497 = vpack.c.b16 %v2405, %v2404
    %v2498 = vpack.c.b16 %v2407, %v2406
    %v2499 = vpack.c.b16 %v2409, %v2408
    %v2500 = vpack.c.b16 %v2495, %v2410
    %v2501 = vpack.c.b16 %v2413, %v2412
    %v2502 = vpack.c.b16 %v2415, %v2414
    %v2503 = vpack.c.b16 %v2417, %v2416
    %v2504 = vpack.c.b16 %v2496, %v2418
    %2505 = vrot.lane.b32.xlu0 %v2497, 40
    %v2506 = vpop.permute.xlu0 %2505
    %2507 = vrot.lane.b32.xlu0 %v2498, 40
    %v2508 = vpop.permute.xlu0 %2507
    %2509 = vrot.lane.b32.xlu0 %v2499, 40
    %v2510 = vpop.permute.xlu0 %2509
    %2511 = vrot.lane.b32.xlu0 %v2500, 40
    %v2512 = vpop.permute.xlu0 %2511
    %2513 = vrot.lane.b32.xlu0 %v2501, 40
    %v2514 = vpop.permute.xlu0 %2513
    %2515 = vrot.lane.b32.xlu0 %v2502, 40
    %v2516 = vpop.permute.xlu0 %2515
    %2517 = vrot.lane.b32.xlu0 %v2503, 40
    %v2518 = vpop.permute.xlu0 %2517
    %2519 = vrot.lane.b32.xlu0 %v2504, 40
    %v2520 = vpop.permute.xlu0 %2519
    %v2521 = vunpack.c.l.b16 %v1917
    %v2522 = vunpack.c.l.b16 %v1937
    %v2523 = vpack.c.b16 %v2521, %v2443
    %v2524 = vpack.c.b16 %v2522, %v2444
    %2525 = vrot.lane.b32.xlu0 %v2356, 48
    %v2526 = vpop.permute.xlu0 %2525
    %2527 = vrot.lane.b32.xlu0 %v2357, 48
    %v2528 = vpop.permute.xlu0 %2527
    %2529 = vrot.lane.b32.xlu0 %v2358, 48
    %v2530 = vpop.permute.xlu0 %2529
    %2531 = vrot.lane.b32.xlu0 %v2523, 48
    %v2532 = vpop.permute.xlu0 %2531
    %2533 = vrot.lane.b32.xlu0 %v2360, 48
    %v2534 = vpop.permute.xlu0 %2533
    %2535 = vrot.lane.b32.xlu0 %v2361, 48
    %v2536 = vpop.permute.xlu0 %2535
    %2537 = vrot.lane.b32.xlu0 %v2362, 48
    %v2538 = vpop.permute.xlu0 %2537
    %2539 = vrot.lane.b32.xlu0 %v2524, 48
    %v2540 = vpop.permute.xlu0 %2539
    %v2541 = vunpack.c.l.b16 %v2312
    %v2542 = vunpack.c.l.b16 %v2326
    %v2543 = vpack.c.b16 %v2541, %v2469
    %v2544 = vpack.c.b16 %v2542, %v2470
    %2545 = vrot.lane.b32.xlu0 %v2380, 56
    %v2546 = vpop.permute.xlu0 %2545
    %2547 = vrot.lane.b32.xlu0 %v2381, 56
    %v2548 = vpop.permute.xlu0 %2547
    %2549 = vrot.lane.b32.xlu0 %v2382, 56
    %v2550 = vpop.permute.xlu0 %2549
    %2551 = vrot.lane.b32.xlu0 %v2543, 56
    %v2552 = vpop.permute.xlu0 %2551
    %2553 = vrot.lane.b32.xlu0 %v2384, 56
    %v2554 = vpop.permute.xlu0 %2553
    %2555 = vrot.lane.b32.xlu0 %v2385, 56
    %v2556 = vpop.permute.xlu0 %2555
    %2557 = vrot.lane.b32.xlu0 %v2386, 56
    %v2558 = vpop.permute.xlu0 %2557
    %2559 = vrot.lane.b32.xlu0 %v2544, 56
    %v2560 = vpop.permute.xlu0 %2559
    %v2561 = vunpack.c.l.b16 %v2334
    %v2562 = vunpack.c.l.b16 %v2338
    %v2563 = vpack.c.b16 %v2561, %v2495
    %v2564 = vpack.c.b16 %v2562, %v2496
    %2565 = vrot.lane.b32.xlu0 %v2420, 64
    %v2566 = vpop.permute.xlu0 %2565
    %2567 = vrot.lane.b32.xlu0 %v2421, 64
    %v2568 = vpop.permute.xlu0 %2567
    %2569 = vrot.lane.b32.xlu0 %v2422, 64
    %v2570 = vpop.permute.xlu0 %2569
    %2571 = vrot.lane.b32.xlu0 %v2563, 64
    %v2572 = vpop.permute.xlu0 %2571
    %2573 = vrot.lane.b32.xlu0 %v2424, 64
    %v2574 = vpop.permute.xlu0 %2573
    %2575 = vrot.lane.b32.xlu0 %v2425, 64
    %v2576 = vpop.permute.xlu0 %2575
    %2577 = vrot.lane.b32.xlu0 %v2426, 64
    %v2578 = vpop.permute.xlu0 %2577
    %2579 = vrot.lane.b32.xlu0 %v2564, 64
    %v2580 = vpop.permute.xlu0 %2579
    %vm2581 = vcmask 64512
    %v2584 = vsel %vm2581, %v2355, %v2388
    %v2587 = vsel %vm2581, %v2356, %v2390
    %v2590 = vsel %vm2581, %v2357, %v2392
    %v2593 = vsel %vm2581, %v2358, %v2394
    %v2596 = vsel %vm2581, %v2359, %v2396
    %v2599 = vsel %vm2581, %v2360, %v2398
    %v2602 = vsel %vm2581, %v2361, %v2400
    %v2605 = vsel %vm2581, %v2362, %v2402
    %v2607 = vsel %vm1085, %v2584, %v2428
    %v2609 = vsel %vm1085, %v2587, %v2430
    %v2611 = vsel %vm1085, %v2590, %v2432
    %v2613 = vsel %vm1085, %v2593, %v2434
    %v2615 = vsel %vm1085, %v2596, %v2436
    %v2617 = vsel %vm1085, %v2599, %v2438
    %v2619 = vsel %vm1085, %v2602, %v2440
    %v2621 = vsel %vm1085, %v2605, %v2442
    %vm2622 = vcmask 195584
    %v2624 = vsel %vm2622, %v2607, %v2454
    %v2626 = vsel %vm2622, %v2609, %v2456
    %v2628 = vsel %vm2622, %v2611, %v2458
    %v2630 = vsel %vm2622, %v2613, %v2460
    %v2632 = vsel %vm2622, %v2615, %v2462
    %v2634 = vsel %vm2622, %v2617, %v2464
    %v2636 = vsel %vm2622, %v2619, %v2466
    %v2638 = vsel %vm2622, %v2621, %v2468
    %v2640 = vsel %vm1110, %v2624, %v2480
    %v2642 = vsel %vm1110, %v2626, %v2482
    %v2644 = vsel %vm1110, %v2628, %v2484
    %v2646 = vsel %vm1110, %v2630, %v2486
    %v2648 = vsel %vm1110, %v2632, %v2488
    %v2650 = vsel %vm1110, %v2634, %v2490
    %v2652 = vsel %vm1110, %v2636, %v2492
    %v2654 = vsel %vm1110, %v2638, %v2494
    %vm2655 = vcmask 326656
    %v2657 = vsel %vm2655, %v2640, %v2506
    %v2659 = vsel %vm2655, %v2642, %v2508
    %v2661 = vsel %vm2655, %v2644, %v2510
    %v2663 = vsel %vm2655, %v2646, %v2512
    %v2665 = vsel %vm2655, %v2648, %v2514
    %v2667 = vsel %vm2655, %v2650, %v2516
    %v2669 = vsel %vm2655, %v2652, %v2518
    %v2671 = vsel %vm2655, %v2654, %v2520
    %v2673 = vsel %vm1127, %v2657, %v2526
    %v2675 = vsel %vm1127, %v2659, %v2528
    %v2677 = vsel %vm1127, %v2661, %v2530
    %v2679 = vsel %vm1127, %v2663, %v2532
    %v2681 = vsel %vm1127, %v2665, %v2534
    %v2683 = vsel %vm1127, %v2667, %v2536
    %v2685 = vsel %vm1127, %v2669, %v2538
    %v2687 = vsel %vm1127, %v2671, %v2540
    %vm2688 = vcmask 457728
    %v2690 = vsel %vm2688, %v2673, %v2546
    %v2692 = vsel %vm2688, %v2675, %v2548
    %v2694 = vsel %vm2688, %v2677, %v2550
    %v2696 = vsel %vm2688, %v2679, %v2552
    %v2698 = vsel %vm2688, %v2681, %v2554
    %v2700 = vsel %vm2688, %v2683, %v2556
    %v2702 = vsel %vm2688, %v2685, %v2558
    %v2704 = vsel %vm2688, %v2687, %v2560
    %v2706 = vsel %vm1144, %v2690, %v2566
    %v2708 = vsel %vm1144, %v2692, %v2568
    %v2710 = vsel %vm1144, %v2694, %v2570
    %v2712 = vsel %vm1144, %v2696, %v2572
    %v2714 = vsel %vm1144, %v2698, %v2574
    %v2716 = vsel %vm1144, %v2700, %v2576
    %v2718 = vsel %vm1144, %v2702, %v2578
    %v2720 = vsel %vm1144, %v2704, %v2580
    %v2721 = vld [vmem:[%s3] sm:$0xf]
    %v2722 = vld [vmem:[%s3 + $0x4] sm:$0xf]
    %v2723 = vld [vmem:[%s3 + $0x8] sm:$0xf]
    %v2724 = vld [vmem:[%s3 + $0xc] sm:$0xf]
    %v2725 = vld [vmem:[%s3 + $0x10] sm:$0xf]
    %v2726 = vld [vmem:[%s3 + $0x14] sm:$0xf]
    %v2727 = vld [vmem:[%s3 + $0x18] sm:$0xf]
    %v2728 = vld [vmem:[%s3 + $0x1c] sm:$0xf]
    %v2729 = vld [vmem:[%s3 + $0x20] sm:$0xf]
    %v2730 = vld [vmem:[%s4] sm:$0x1]
    %v2732 = vlaneseq
    %v2733 = vshrl.u32 %v2732, 7
    %v2734 = vsub.s32 0, %v2733
    %v2735 = vrot.slane %v2730, %v2734
    %v2746 = vunpack.c.l.b16 %v2721
    %v2747 = vunpack.c.l.b16 %v2722
    %v2748 = vunpack.c.l.b16 %v2723
    %v2749 = vunpack.c.l.b16 %v2724
    %v2750 = vunpack.c.l.b16 %v2725
    %v2751 = vunpack.c.l.b16 %v2726
    %v2752 = vunpack.c.l.b16 %v2727
    %v2753 = vunpack.c.l.b16 %v2728
    %v2754 = vunpack.c.l.b16 %v2729
    %v2755 = vpack.c.b16 %v2747, %v2746
    %v2756 = vpack.c.b16 %v2749, %v2748
    %v2757 = vpack.c.b16 %v2751, %v2750
    %v2758 = vpack.c.b16 %v2753, %v2752
    %v2759 = vpack.c.b16 %v2754, %v2754
    %vm2764 = vcmask 588800
    %v2765 = vsel %vm2764, %v2706, 0
    %v2767 = vsel %vm2764, %v2708, 0
    %v2769 = vsel %vm2764, %v2710, 0
    %v2771 = vsel %vm2764, %v2712, 0
    %v2773 = vsel %vm2764, %v2714, 0
    %v2775 = vsel %vm2764, %v2716, 0
    %v2777 = vsel %vm2764, %v2718, 0
    %v2779 = vsel %vm2764, %v2720, 0
    %vm2781 = vcmask 1043456
    %v2783 = vsel %vm2781, %v2759, 0
    %2785 = vmatprep.subr.bf16.mxu0 0
    %2786 = vmatpush1.bf16.msra.mxu0 %v2755
    %2787 = vmatprep.subr.bf16.mxu0 0
    %2788 = vmatpush1.bf16.msra.mxu0 %v2756
    %2789 = vmatprep.subr.bf16.mxu0 0
    %2790 = vmatpush1.bf16.msra.mxu0 %v2757
    %2791 = vmatprep.subr.bf16.mxu0 0
    %2792 = vmatpush1.bf16.msra.mxu0 %v2758
    %2793 = vmatprep.subr.bf16.mxu0 0
    %2794 = vmatpush1.bf16.msra.mxu0 %v2783
    %2795 = vmatprep.subr.bf16.mxu0 0
    %2796 = vmatpush1.bf16.msra.mxu0 0
    %2797 = vmatprep.subr.bf16.mxu0 0
    %2798 = vmatpush1.bf16.msra.mxu0 0
    %2799 = vmatprep.subr.bf16.mxu0 0
    %2800 = vmatpush1.bf16.msra.mxu0 0
    %2801 = vmatprep.subr.bf16.mxu0 0
    %2802 = vmatpush1.bf16.msra.mxu0 0
    %2803 = vmatprep.subr.bf16.mxu0 0
    %2804 = vmatpush1.bf16.msra.mxu0 0
    %2805 = vmatprep.subr.bf16.mxu0 0
    %2806 = vmatpush1.bf16.msra.mxu0 0
    %2807 = vmatprep.subr.bf16.mxu0 0
    %2808 = vmatpush1.bf16.msra.mxu0 0
    %2809 = vmatprep.subr.bf16.mxu0 0
    %2810 = vmatpush1.bf16.msra.mxu0 0
    %2811 = vmatprep.subr.bf16.mxu0 0
    %2812 = vmatpush1.bf16.msra.mxu0 0
    %2813 = vmatprep.subr.bf16.mxu0 0
    %2814 = vmatpush1.bf16.msra.mxu0 0
    %2815 = vmatprep.subr.bf16.mxu0 0
    %2816 = vmatpush1.bf16.msra.mxu0 0
    %2817 = vmatprep.mubr.bf16.mxu0 0
    %2818 = vmatmul.mubr.bf16.gmra.mrb[0].mxu0 %v2765
    %v2819 = vpop.f32.mrb[0].mxu0
    %v2820 = vadd.f32 %v2735, %v2819
    %v2821 = vpop.f32.mrb[0].mxu0
    %v2822 = vpop.f32.mrb[0].mxu0
    %v2823 = vadd.f32 %v2735, %v2822
    %v2824 = vpop.f32.mrb[0].mxu0
    %2825 = vmatprep.mubr.bf16.mxu0 0
    %2826 = vmatmul.mubr.bf16.gmra.mrb[0].mxu0 %v2767
    %v2827 = vpop.f32.mrb[0].mxu0
    %v2828 = vadd.f32 %v2735, %v2827
    %v2829 = vpop.f32.mrb[0].mxu0
    %v2830 = vpop.f32.mrb[0].mxu0
    %v2831 = vadd.f32 %v2735, %v2830
    %v2832 = vpop.f32.mrb[0].mxu0
    %2833 = vmatprep.mubr.bf16.mxu0 0
    %2834 = vmatmul.mubr.bf16.gmra.mrb[0].mxu0 %v2769
    %v2835 = vpop.f32.mrb[0].mxu0
    %v2836 = vadd.f32 %v2735, %v2835
    %v2837 = vpop.f32.mrb[0].mxu0
    %v2838 = vpop.f32.mrb[0].mxu0
    %v2839 = vadd.f32 %v2735, %v2838
    %v2840 = vpop.f32.mrb[0].mxu0
    %2841 = vmatprep.mubr.bf16.mxu0 0
    %2842 = vmatmul.mubr.bf16.gmra.mrb[0].mxu0 %v2771
    %v2843 = vpop.f32.mrb[0].mxu0
    %v2844 = vadd.f32 %v2735, %v2843
    %v2845 = vpop.f32.mrb[0].mxu0
    %v2846 = vpop.f32.mrb[0].mxu0
    %v2847 = vadd.f32 %v2735, %v2846
    %v2848 = vpop.f32.mrb[0].mxu0
    %2849 = vmatprep.mubr.bf16.mxu0 0
    %2850 = vmatmul.mubr.bf16.gmra.mrb[0].mxu0 %v2773
    %v2851 = vpop.f32.mrb[0].mxu0
    %v2852 = vadd.f32 %v2735, %v2851
    %v2853 = vpop.f32.mrb[0].mxu0
    %v2854 = vpop.f32.mrb[0].mxu0
    %v2855 = vadd.f32 %v2735, %v2854
    %v2856 = vpop.f32.mrb[0].mxu0
    %2857 = vmatprep.mubr.bf16.mxu0 0
    %2858 = vmatmul.mubr.bf16.gmra.mrb[0].mxu0 %v2775
    %v2859 = vpop.f32.mrb[0].mxu0
    %v2860 = vadd.f32 %v2735, %v2859
    %v2861 = vpop.f32.mrb[0].mxu0
    %v2862 = vpop.f32.mrb[0].mxu0
    %v2863 = vadd.f32 %v2735, %v2862
    %v2864 = vpop.f32.mrb[0].mxu0
    %2865 = vmatprep.mubr.bf16.mxu0 0
    %2866 = vmatmul.mubr.bf16.gmra.mrb[0].mxu0 %v2777
    %v2867 = vpop.f32.mrb[0].mxu0
    %v2868 = vadd.f32 %v2735, %v2867
    %v2869 = vpop.f32.mrb[0].mxu0
    %v2870 = vpop.f32.mrb[0].mxu0
    %v2871 = vadd.f32 %v2735, %v2870
    %v2872 = vpop.f32.mrb[0].mxu0
    %2873 = vmatprep.mubr.bf16.mxu0 0
    %2874 = vmatmul.mubr.bf16.gmra.mrb[0].mxu0 %v2779
    %v2875 = vpop.f32.mrb[0].mxu0
    %v2876 = vadd.f32 %v2735, %v2875
    %v2877 = vpop.f32.mrb[0].mxu0
    %v2878 = vpop.f32.mrb[0].mxu0
    %v2879 = vadd.f32 %v2735, %v2878
    %v2880 = vpop.f32.mrb[0].mxu0
    %2881 = vdwg.mxu0
    %v2882 = vxor.u32 %v2820, 2147483648
    %v2883 = vxor.u32 %v2823, 2147483648
    %v2884 = vxor.u32 %v2828, 2147483648
    %v2885 = vxor.u32 %v2831, 2147483648
    %v2886 = vxor.u32 %v2836, 2147483648
    %v2887 = vxor.u32 %v2839, 2147483648
    %v2888 = vxor.u32 %v2844, 2147483648
    %v2889 = vxor.u32 %v2847, 2147483648
    %v2890 = vxor.u32 %v2852, 2147483648
    %v2891 = vxor.u32 %v2855, 2147483648
    %v2892 = vxor.u32 %v2860, 2147483648
    %v2893 = vxor.u32 %v2863, 2147483648
    %v2894 = vxor.u32 %v2868, 2147483648
    %v2895 = vxor.u32 %v2871, 2147483648
    %v2896 = vxor.u32 %v2876, 2147483648
    %v2897 = vxor.u32 %v2879, 2147483648
    %v2898 = vmul.f32 %v2882, 1.442695
    %v2899 = vpow.pop %v2898
    %v2900 = vmul.f32 %v2883, 1.442695
    %v2901 = vpow.pop %v2900
    %v2902 = vmul.f32 %v2884, 1.442695
    %v2903 = vpow.pop %v2902
    %v2904 = vmul.f32 %v2885, 1.442695
    %v2905 = vpow.pop %v2904
    %v2906 = vmul.f32 %v2886, 1.442695
    %v2907 = vpow.pop %v2906
    %v2908 = vmul.f32 %v2887, 1.442695
    %v2909 = vpow.pop %v2908
    %v2910 = vmul.f32 %v2888, 1.442695
    %v2911 = vpow.pop %v2910
    %v2912 = vmul.f32 %v2889, 1.442695
    %v2913 = vpow.pop %v2912
    %v2914 = vmul.f32 %v2890, 1.442695
    %v2915 = vpow.pop %v2914
    %v2916 = vmul.f32 %v2891, 1.442695
    %v2917 = vpow.pop %v2916
    %v2918 = vmul.f32 %v2892, 1.442695
    %v2919 = vpow.pop %v2918
    %v2920 = vmul.f32 %v2893, 1.442695
    %v2921 = vpow.pop %v2920
    %v2922 = vmul.f32 %v2894, 1.442695
    %v2923 = vpow.pop %v2922
    %v2924 = vmul.f32 %v2895, 1.442695
    %v2925 = vpow.pop %v2924
    %v2926 = vmul.f32 %v2896, 1.442695
    %v2927 = vpow.pop %v2926
    %v2928 = vmul.f32 %v2897, 1.442695
    %v2929 = vpow.pop %v2928
    %v2930 = vadd.f32 %v2899, 1.0
    %v2931 = vadd.f32 %v2901, 1.0
    %v2932 = vadd.f32 %v2903, 1.0
    %v2933 = vadd.f32 %v2905, 1.0
    %v2934 = vadd.f32 %v2907, 1.0
    %v2935 = vadd.f32 %v2909, 1.0
    %v2936 = vadd.f32 %v2911, 1.0
    %v2937 = vadd.f32 %v2913, 1.0
    %v2938 = vadd.f32 %v2915, 1.0
    %v2939 = vadd.f32 %v2917, 1.0
    %v2940 = vadd.f32 %v2919, 1.0
    %v2941 = vadd.f32 %v2921, 1.0
    %v2942 = vadd.f32 %v2923, 1.0
    %v2943 = vadd.f32 %v2925, 1.0
    %v2944 = vadd.f32 %v2927, 1.0
    %v2945 = vadd.f32 %v2929, 1.0
    %v2946 = vrcp.pop %v2930
    %v2947 = vmul.f32 1.0, %v2946
    %v2948 = vrcp.pop %v2931
    %v2949 = vmul.f32 1.0, %v2948
    %v2950 = vrcp.pop %v2932
    %v2951 = vmul.f32 1.0, %v2950
    %v2952 = vrcp.pop %v2933
    %v2953 = vmul.f32 1.0, %v2952
    %v2954 = vrcp.pop %v2934
    %v2955 = vmul.f32 1.0, %v2954
    %v2956 = vrcp.pop %v2935
    %v2957 = vmul.f32 1.0, %v2956
    %v2958 = vrcp.pop %v2936
    %v2959 = vmul.f32 1.0, %v2958
    %v2960 = vrcp.pop %v2937
    %v2961 = vmul.f32 1.0, %v2960
    %v2962 = vrcp.pop %v2938
    %v2963 = vmul.f32 1.0, %v2962
    %v2964 = vrcp.pop %v2939
    %v2965 = vmul.f32 1.0, %v2964
    %v2966 = vrcp.pop %v2940
    %v2967 = vmul.f32 1.0, %v2966
    %v2968 = vrcp.pop %v2941
    %v2969 = vmul.f32 1.0, %v2968
    %v2970 = vrcp.pop %v2942
    %v2971 = vmul.f32 1.0, %v2970
    %v2972 = vrcp.pop %v2943
    %v2973 = vmul.f32 1.0, %v2972
    %v2974 = vrcp.pop %v2944
    %v2975 = vmul.f32 1.0, %v2974
    %v2976 = vrcp.pop %v2945
    %v2977 = vmul.f32 1.0, %v2976
    %v2978 = vmul.f32 %v2820, %v2947
    %v2979 = vmul.f32 %v2823, %v2949
    %v2980 = vmul.f32 %v2828, %v2951
    %v2981 = vmul.f32 %v2831, %v2953
    %v2982 = vmul.f32 %v2836, %v2955
    %v2983 = vmul.f32 %v2839, %v2957
    %v2984 = vmul.f32 %v2844, %v2959
    %v2985 = vmul.f32 %v2847, %v2961
    %v2986 = vmul.f32 %v2852, %v2963
    %v2987 = vmul.f32 %v2855, %v2965
    %v2988 = vmul.f32 %v2860, %v2967
    %v2989 = vmul.f32 %v2863, %v2969
    %v2990 = vmul.f32 %v2868, %v2971
    %v2991 = vmul.f32 %v2871, %v2973
    %v2992 = vmul.f32 %v2876, %v2975
    %v2993 = vmul.f32 %v2879, %v2977
    %v2994 = vpack.c.bf16 %v2979, %v2978
    %v2995 = vpack.c.bf16 %v2981, %v2980
    %v2996 = vpack.c.bf16 %v2983, %v2982
    %v2997 = vpack.c.bf16 %v2985, %v2984
    %v2998 = vpack.c.bf16 %v2987, %v2986
    %v2999 = vpack.c.bf16 %v2989, %v2988
    %v3000 = vpack.c.bf16 %v2991, %v2990
    %v3001 = vpack.c.bf16 %v2993, %v2992
    %v3002 = vld [vmem:[%s5] sm:$0xf]
    %v3003 = vld [vmem:[%s5 + $0x4] sm:$0xf]
    %v3004 = vld [vmem:[%s6] sm:$0x1]
    %v3006 = vlaneseq
    %v3007 = vshrl.u32 %v3006, 7
    %v3008 = vsub.s32 0, %v3007
    %v3009 = vrot.slane %v3004, %v3008
    %v3013 = vunpack.c.l.b16 %v3002
    %v3014 = vunpack.c.l.b16 %v3003
    %v3015 = vpack.c.b16 %v3014, %v3013
    %v3018 = vsel %vm1085, %v2994, 0
    %v3021 = vsel %vm1085, %v2995, 0
    %v3024 = vsel %vm1085, %v2996, 0
    %v3027 = vsel %vm1085, %v2997, 0
    %v3030 = vsel %vm1085, %v2998, 0
    %v3033 = vsel %vm1085, %v2999, 0
    %v3036 = vsel %vm1085, %v3000, 0
    %v3039 = vsel %vm1085, %v3001, 0
    %3041 = vmatprep.subr.bf16.mxu0 0
    %3042 = vmatpush1.bf16.msra.mxu0 %v3015
    %3043 = vmatprep.subr.bf16.mxu0 0
    %3044 = vmatpush1.bf16.msra.mxu0 0
    %3045 = vmatprep.subr.bf16.mxu0 0
    %3046 = vmatpush1.bf16.msra.mxu0 0
    %3047 = vmatprep.subr.bf16.mxu0 0
    %3048 = vmatpush1.bf16.msra.mxu0 0
    %3049 = vmatprep.subr.bf16.mxu0 0
    %3050 = vmatpush1.bf16.msra.mxu0 0
    %3051 = vmatprep.subr.bf16.mxu0 0
    %3052 = vmatpush1.bf16.msra.mxu0 0
    %3053 = vmatprep.subr.bf16.mxu0 0
    %3054 = vmatpush1.bf16.msra.mxu0 0
    %3055 = vmatprep.subr.bf16.mxu0 0
    %3056 = vmatpush1.bf16.msra.mxu0 0
    %3057 = vmatprep.subr.bf16.mxu0 0
    %3058 = vmatpush1.bf16.msra.mxu0 0
    %3059 = vmatprep.subr.bf16.mxu0 0
    %3060 = vmatpush1.bf16.msra.mxu0 0
    %3061 = vmatprep.subr.bf16.mxu0 0
    %3062 = vmatpush1.bf16.msra.mxu0 0
    %3063 = vmatprep.subr.bf16.mxu0 0
    %3064 = vmatpush1.bf16.msra.mxu0 0
    %3065 = vmatprep.subr.bf16.mxu0 0
    %3066 = vmatpush1.bf16.msra.mxu0 0
    %3067 = vmatprep.subr.bf16.mxu0 0
    %3068 = vmatpush1.bf16.msra.mxu0 0
    %3069 = vmatprep.subr.bf16.mxu0 0
    %3070 = vmatpush1.bf16.msra.mxu0 0
    %3071 = vmatprep.subr.bf16.mxu0 0
    %3072 = vmatpush1.bf16.msra.mxu0 0
    %3073 = vmatprep.mubr.bf16.mxu0 0
    %3074 = vmatmul.mubr.bf16.gmra.mrb[0].mxu0 %v3018
    %v3075 = vpop.f32.mrb[0].mxu0
    %v3076 = vadd.f32 %v3009, %v3075
    %v3077 = vpop.f32.mrb[0].mxu0
    %v3078 = vpop.f32.mrb[0].mxu0
    %v3079 = vadd.f32 %v3009, %v3078
    %v3080 = vpop.f32.mrb[0].mxu0
    %3081 = vmatprep.mubr.bf16.mxu0 0
    %3082 = vmatmul.mubr.bf16.gmra.mrb[0].mxu0 %v3021
    %v3083 = vpop.f32.mrb[0].mxu0
    %v3084 = vadd.f32 %v3009, %v3083
    %v3085 = vpop.f32.mrb[0].mxu0
    %v3086 = vpop.f32.mrb[0].mxu0
    %v3087 = vadd.f32 %v3009, %v3086
    %v3088 = vpop.f32.mrb[0].mxu0
    %3089 = vmatprep.mubr.bf16.mxu0 0
    %3090 = vmatmul.mubr.bf16.gmra.mrb[0].mxu0 %v3024
    %v3091 = vpop.f32.mrb[0].mxu0
    %v3092 = vadd.f32 %v3009, %v3091
    %v3093 = vpop.f32.mrb[0].mxu0
    %v3094 = vpop.f32.mrb[0].mxu0
    %v3095 = vadd.f32 %v3009, %v3094
    %v3096 = vpop.f32.mrb[0].mxu0
    %3097 = vmatprep.mubr.bf16.mxu0 0
    %3098 = vmatmul.mubr.bf16.gmra.mrb[0].mxu0 %v3027
    %v3099 = vpop.f32.mrb[0].mxu0
    %v3100 = vadd.f32 %v3009, %v3099
    %v3101 = vpop.f32.mrb[0].mxu0
    %v3102 = vpop.f32.mrb[0].mxu0
    %v3103 = vadd.f32 %v3009, %v3102
    %v3104 = vpop.f32.mrb[0].mxu0
    %3105 = vmatprep.mubr.bf16.mxu0 0
    %3106 = vmatmul.mubr.bf16.gmra.mrb[0].mxu0 %v3030
    %v3107 = vpop.f32.mrb[0].mxu0
    %v3108 = vadd.f32 %v3009, %v3107
    %v3109 = vpop.f32.mrb[0].mxu0
    %v3110 = vpop.f32.mrb[0].mxu0
    %v3111 = vadd.f32 %v3009, %v3110
    %v3112 = vpop.f32.mrb[0].mxu0
    %3113 = vmatprep.mubr.bf16.mxu0 0
    %3114 = vmatmul.mubr.bf16.gmra.mrb[0].mxu0 %v3033
    %v3115 = vpop.f32.mrb[0].mxu0
    %v3116 = vadd.f32 %v3009, %v3115
    %v3117 = vpop.f32.mrb[0].mxu0
    %v3118 = vpop.f32.mrb[0].mxu0
    %v3119 = vadd.f32 %v3009, %v3118
    %v3120 = vpop.f32.mrb[0].mxu0
    %3121 = vmatprep.mubr.bf16.mxu0 0
    %3122 = vmatmul.mubr.bf16.gmra.mrb[0].mxu0 %v3036
    %v3123 = vpop.f32.mrb[0].mxu0
    %v3124 = vadd.f32 %v3009, %v3123
    %v3125 = vpop.f32.mrb[0].mxu0
    %v3126 = vpop.f32.mrb[0].mxu0
    %v3127 = vadd.f32 %v3009, %v3126
    %v3128 = vpop.f32.mrb[0].mxu0
    %3129 = vmatprep.mubr.bf16.mxu0 0
    %3130 = vmatmul.mubr.bf16.gmra.mrb[0].mxu0 %v3039
    %v3131 = vpop.f32.mrb[0].mxu0
    %v3132 = vadd.f32 %v3009, %v3131
    %v3133 = vpop.f32.mrb[0].mxu0
    %v3134 = vpop.f32.mrb[0].mxu0
    %v3135 = vadd.f32 %v3009, %v3134
    %v3136 = vpop.f32.mrb[0].mxu0
    %3137 = vdwg.mxu0
    %v3138 = vpack.c.bf16 %v3079, %v3076
    %v3139 = vpack.c.bf16 %v3087, %v3084
    %v3140 = vpack.c.bf16 %v3095, %v3092
    %v3141 = vpack.c.bf16 %v3103, %v3100
    %v3142 = vpack.c.bf16 %v3111, %v3108
    %v3143 = vpack.c.bf16 %v3119, %v3116
    %v3144 = vpack.c.bf16 %v3127, %v3124
    %v3145 = vpack.c.bf16 %v3135, %v3132
    %3150 = vrot.lane.b32.xlu0 %v3138, 112
    %v3151 = vpop.permute.xlu0 %3150
    %3152 = vrot.lane.b32.xlu0 %v3139, 112
    %v3153 = vpop.permute.xlu0 %3152
    %3154 = vrot.lane.b32.xlu0 %v3140, 112
    %v3155 = vpop.permute.xlu0 %3154
    %3156 = vrot.lane.b32.xlu0 %v3141, 112
    %v3157 = vpop.permute.xlu0 %3156
    %vm3158 = vcmask 31744
    %v3160 = vsel %vm3158, %v3138, 0
    %v3163 = vsel %vm3158, %v3139, 0
    %v3166 = vsel %vm3158, %v3140, 0
    %v3169 = vsel %vm3158, %v3141, 0
    %v3172 = vsel %vm3158, %v3151, 0
    %v3175 = vsel %vm3158, %v3153, 0
    %v3178 = vsel %vm3158, %v3155, 0
    %v3181 = vsel %vm3158, %v3157, 0
    %3183 = vmatprep.subr.bf16.mxu0 0
    %3184 = vmatpush1.bf16.xpose.msra.mxu0 %v3172
    %3185 = vmatprep.subr.bf16.mxu0 0
    %3186 = vmatpush1.bf16.xpose.msra.mxu0 %v3175
    %3187 = vmatprep.subr.bf16.mxu0 0
    %3188 = vmatpush1.bf16.xpose.msra.mxu0 %v3178
    %3189 = vmatprep.subr.bf16.mxu0 0
    %3190 = vmatpush1.bf16.xpose.msra.mxu0 %v3181
    %3191 = vmatprep.subr.bf16.mxu0 0
    %3192 = vmatpush1.bf16.xpose.msra.mxu0 0
    %3193 = vmatprep.subr.bf16.mxu0 0
    %3194 = vmatpush1.bf16.xpose.msra.mxu0 0
    %3195 = vmatprep.subr.bf16.mxu0 0
    %3196 = vmatpush1.bf16.xpose.msra.mxu0 0
    %3197 = vmatprep.subr.bf16.mxu0 0
    %3198 = vmatpush1.bf16.xpose.msra.mxu0 0
    %3199 = vmatprep.subr.bf16.mxu0 0
    %3200 = vmatpush1.bf16.xpose.msra.mxu0 0
    %3201 = vmatprep.subr.bf16.mxu0 0
    %3202 = vmatpush1.bf16.xpose.msra.mxu0 0
    %3203 = vmatprep.subr.bf16.mxu0 0
    %3204 = vmatpush1.bf16.xpose.msra.mxu0 0
    %3205 = vmatprep.subr.bf16.mxu0 0
    %3206 = vmatpush1.bf16.xpose.msra.mxu0 0
    %3207 = vmatprep.subr.bf16.mxu0 0
    %3208 = vmatpush1.bf16.xpose.msra.mxu0 0
    %3209 = vmatprep.subr.bf16.mxu0 0
    %3210 = vmatpush1.bf16.xpose.msra.mxu0 0
    %3211 = vmatprep.subr.bf16.mxu0 0
    %3212 = vmatpush1.bf16.xpose.msra.mxu0 0
    %3213 = vmatprep.subr.bf16.mxu0 0
    %3214 = vmatpush1.bf16.xpose.msra.mxu0 0
    %3215 = vmatprep.mubr.bf16.mxu0 0
    %3216 = vmatmul.mubr.bf16.gmra.mrb[0].mxu0 %v3160
    %v3217 = vpop.f32.mrb[0].mxu0
    %v3218 = vadd.f32 0.0, %v3217
    %v3219 = vpop.f32.mrb[0].mxu0
    %v3220 = vpop.f32.mrb[0].mxu0
    %v3221 = vadd.f32 0.0, %v3220
    %v3222 = vpop.f32.mrb[0].mxu0
    %3223 = vmatprep.mubr.bf16.mxu0 0
    %3224 = vmatmul.mubr.bf16.gmra.mrb[0].mxu0 %v3163
    %v3225 = vpop.f32.mrb[0].mxu0
    %v3226 = vadd.f32 0.0, %v3225
    %v3227 = vpop.f32.mrb[0].mxu0
    %v3228 = vpop.f32.mrb[0].mxu0
    %v3229 = vadd.f32 0.0, %v3228
    %v3230 = vpop.f32.mrb[0].mxu0
    %3231 = vmatprep.mubr.bf16.mxu0 0
    %3232 = vmatmul.mubr.bf16.gmra.mrb[0].mxu0 %v3166
    %v3233 = vpop.f32.mrb[0].mxu0
    %v3234 = vadd.f32 0.0, %v3233
    %v3235 = vpop.f32.mrb[0].mxu0
    %v3236 = vpop.f32.mrb[0].mxu0
    %v3237 = vadd.f32 0.0, %v3236
    %v3238 = vpop.f32.mrb[0].mxu0
    %3239 = vmatprep.mubr.bf16.mxu0 0
    %3240 = vmatmul.mubr.bf16.gmra.mrb[0].mxu0 %v3169
    %v3241 = vpop.f32.mrb[0].mxu0
    %v3242 = vadd.f32 0.0, %v3241
    %v3243 = vpop.f32.mrb[0].mxu0
    %v3244 = vpop.f32.mrb[0].mxu0
    %v3245 = vadd.f32 0.0, %v3244
    %v3246 = vpop.f32.mrb[0].mxu0
    %3247 = vdwg.mxu0
    %3252 = vrot.lane.b32.xlu0 %v3142, 112
    %v3253 = vpop.permute.xlu0 %3252
    %3254 = vrot.lane.b32.xlu0 %v3143, 112
    %v3255 = vpop.permute.xlu0 %3254
    %3256 = vrot.lane.b32.xlu0 %v3144, 112
    %v3257 = vpop.permute.xlu0 %3256
    %3258 = vrot.lane.b32.xlu0 %v3145, 112
    %v3259 = vpop.permute.xlu0 %3258
    %v3261 = vsel %vm3158, %v3142, 0
    %v3264 = vsel %vm3158, %v3143, 0
    %v3267 = vsel %vm3158, %v3144, 0
    %v3270 = vsel %vm3158, %v3145, 0
    %v3273 = vsel %vm3158, %v3253, 0
    %v3276 = vsel %vm3158, %v3255, 0
    %v3279 = vsel %vm3158, %v3257, 0
    %v3282 = vsel %vm3158, %v3259, 0
    %3284 = vmatprep.subr.bf16.mxu0 0
    %3285 = vmatpush1.bf16.xpose.msra.mxu0 %v3273
    %3286 = vmatprep.subr.bf16.mxu0 0
    %3287 = vmatpush1.bf16.xpose.msra.mxu0 %v3276
    %3288 = vmatprep.subr.bf16.mxu0 0
    %3289 = vmatpush1.bf16.xpose.msra.mxu0 %v3279
    %3290 = vmatprep.subr.bf16.mxu0 0
    %3291 = vmatpush1.bf16.xpose.msra.mxu0 %v3282
    %3292 = vmatprep.subr.bf16.mxu0 0
    %3293 = vmatpush1.bf16.xpose.msra.mxu0 0
    %3294 = vmatprep.subr.bf16.mxu0 0
    %3295 = vmatpush1.bf16.xpose.msra.mxu0 0
    %3296 = vmatprep.subr.bf16.mxu0 0
    %3297 = vmatpush1.bf16.xpose.msra.mxu0 0
    %3298 = vmatprep.subr.bf16.mxu0 0
    %3299 = vmatpush1.bf16.xpose.msra.mxu0 0
    %3300 = vmatprep.subr.bf16.mxu0 0
    %3301 = vmatpush1.bf16.xpose.msra.mxu0 0
    %3302 = vmatprep.subr.bf16.mxu0 0
    %3303 = vmatpush1.bf16.xpose.msra.mxu0 0
    %3304 = vmatprep.subr.bf16.mxu0 0
    %3305 = vmatpush1.bf16.xpose.msra.mxu0 0
    %3306 = vmatprep.subr.bf16.mxu0 0
    %3307 = vmatpush1.bf16.xpose.msra.mxu0 0
    %3308 = vmatprep.subr.bf16.mxu0 0
    %3309 = vmatpush1.bf16.xpose.msra.mxu0 0
    %3310 = vmatprep.subr.bf16.mxu0 0
    %3311 = vmatpush1.bf16.xpose.msra.mxu0 0
    %3312 = vmatprep.subr.bf16.mxu0 0
    %3313 = vmatpush1.bf16.xpose.msra.mxu0 0
    %3314 = vmatprep.subr.bf16.mxu0 0
    %3315 = vmatpush1.bf16.xpose.msra.mxu0 0
    %3316 = vmatprep.mubr.bf16.mxu0 0
    %3317 = vmatmul.mubr.bf16.gmra.mrb[0].mxu0 %v3261
    %v3318 = vpop.f32.mrb[0].mxu0
    %v3319 = vadd.f32 0.0, %v3318
    %v3320 = vpop.f32.mrb[0].mxu0
    %v3321 = vpop.f32.mrb[0].mxu0
    %v3322 = vadd.f32 0.0, %v3321
    %v3323 = vpop.f32.mrb[0].mxu0
    %3324 = vmatprep.mubr.bf16.mxu0 0
    %3325 = vmatmul.mubr.bf16.gmra.mrb[0].mxu0 %v3264
    %v3326 = vpop.f32.mrb[0].mxu0
    %v3327 = vadd.f32 0.0, %v3326
    %v3328 = vpop.f32.mrb[0].mxu0
    %v3329 = vpop.f32.mrb[0].mxu0
    %v3330 = vadd.f32 0.0, %v3329
    %v3331 = vpop.f32.mrb[0].mxu0
    %3332 = vmatprep.mubr.bf16.mxu0 0
    %3333 = vmatmul.mubr.bf16.gmra.mrb[0].mxu0 %v3267
    %v3334 = vpop.f32.mrb[0].mxu0
    %v3335 = vadd.f32 0.0, %v3334
    %v3336 = vpop.f32.mrb[0].mxu0
    %v3337 = vpop.f32.mrb[0].mxu0
    %v3338 = vadd.f32 0.0, %v3337
    %v3339 = vpop.f32.mrb[0].mxu0
    %3340 = vmatprep.mubr.bf16.mxu0 0
    %3341 = vmatmul.mubr.bf16.gmra.mrb[0].mxu0 %v3270
    %v3342 = vpop.f32.mrb[0].mxu0
    %v3343 = vadd.f32 0.0, %v3342
    %v3344 = vpop.f32.mrb[0].mxu0
    %v3345 = vpop.f32.mrb[0].mxu0
    %v3346 = vadd.f32 0.0, %v3345
    %v3347 = vpop.f32.mrb[0].mxu0
    %3348 = vdwg.mxu0
    %v3349 = vsel %vm1144, %v3218, -inf
    %3350 = vmax.xlane.f32.xlu0 %v3349
    %v3351 = vpop.xlane.xlu0 %3350
    %v3352 = vsel %vm1144, %v3221, -inf
    %3353 = vmax.xlane.f32.xlu0 %v3352
    %v3354 = vpop.xlane.xlu0 %3353
    %v3355 = vsel %vm1144, %v3226, -inf
    %3356 = vmax.xlane.f32.xlu0 %v3355
    %v3357 = vpop.xlane.xlu0 %3356
    %v3358 = vsel %vm1144, %v3229, -inf
    %3359 = vmax.xlane.f32.xlu0 %v3358
    %v3360 = vpop.xlane.xlu0 %3359
    %v3361 = vsel %vm1144, %v3234, -inf
    %3362 = vmax.xlane.f32.xlu0 %v3361
    %v3363 = vpop.xlane.xlu0 %3362
    %v3364 = vsel %vm1144, %v3237, -inf
    %3365 = vmax.xlane.f32.xlu0 %v3364
    %v3366 = vpop.xlane.xlu0 %3365
    %v3367 = vsel %vm1144, %v3242, -inf
    %3368 = vmax.xlane.f32.xlu0 %v3367
    %v3369 = vpop.xlane.xlu0 %3368
    %v3370 = vsel %vm1144, %v3245, -inf
    %3371 = vmax.xlane.f32.xlu0 %v3370
    %v3372 = vpop.xlane.xlu0 %3371
    %v3373 = vsel %vm1144, %v3319, -inf
    %3374 = vmax.xlane.f32.xlu0 %v3373
    %v3375 = vpop.xlane.xlu0 %3374
    %v3376 = vsel %vm1144, %v3322, -inf
    %3377 = vmax.xlane.f32.xlu0 %v3376
    %v3378 = vpop.xlane.xlu0 %3377
    %v3379 = vsel %vm1144, %v3327, -inf
    %3380 = vmax.xlane.f32.xlu0 %v3379
    %v3381 = vpop.xlane.xlu0 %3380
    %v3382 = vsel %vm1144, %v3330, -inf
    %3383 = vmax.xlane.f32.xlu0 %v3382
    %v3384 = vpop.xlane.xlu0 %3383
    %v3385 = vsel %vm1144, %v3335, -inf
    %3386 = vmax.xlane.f32.xlu0 %v3385
    %v3387 = vpop.xlane.xlu0 %3386
    %v3388 = vsel %vm1144, %v3338, -inf
    %3389 = vmax.xlane.f32.xlu0 %v3388
    %v3390 = vpop.xlane.xlu0 %3389
    %v3391 = vsel %vm1144, %v3343, -inf
    %3392 = vmax.xlane.f32.xlu0 %v3391
    %v3393 = vpop.xlane.xlu0 %3392
    %v3394 = vsel %vm1144, %v3346, -inf
    %3395 = vmax.xlane.f32.xlu0 %v3394
    %v3396 = vpop.xlane.xlu0 %3395
    %v3397 = vsub.f32 %v3218, %v3351
    %v3398 = vsub.f32 %v3221, %v3354
    %v3399 = vsub.f32 %v3226, %v3357
    %v3400 = vsub.f32 %v3229, %v3360
    %v3401 = vsub.f32 %v3234, %v3363
    %v3402 = vsub.f32 %v3237, %v3366
    %v3403 = vsub.f32 %v3242, %v3369
    %v3404 = vsub.f32 %v3245, %v3372
    %v3405 = vsub.f32 %v3319, %v3375
    %v3406 = vsub.f32 %v3322, %v3378
    %v3407 = vsub.f32 %v3327, %v3381
    %v3408 = vsub.f32 %v3330, %v3384
    %v3409 = vsub.f32 %v3335, %v3387
    %v3410 = vsub.f32 %v3338, %v3390
    %v3411 = vsub.f32 %v3343, %v3393
    %v3412 = vsub.f32 %v3346, %v3396
    %v3413 = vmul.f32 %v3397, 1.442695
    %v3414 = vpow.pop %v3413
    %v3415 = vmul.f32 %v3398, 1.442695
    %v3416 = vpow.pop %v3415
    %v3417 = vmul.f32 %v3399, 1.442695
    %v3418 = vpow.pop %v3417
    %v3419 = vmul.f32 %v3400, 1.442695
    %v3420 = vpow.pop %v3419
    %v3421 = vmul.f32 %v3401, 1.442695
    %v3422 = vpow.pop %v3421
    %v3423 = vmul.f32 %v3402, 1.442695
    %v3424 = vpow.pop %v3423
    %v3425 = vmul.f32 %v3403, 1.442695
    %v3426 = vpow.pop %v3425
    %v3427 = vmul.f32 %v3404, 1.442695
    %v3428 = vpow.pop %v3427
    %v3429 = vmul.f32 %v3405, 1.442695
    %v3430 = vpow.pop %v3429
    %v3431 = vmul.f32 %v3406, 1.442695
    %v3432 = vpow.pop %v3431
    %v3433 = vmul.f32 %v3407, 1.442695
    %v3434 = vpow.pop %v3433
    %v3435 = vmul.f32 %v3408, 1.442695
    %v3436 = vpow.pop %v3435
    %v3437 = vmul.f32 %v3409, 1.442695
    %v3438 = vpow.pop %v3437
    %v3439 = vmul.f32 %v3410, 1.442695
    %v3440 = vpow.pop %v3439
    %v3441 = vmul.f32 %v3411, 1.442695
    %v3442 = vpow.pop %v3441
    %v3443 = vmul.f32 %v3412, 1.442695
    %v3444 = vpow.pop %v3443
    %v3445 = vsel %vm1144, %v3414, 0.0
    %3446 = vadd.xlane.f32.xlu0 %v3445
    %v3447 = vpop.xlane.xlu0 %3446
    %v3448 = vsel %vm1144, %v3416, 0.0
    %3449 = vadd.xlane.f32.xlu0 %v3448
    %v3450 = vpop.xlane.xlu0 %3449
    %v3451 = vsel %vm1144, %v3418, 0.0
    %3452 = vadd.xlane.f32.xlu0 %v3451
    %v3453 = vpop.xlane.xlu0 %3452
    %v3454 = vsel %vm1144, %v3420, 0.0
    %3455 = vadd.xlane.f32.xlu0 %v3454
    %v3456 = vpop.xlane.xlu0 %3455
    %v3457 = vsel %vm1144, %v3422, 0.0
    %3458 = vadd.xlane.f32.xlu0 %v3457
    %v3459 = vpop.xlane.xlu0 %3458
    %v3460 = vsel %vm1144, %v3424, 0.0
    %3461 = vadd.xlane.f32.xlu0 %v3460
    %v3462 = vpop.xlane.xlu0 %3461
    %v3463 = vsel %vm1144, %v3426, 0.0
    %3464 = vadd.xlane.f32.xlu0 %v3463
    %v3465 = vpop.xlane.xlu0 %3464
    %v3466 = vsel %vm1144, %v3428, 0.0
    %3467 = vadd.xlane.f32.xlu0 %v3466
    %v3468 = vpop.xlane.xlu0 %3467
    %v3469 = vsel %vm1144, %v3430, 0.0
    %3470 = vadd.xlane.f32.xlu0 %v3469
    %v3471 = vpop.xlane.xlu0 %3470
    %v3472 = vsel %vm1144, %v3432, 0.0
    %3473 = vadd.xlane.f32.xlu0 %v3472
    %v3474 = vpop.xlane.xlu0 %3473
    %v3475 = vsel %vm1144, %v3434, 0.0
    %3476 = vadd.xlane.f32.xlu0 %v3475
    %v3477 = vpop.xlane.xlu0 %3476
    %v3478 = vsel %vm1144, %v3436, 0.0
    %3479 = vadd.xlane.f32.xlu0 %v3478
    %v3480 = vpop.xlane.xlu0 %3479
    %v3481 = vsel %vm1144, %v3438, 0.0
    %3482 = vadd.xlane.f32.xlu0 %v3481
    %v3483 = vpop.xlane.xlu0 %3482
    %v3484 = vsel %vm1144, %v3440, 0.0
    %3485 = vadd.xlane.f32.xlu0 %v3484
    %v3486 = vpop.xlane.xlu0 %3485
    %v3487 = vsel %vm1144, %v3442, 0.0
    %3488 = vadd.xlane.f32.xlu0 %v3487
    %v3489 = vpop.xlane.xlu0 %3488
    %v3490 = vsel %vm1144, %v3444, 0.0
    %3491 = vadd.xlane.f32.xlu0 %v3490
    %v3492 = vpop.xlane.xlu0 %3491
    %v3493 = vrcp.pop %v3447
    %v3494 = vrcp.pop %v3450
    %v3495 = vrcp.pop %v3453
    %v3496 = vrcp.pop %v3456
    %v3497 = vrcp.pop %v3459
    %v3498 = vrcp.pop %v3462
    %v3499 = vrcp.pop %v3465
    %v3500 = vrcp.pop %v3468
    %v3501 = vrcp.pop %v3471
    %v3502 = vrcp.pop %v3474
    %v3503 = vrcp.pop %v3477
    %v3504 = vrcp.pop %v3480
    %v3505 = vrcp.pop %v3483
    %v3506 = vrcp.pop %v3486
    %v3507 = vrcp.pop %v3489
    %v3508 = vrcp.pop %v3492
    %v3509 = vmul.f32 %v3414, %v3493
    %v3510 = vmul.f32 %v3416, %v3494
    %v3511 = vmul.f32 %v3418, %v3495
    %v3512 = vmul.f32 %v3420, %v3496
    %v3513 = vmul.f32 %v3422, %v3497
    %v3514 = vmul.f32 %v3424, %v3498
    %v3515 = vmul.f32 %v3426, %v3499
    %v3516 = vmul.f32 %v3428, %v3500
    %v3517 = vmul.f32 %v3430, %v3501
    %v3518 = vmul.f32 %v3432, %v3502
    %v3519 = vmul.f32 %v3434, %v3503
    %v3520 = vmul.f32 %v3436, %v3504
    %v3521 = vmul.f32 %v3438, %v3505
    %v3522 = vmul.f32 %v3440, %v3506
    %v3523 = vmul.f32 %v3442, %v3507
    %v3524 = vmul.f32 %v3444, %v3508
    %v3525 = vpack.c.bf16 %v3510, %v3509
    %v3526 = vpack.c.bf16 %v3512, %v3511
    %v3527 = vpack.c.bf16 %v3514, %v3513
    %v3528 = vpack.c.bf16 %v3516, %v3515
    %v3529 = vpack.c.bf16 %v3518, %v3517
    %v3530 = vpack.c.bf16 %v3520, %v3519
    %v3531 = vpack.c.bf16 %v3522, %v3521
    %v3532 = vpack.c.bf16 %v3524, %v3523
    %3533 = vrot.lane.b32.xlu0 %v3138, 96
    %v3534 = vpop.permute.xlu0 %3533
    %3535 = vrot.lane.b32.xlu0 %v3139, 96
    %v3536 = vpop.permute.xlu0 %3535
    %3537 = vrot.lane.b32.xlu0 %v3140, 96
    %v3538 = vpop.permute.xlu0 %3537
    %3539 = vrot.lane.b32.xlu0 %v3141, 96
    %v3540 = vpop.permute.xlu0 %3539
    %v3546 = vsel %vm1144, %v3525, 0
    %v3549 = vsel %vm1144, %v3526, 0
    %v3552 = vsel %vm1144, %v3527, 0
    %v3555 = vsel %vm1144, %v3528, 0
    %3557 = vmatprep.subr.bf16.mxu0 0
    %3558 = vmatpush1.bf16.msra.mxu0 %v3534
    %3559 = vmatprep.subr.bf16.mxu0 0
    %3560 = vmatpush1.bf16.msra.mxu0 %v3536
    %3561 = vmatprep.subr.bf16.mxu0 0
    %3562 = vmatpush1.bf16.msra.mxu0 %v3538
    %3563 = vmatprep.subr.bf16.mxu0 0
    %3564 = vmatpush1.bf16.msra.mxu0 %v3540
    %3565 = vmatprep.subr.bf16.mxu0 0
    %3566 = vmatpush1.bf16.msra.mxu0 0
    %3567 = vmatprep.subr.bf16.mxu0 0
    %3568 = vmatpush1.bf16.msra.mxu0 0
    %3569 = vmatprep.subr.bf16.mxu0 0
    %3570 = vmatpush1.bf16.msra.mxu0 0
    %3571 = vmatprep.subr.bf16.mxu0 0
    %3572 = vmatpush1.bf16.msra.mxu0 0
    %3573 = vmatprep.subr.bf16.mxu0 0
    %3574 = vmatpush1.bf16.msra.mxu0 0
    %3575 = vmatprep.subr.bf16.mxu0 0
    %3576 = vmatpush1.bf16.msra.mxu0 0
    %3577 = vmatprep.subr.bf16.mxu0 0
    %3578 = vmatpush1.bf16.msra.mxu0 0
    %3579 = vmatprep.subr.bf16.mxu0 0
    %3580 = vmatpush1.bf16.msra.mxu0 0
    %3581 = vmatprep.subr.bf16.mxu0 0
    %3582 = vmatpush1.bf16.msra.mxu0 0
    %3583 = vmatprep.subr.bf16.mxu0 0
    %3584 = vmatpush1.bf16.msra.mxu0 0
    %3585 = vmatprep.subr.bf16.mxu0 0
    %3586 = vmatpush1.bf16.msra.mxu0 0
    %3587 = vmatprep.subr.bf16.mxu0 0
    %3588 = vmatpush1.bf16.msra.mxu0 0
    %3589 = vmatprep.mubr.bf16.mxu0 0
    %3590 = vmatmul.mubr.bf16.gmra.mrb[0].mxu0 %v3546
    %v3591 = vpop.f32.mrb[0].mxu0
    %v3592 = vadd.f32 %v28, %v3591
    %v3593 = vpop.f32.mrb[0].mxu0
    %v3594 = vpop.f32.mrb[0].mxu0
    %v3595 = vadd.f32 %v29, %v3594
    %v3596 = vpop.f32.mrb[0].mxu0
    %3597 = vmatprep.mubr.bf16.mxu0 0
    %3598 = vmatmul.mubr.bf16.gmra.mrb[0].mxu0 %v3549
    %v3599 = vpop.f32.mrb[0].mxu0
    %v3600 = vadd.f32 %v30, %v3599
    %v3601 = vpop.f32.mrb[0].mxu0
    %v3602 = vpop.f32.mrb[0].mxu0
    %v3603 = vadd.f32 %v31, %v3602
    %v3604 = vpop.f32.mrb[0].mxu0
    %3605 = vmatprep.mubr.bf16.mxu0 0
    %3606 = vmatmul.mubr.bf16.gmra.mrb[0].mxu0 %v3552
    %v3607 = vpop.f32.mrb[0].mxu0
    %v3608 = vadd.f32 %v32, %v3607
    %v3609 = vpop.f32.mrb[0].mxu0
    %v3610 = vpop.f32.mrb[0].mxu0
    %v3611 = vadd.f32 %v33, %v3610
    %v3612 = vpop.f32.mrb[0].mxu0
    %3613 = vmatprep.mubr.bf16.mxu0 0
    %3614 = vmatmul.mubr.bf16.gmra.mrb[0].mxu0 %v3555
    %v3615 = vpop.f32.mrb[0].mxu0
    %v3616 = vadd.f32 %v34, %v3615
    %v3617 = vpop.f32.mrb[0].mxu0
    %v3618 = vpop.f32.mrb[0].mxu0
    %v3619 = vadd.f32 %v35, %v3618
    %v3620 = vpop.f32.mrb[0].mxu0
    %3621 = vdwg.mxu0
    %3622 = vrot.lane.b32.xlu0 %v3142, 96
    %v3623 = vpop.permute.xlu0 %3622
    %3624 = vrot.lane.b32.xlu0 %v3143, 96
    %v3625 = vpop.permute.xlu0 %3624
    %3626 = vrot.lane.b32.xlu0 %v3144, 96
    %v3627 = vpop.permute.xlu0 %3626
    %3628 = vrot.lane.b32.xlu0 %v3145, 96
    %v3629 = vpop.permute.xlu0 %3628
    %v3635 = vsel %vm1144, %v3529, 0
    %v3638 = vsel %vm1144, %v3530, 0
    %v3641 = vsel %vm1144, %v3531, 0
    %v3644 = vsel %vm1144, %v3532, 0
    %3646 = vmatprep.subr.bf16.mxu0 0
    %3647 = vmatpush1.bf16.msra.mxu0 %v3623
    %3648 = vmatprep.subr.bf16.mxu0 0
    %3649 = vmatpush1.bf16.msra.mxu0 %v3625
    %3650 = vmatprep.subr.bf16.mxu0 0
    %3651 = vmatpush1.bf16.msra.mxu0 %v3627
    %3652 = vmatprep.subr.bf16.mxu0 0
    %3653 = vmatpush1.bf16.msra.mxu0 %v3629
    %3654 = vmatprep.subr.bf16.mxu0 0
    %3655 = vmatpush1.bf16.msra.mxu0 0
    %3656 = vmatprep.subr.bf16.mxu0 0
    %3657 = vmatpush1.bf16.msra.mxu0 0
    %3658 = vmatprep.subr.bf16.mxu0 0
    %3659 = vmatpush1.bf16.msra.mxu0 0
    %3660 = vmatprep.subr.bf16.mxu0 0
    %3661 = vmatpush1.bf16.msra.mxu0 0
    %3662 = vmatprep.subr.bf16.mxu0 0
    %3663 = vmatpush1.bf16.msra.mxu0 0
    %3664 = vmatprep.subr.bf16.mxu0 0
    %3665 = vmatpush1.bf16.msra.mxu0 0
    %3666 = vmatprep.subr.bf16.mxu0 0
    %3667 = vmatpush1.bf16.msra.mxu0 0
    %3668 = vmatprep.subr.bf16.mxu0 0
    %3669 = vmatpush1.bf16.msra.mxu0 0
    %3670 = vmatprep.subr.bf16.mxu0 0
    %3671 = vmatpush1.bf16.msra.mxu0 0
    %3672 = vmatprep.subr.bf16.mxu0 0
    %3673 = vmatpush1.bf16.msra.mxu0 0
    %3674 = vmatprep.subr.bf16.mxu0 0
    %3675 = vmatpush1.bf16.msra.mxu0 0
    %3676 = vmatprep.subr.bf16.mxu0 0
    %3677 = vmatpush1.bf16.msra.mxu0 0
    %3678 = vmatprep.mubr.bf16.mxu0 0
    %3679 = vmatmul.mubr.bf16.gmra.mrb[0].mxu0 %v3635
    %v3680 = vpop.f32.mrb[0].mxu0
    %v3681 = vadd.f32 %v36, %v3680
    %v3682 = vpop.f32.mrb[0].mxu0
    %v3683 = vpop.f32.mrb[0].mxu0
    %v3684 = vadd.f32 %v37, %v3683
    %v3685 = vpop.f32.mrb[0].mxu0
    %3686 = vmatprep.mubr.bf16.mxu0 0
    %3687 = vmatmul.mubr.bf16.gmra.mrb[0].mxu0 %v3638
    %v3688 = vpop.f32.mrb[0].mxu0
    %v3689 = vadd.f32 %v38, %v3688
    %v3690 = vpop.f32.mrb[0].mxu0
    %v3691 = vpop.f32.mrb[0].mxu0
    %v3692 = vadd.f32 %v39, %v3691
    %v3693 = vpop.f32.mrb[0].mxu0
    %3694 = vmatprep.mubr.bf16.mxu0 0
    %3695 = vmatmul.mubr.bf16.gmra.mrb[0].mxu0 %v3641
    %v3696 = vpop.f32.mrb[0].mxu0
    %v3697 = vadd.f32 %v40, %v3696
    %v3698 = vpop.f32.mrb[0].mxu0
    %v3699 = vpop.f32.mrb[0].mxu0
    %v3700 = vadd.f32 %v41, %v3699
    %v3701 = vpop.f32.mrb[0].mxu0
    %3702 = vmatprep.mubr.bf16.mxu0 0
    %3703 = vmatmul.mubr.bf16.gmra.mrb[0].mxu0 %v3644
    %v3704 = vpop.f32.mrb[0].mxu0
    %v3705 = vadd.f32 %v42, %v3704
    %v3706 = vpop.f32.mrb[0].mxu0
    %v3707 = vpop.f32.mrb[0].mxu0
    %v3708 = vadd.f32 %v43, %v3707
    %v3709 = vpop.f32.mrb[0].mxu0
    %3710 = vdwg.mxu0
    %3711 = vst.msk [vmem:[#allocation4] sm:$0xff] %vm3158, %v3592
    %3712 = vst.msk [vmem:[#allocation4 + $0x8] sm:$0xff] %vm3158, %v3595
    %3713 = vst.msk [vmem:[#allocation4 + $0x10] sm:$0xff] %vm3158, %v3600
    %3714 = vst.msk [vmem:[#allocation4 + $0x18] sm:$0xff] %vm3158, %v3603
    %3715 = vst.msk [vmem:[#allocation4 + $0x20] sm:$0xff] %vm3158, %v3608
    %3716 = vst.msk [vmem:[#allocation4 + $0x28] sm:$0xff] %vm3158, %v3611
    %3717 = vst.msk [vmem:[#allocation4 + $0x30] sm:$0xff] %vm3158, %v3616
    %3718 = vst.msk [vmem:[#allocation4 + $0x38] sm:$0xff] %vm3158, %v3619
    %3719 = vst.msk [vmem:[#allocation4 + $0x40] sm:$0xff] %vm3158, %v3681
    %3720 = vst.msk [vmem:[#allocation4 + $0x48] sm:$0xff] %vm3158, %v3684
    %3721 = vst.msk [vmem:[#allocation4 + $0x50] sm:$0xff] %vm3158, %v3689
    %3722 = vst.msk [vmem:[#allocation4 + $0x58] sm:$0xff] %vm3158, %v3692
    %3723 = vst.msk [vmem:[#allocation4 + $0x60] sm:$0xff] %vm3158, %v3697
    %3724 = vst.msk [vmem:[#allocation4 + $0x68] sm:$0xff] %vm3158, %v3700
    %3725 = vst.msk [vmem:[#allocation4 + $0x70] sm:$0xff] %vm3158, %v3705
    %3726 = vst.msk [vmem:[#allocation4 + $0x78] sm:$0xff] %vm3158, %v3708
    %3727 = vrot.lane.b32.xlu0 %v3138, 124
    %v3728 = vpop.permute.xlu0 %3727
    %3729 = vrot.lane.b32.xlu0 %v3139, 124
    %v3730 = vpop.permute.xlu0 %3729
    %3731 = vrot.lane.b32.xlu0 %v3140, 124
    %v3732 = vpop.permute.xlu0 %3731
    %3733 = vrot.lane.b32.xlu0 %v3141, 124
    %v3734 = vpop.permute.xlu0 %3733
    %3735 = vrot.lane.b32.xlu0 %v3138, 108
    %v3736 = vpop.permute.xlu0 %3735
    %3737 = vrot.lane.b32.xlu0 %v3139, 108
    %v3738 = vpop.permute.xlu0 %3737
    %3739 = vrot.lane.b32.xlu0 %v3140, 108
    %v3740 = vpop.permute.xlu0 %3739
    %3741 = vrot.lane.b32.xlu0 %v3141, 108
    %v3742 = vpop.permute.xlu0 %3741
    %v3744 = vsel %vm3158, %v3728, 0
    %v3747 = vsel %vm3158, %v3730, 0
    %v3750 = vsel %vm3158, %v3732, 0
    %v3753 = vsel %vm3158, %v3734, 0
    %v3756 = vsel %vm3158, %v3736, 0
    %v3759 = vsel %vm3158, %v3738, 0
    %v3762 = vsel %vm3158, %v3740, 0
    %v3765 = vsel %vm3158, %v3742, 0
    %3767 = vmatprep.subr.bf16.mxu0 0
    %3768 = vmatpush1.bf16.xpose.msra.mxu0 %v3756
    %3769 = vmatprep.subr.bf16.mxu0 0
    %3770 = vmatpush1.bf16.xpose.msra.mxu0 %v3759
    %3771 = vmatprep.subr.bf16.mxu0 0
    %3772 = vmatpush1.bf16.xpose.msra.mxu0 %v3762
    %3773 = vmatprep.subr.bf16.mxu0 0
    %3774 = vmatpush1.bf16.xpose.msra.mxu0 %v3765
    %3775 = vmatprep.subr.bf16.mxu0 0
    %3776 = vmatpush1.bf16.xpose.msra.mxu0 0
    %3777 = vmatprep.subr.bf16.mxu0 0
    %3778 = vmatpush1.bf16.xpose.msra.mxu0 0
    %3779 = vmatprep.subr.bf16.mxu0 0
    %3780 = vmatpush1.bf16.xpose.msra.mxu0 0
    %3781 = vmatprep.subr.bf16.mxu0 0
    %3782 = vmatpush1.bf16.xpose.msra.mxu0 0
    %3783 = vmatprep.subr.bf16.mxu0 0
    %3784 = vmatpush1.bf16.xpose.msra.mxu0 0
    %3785 = vmatprep.subr.bf16.mxu0 0
    %3786 = vmatpush1.bf16.xpose.msra.mxu0 0
    %3787 = vmatprep.subr.bf16.mxu0 0
    %3788 = vmatpush1.bf16.xpose.msra.mxu0 0
    %3789 = vmatprep.subr.bf16.mxu0 0
    %3790 = vmatpush1.bf16.xpose.msra.mxu0 0
    %3791 = vmatprep.subr.bf16.mxu0 0
    %3792 = vmatpush1.bf16.xpose.msra.mxu0 0
    %3793 = vmatprep.subr.bf16.mxu0 0
    %3794 = vmatpush1.bf16.xpose.msra.mxu0 0
    %3795 = vmatprep.subr.bf16.mxu0 0
    %3796 = vmatpush1.bf16.xpose.msra.mxu0 0
    %3797 = vmatprep.subr.bf16.mxu0 0
    %3798 = vmatpush1.bf16.xpose.msra.mxu0 0
    %3799 = vmatprep.mubr.bf16.mxu0 0
    %3800 = vmatmul.mubr.bf16.gmra.mrb[0].mxu0 %v3744
    %v3801 = vpop.f32.mrb[0].mxu0
    %v3802 = vadd.f32 0.0, %v3801
    %v3803 = vpop.f32.mrb[0].mxu0
    %v3804 = vpop.f32.mrb[0].mxu0
    %v3805 = vadd.f32 0.0, %v3804
    %v3806 = vpop.f32.mrb[0].mxu0
    %3807 = vmatprep.mubr.bf16.mxu0 0
    %3808 = vmatmul.mubr.bf16.gmra.mrb[0].mxu0 %v3747
    %v3809 = vpop.f32.mrb[0].mxu0
    %v3810 = vadd.f32 0.0, %v3809
    %v3811 = vpop.f32.mrb[0].mxu0
    %v3812 = vpop.f32.mrb[0].mxu0
    %v3813 = vadd.f32 0.0, %v3812
    %v3814 = vpop.f32.mrb[0].mxu0
    %3815 = vmatprep.mubr.bf16.mxu0 0
    %3816 = vmatmul.mubr.bf16.gmra.mrb[0].mxu0 %v3750
    %v3817 = vpop.f32.mrb[0].mxu0
    %v3818 = vadd.f32 0.0, %v3817
    %v3819 = vpop.f32.mrb[0].mxu0
    %v3820 = vpop.f32.mrb[0].mxu0
    %v3821 = vadd.f32 0.0, %v3820
    %v3822 = vpop.f32.mrb[0].mxu0
    %3823 = vmatprep.mubr.bf16.mxu0 0
    %3824 = vmatmul.mubr.bf16.gmra.mrb[0].mxu0 %v3753
    %v3825 = vpop.f32.mrb[0].mxu0
    %v3826 = vadd.f32 0.0, %v3825
    %v3827 = vpop.f32.mrb[0].mxu0
    %v3828 = vpop.f32.mrb[0].mxu0
    %v3829 = vadd.f32 0.0, %v3828
    %v3830 = vpop.f32.mrb[0].mxu0
    %3831 = vdwg.mxu0
    %3832 = vrot.lane.b32.xlu0 %v3142, 124
    %v3833 = vpop.permute.xlu0 %3832
    %3834 = vrot.lane.b32.xlu0 %v3143, 124
    %v3835 = vpop.permute.xlu0 %3834
    %3836 = vrot.lane.b32.xlu0 %v3144, 124
    %v3837 = vpop.permute.xlu0 %3836
    %3838 = vrot.lane.b32.xlu0 %v3145, 124
    %v3839 = vpop.permute.xlu0 %3838
    %3840 = vrot.lane.b32.xlu0 %v3142, 108
    %v3841 = vpop.permute.xlu0 %3840
    %3842 = vrot.lane.b32.xlu0 %v3143, 108
    %v3843 = vpop.permute.xlu0 %3842
    %3844 = vrot.lane.b32.xlu0 %v3144, 108
    %v3845 = vpop.permute.xlu0 %3844
    %3846 = vrot.lane.b32.xlu0 %v3145, 108
    %v3847 = vpop.permute.xlu0 %3846
    %v3849 = vsel %vm3158, %v3833, 0
    %v3852 = vsel %vm3158, %v3835, 0
    %v3855 = vsel %vm3158, %v3837, 0
    %v3858 = vsel %vm3158, %v3839, 0
    %v3861 = vsel %vm3158, %v3841, 0
    %v3864 = vsel %vm3158, %v3843, 0
    %v3867 = vsel %vm3158, %v3845, 0
    %v3870 = vsel %vm3158, %v3847, 0
    %3872 = vmatprep.subr.bf16.mxu0 0
    %3873 = vmatpush1.bf16.xpose.msra.mxu0 %v3861
    %3874 = vmatprep.subr.bf16.mxu0 0
    %3875 = vmatpush1.bf16.xpose.msra.mxu0 %v3864
    %3876 = vmatprep.subr.bf16.mxu0 0
    %3877 = vmatpush1.bf16.xpose.msra.mxu0 %v3867
    %3878 = vmatprep.subr.bf16.mxu0 0
    %3879 = vmatpush1.bf16.xpose.msra.mxu0 %v3870
    %3880 = vmatprep.subr.bf16.mxu0 0
    %3881 = vmatpush1.bf16.xpose.msra.mxu0 0
    %3882 = vmatprep.subr.bf16.mxu0 0
    %3883 = vmatpush1.bf16.xpose.msra.mxu0 0
    %3884 = vmatprep.subr.bf16.mxu0 0
    %3885 = vmatpush1.bf16.xpose.msra.mxu0 0
    %3886 = vmatprep.subr.bf16.mxu0 0
    %3887 = vmatpush1.bf16.xpose.msra.mxu0 0
    %3888 = vmatprep.subr.bf16.mxu0 0
    %3889 = vmatpush1.bf16.xpose.msra.mxu0 0
    %3890 = vmatprep.subr.bf16.mxu0 0
    %3891 = vmatpush1.bf16.xpose.msra.mxu0 0
    %3892 = vmatprep.subr.bf16.mxu0 0
    %3893 = vmatpush1.bf16.xpose.msra.mxu0 0
    %3894 = vmatprep.subr.bf16.mxu0 0
    %3895 = vmatpush1.bf16.xpose.msra.mxu0 0
    %3896 = vmatprep.subr.bf16.mxu0 0
    %3897 = vmatpush1.bf16.xpose.msra.mxu0 0
    %3898 = vmatprep.subr.bf16.mxu0 0
    %3899 = vmatpush1.bf16.xpose.msra.mxu0 0
    %3900 = vmatprep.subr.bf16.mxu0 0
    %3901 = vmatpush1.bf16.xpose.msra.mxu0 0
    %3902 = vmatprep.subr.bf16.mxu0 0
    %3903 = vmatpush1.bf16.xpose.msra.mxu0 0
    %3904 = vmatprep.mubr.bf16.mxu0 0
    %3905 = vmatmul.mubr.bf16.gmra.mrb[0].mxu0 %v3849
    %v3906 = vpop.f32.mrb[0].mxu0
    %v3907 = vadd.f32 0.0, %v3906
    %v3908 = vpop.f32.mrb[0].mxu0
    %v3909 = vpop.f32.mrb[0].mxu0
    %v3910 = vadd.f32 0.0, %v3909
    %v3911 = vpop.f32.mrb[0].mxu0
    %3912 = vmatprep.mubr.bf16.mxu0 0
    %3913 = vmatmul.mubr.bf16.gmra.mrb[0].mxu0 %v3852
    %v3914 = vpop.f32.mrb[0].mxu0
    %v3915 = vadd.f32 0.0, %v3914
    %v3916 = vpop.f32.mrb[0].mxu0
    %v3917 = vpop.f32.mrb[0].mxu0
    %v3918 = vadd.f32 0.0, %v3917
    %v3919 = vpop.f32.mrb[0].mxu0
    %3920 = vmatprep.mubr.bf16.mxu0 0
    %3921 = vmatmul.mubr.bf16.gmra.mrb[0].mxu0 %v3855
    %v3922 = vpop.f32.mrb[0].mxu0
    %v3923 = vadd.f32 0.0, %v3922
    %v3924 = vpop.f32.mrb[0].mxu0
    %v3925 = vpop.f32.mrb[0].mxu0
    %v3926 = vadd.f32 0.0, %v3925
    %v3927 = vpop.f32.mrb[0].mxu0
    %3928 = vmatprep.mubr.bf16.mxu0 0
    %3929 = vmatmul.mubr.bf16.gmra.mrb[0].mxu0 %v3858
    %v3930 = vpop.f32.mrb[0].mxu0
    %v3931 = vadd.f32 0.0, %v3930
    %v3932 = vpop.f32.mrb[0].mxu0
    %v3933 = vpop.f32.mrb[0].mxu0
    %v3934 = vadd.f32 0.0, %v3933
    %v3935 = vpop.f32.mrb[0].mxu0
    %3936 = vdwg.mxu0
    %v3937 = vsel %vm1144, %v3802, -inf
    %3938 = vmax.xlane.f32.xlu0 %v3937
    %v3939 = vpop.xlane.xlu0 %3938
    %v3940 = vsel %vm1144, %v3805, -inf
    %3941 = vmax.xlane.f32.xlu0 %v3940
    %v3942 = vpop.xlane.xlu0 %3941
    %v3943 = vsel %vm1144, %v3810, -inf
    %3944 = vmax.xlane.f32.xlu0 %v3943
    %v3945 = vpop.xlane.xlu0 %3944
    %v3946 = vsel %vm1144, %v3813, -inf
    %3947 = vmax.xlane.f32.xlu0 %v3946
    %v3948 = vpop.xlane.xlu0 %3947
    %v3949 = vsel %vm1144, %v3818, -inf
    %3950 = vmax.xlane.f32.xlu0 %v3949
    %v3951 = vpop.xlane.xlu0 %3950
    %v3952 = vsel %vm1144, %v3821, -inf
    %3953 = vmax.xlane.f32.xlu0 %v3952
    %v3954 = vpop.xlane.xlu0 %3953
    %v3955 = vsel %vm1144, %v3826, -inf
    %3956 = vmax.xlane.f32.xlu0 %v3955
    %v3957 = vpop.xlane.xlu0 %3956
    %v3958 = vsel %vm1144, %v3829, -inf
    %3959 = vmax.xlane.f32.xlu0 %v3958
    %v3960 = vpop.xlane.xlu0 %3959
    %v3961 = vsel %vm1144, %v3907, -inf
    %3962 = vmax.xlane.f32.xlu0 %v3961
    %v3963 = vpop.xlane.xlu0 %3962
    %v3964 = vsel %vm1144, %v3910, -inf
    %3965 = vmax.xlane.f32.xlu0 %v3964
    %v3966 = vpop.xlane.xlu0 %3965
    %v3967 = vsel %vm1144, %v3915, -inf
    %3968 = vmax.xlane.f32.xlu0 %v3967
    %v3969 = vpop.xlane.xlu0 %3968
    %v3970 = vsel %vm1144, %v3918, -inf
    %3971 = vmax.xlane.f32.xlu0 %v3970
    %v3972 = vpop.xlane.xlu0 %3971
    %v3973 = vsel %vm1144, %v3923, -inf
    %3974 = vmax.xlane.f32.xlu0 %v3973
    %v3975 = vpop.xlane.xlu0 %3974
    %v3976 = vsel %vm1144, %v3926, -inf
    %3977 = vmax.xlane.f32.xlu0 %v3976
    %v3978 = vpop.xlane.xlu0 %3977
    %v3979 = vsel %vm1144, %v3931, -inf
    %3980 = vmax.xlane.f32.xlu0 %v3979
    %v3981 = vpop.xlane.xlu0 %3980
    %v3982 = vsel %vm1144, %v3934, -inf
    %3983 = vmax.xlane.f32.xlu0 %v3982
    %v3984 = vpop.xlane.xlu0 %3983
    %v3985 = vsub.f32 %v3802, %v3939
    %v3986 = vsub.f32 %v3805, %v3942
    %v3987 = vsub.f32 %v3810, %v3945
    %v3988 = vsub.f32 %v3813, %v3948
    %v3989 = vsub.f32 %v3818, %v3951
    %v3990 = vsub.f32 %v3821, %v3954
    %v3991 = vsub.f32 %v3826, %v3957
    %v3992 = vsub.f32 %v3829, %v3960
    %v3993 = vsub.f32 %v3907, %v3963
    %v3994 = vsub.f32 %v3910, %v3966
    %v3995 = vsub.f32 %v3915, %v3969
    %v3996 = vsub.f32 %v3918, %v3972
    %v3997 = vsub.f32 %v3923, %v3975
    %v3998 = vsub.f32 %v3926, %v3978
    %v3999 = vsub.f32 %v3931, %v3981
    %v4000 = vsub.f32 %v3934, %v3984
    %v4001 = vmul.f32 %v3985, 1.442695
    %v4002 = vpow.pop %v4001
    %v4003 = vmul.f32 %v3986, 1.442695
    %v4004 = vpow.pop %v4003
    %v4005 = vmul.f32 %v3987, 1.442695
    %v4006 = vpow.pop %v4005
    %v4007 = vmul.f32 %v3988, 1.442695
    %v4008 = vpow.pop %v4007
    %v4009 = vmul.f32 %v3989, 1.442695
    %v4010 = vpow.pop %v4009
    %v4011 = vmul.f32 %v3990, 1.442695
    %v4012 = vpow.pop %v4011
    %v4013 = vmul.f32 %v3991, 1.442695
    %v4014 = vpow.pop %v4013
    %v4015 = vmul.f32 %v3992, 1.442695
    %v4016 = vpow.pop %v4015
    %v4017 = vmul.f32 %v3993, 1.442695
    %v4018 = vpow.pop %v4017
    %v4019 = vmul.f32 %v3994, 1.442695
    %v4020 = vpow.pop %v4019
    %v4021 = vmul.f32 %v3995, 1.442695
    %v4022 = vpow.pop %v4021
    %v4023 = vmul.f32 %v3996, 1.442695
    %v4024 = vpow.pop %v4023
    %v4025 = vmul.f32 %v3997, 1.442695
    %v4026 = vpow.pop %v4025
    %v4027 = vmul.f32 %v3998, 1.442695
    %v4028 = vpow.pop %v4027
    %v4029 = vmul.f32 %v3999, 1.442695
    %v4030 = vpow.pop %v4029
    %v4031 = vmul.f32 %v4000, 1.442695
    %v4032 = vpow.pop %v4031
    %v4033 = vsel %vm1144, %v4002, 0.0
    %4034 = vadd.xlane.f32.xlu0 %v4033
    %v4035 = vpop.xlane.xlu0 %4034
    %v4036 = vsel %vm1144, %v4004, 0.0
    %4037 = vadd.xlane.f32.xlu0 %v4036
    %v4038 = vpop.xlane.xlu0 %4037
    %v4039 = vsel %vm1144, %v4006, 0.0
    %4040 = vadd.xlane.f32.xlu0 %v4039
    %v4041 = vpop.xlane.xlu0 %4040
    %v4042 = vsel %vm1144, %v4008, 0.0
    %4043 = vadd.xlane.f32.xlu0 %v4042
    %v4044 = vpop.xlane.xlu0 %4043
    %v4045 = vsel %vm1144, %v4010, 0.0
    %4046 = vadd.xlane.f32.xlu0 %v4045
    %v4047 = vpop.xlane.xlu0 %4046
    %v4048 = vsel %vm1144, %v4012, 0.0
    %4049 = vadd.xlane.f32.xlu0 %v4048
    %v4050 = vpop.xlane.xlu0 %4049
    %v4051 = vsel %vm1144, %v4014, 0.0
    %4052 = vadd.xlane.f32.xlu0 %v4051
    %v4053 = vpop.xlane.xlu0 %4052
    %v4054 = vsel %vm1144, %v4016, 0.0
    %4055 = vadd.xlane.f32.xlu0 %v4054
    %v4056 = vpop.xlane.xlu0 %4055
    %v4057 = vsel %vm1144, %v4018, 0.0
    %4058 = vadd.xlane.f32.xlu0 %v4057
    %v4059 = vpop.xlane.xlu0 %4058
    %v4060 = vsel %vm1144, %v4020, 0.0
    %4061 = vadd.xlane.f32.xlu0 %v4060
    %v4062 = vpop.xlane.xlu0 %4061
    %v4063 = vsel %vm1144, %v4022, 0.0
    %4064 = vadd.xlane.f32.xlu0 %v4063
    %v4065 = vpop.xlane.xlu0 %4064
    %v4066 = vsel %vm1144, %v4024, 0.0
    %4067 = vadd.xlane.f32.xlu0 %v4066
    %v4068 = vpop.xlane.xlu0 %4067
    %v4069 = vsel %vm1144, %v4026, 0.0
    %4070 = vadd.xlane.f32.xlu0 %v4069
    %v4071 = vpop.xlane.xlu0 %4070
    %v4072 = vsel %vm1144, %v4028, 0.0
    %4073 = vadd.xlane.f32.xlu0 %v4072
    %v4074 = vpop.xlane.xlu0 %4073
    %v4075 = vsel %vm1144, %v4030, 0.0
    %4076 = vadd.xlane.f32.xlu0 %v4075
    %v4077 = vpop.xlane.xlu0 %4076
    %v4078 = vsel %vm1144, %v4032, 0.0
    %4079 = vadd.xlane.f32.xlu0 %v4078
    %v4080 = vpop.xlane.xlu0 %4079
    %v4081 = vrcp.pop %v4035
    %v4082 = vrcp.pop %v4038
    %v4083 = vrcp.pop %v4041
    %v4084 = vrcp.pop %v4044
    %v4085 = vrcp.pop %v4047
    %v4086 = vrcp.pop %v4050
    %v4087 = vrcp.pop %v4053
    %v4088 = vrcp.pop %v4056
    %v4089 = vrcp.pop %v4059
    %v4090 = vrcp.pop %v4062
    %v4091 = vrcp.pop %v4065
    %v4092 = vrcp.pop %v4068
    %v4093 = vrcp.pop %v4071
    %v4094 = vrcp.pop %v4074
    %v4095 = vrcp.pop %v4077
    %v4096 = vrcp.pop %v4080
    %v4097 = vmul.f32 %v4002, %v4081
    %v4098 = vmul.f32 %v4004, %v4082
    %v4099 = vmul.f32 %v4006, %v4083
    %v4100 = vmul.f32 %v4008, %v4084
    %v4101 = vmul.f32 %v4010, %v4085
    %v4102 = vmul.f32 %v4012, %v4086
    %v4103 = vmul.f32 %v4014, %v4087
    %v4104 = vmul.f32 %v4016, %v4088
    %v4105 = vmul.f32 %v4018, %v4089
    %v4106 = vmul.f32 %v4020, %v4090
    %v4107 = vmul.f32 %v4022, %v4091
    %v4108 = vmul.f32 %v4024, %v4092
    %v4109 = vmul.f32 %v4026, %v4093
    %v4110 = vmul.f32 %v4028, %v4094
    %v4111 = vmul.f32 %v4030, %v4095
    %v4112 = vmul.f32 %v4032, %v4096
    %v4113 = vpack.c.bf16 %v4098, %v4097
    %v4114 = vpack.c.bf16 %v4100, %v4099
    %v4115 = vpack.c.bf16 %v4102, %v4101
    %v4116 = vpack.c.bf16 %v4104, %v4103
    %v4117 = vpack.c.bf16 %v4106, %v4105
    %v4118 = vpack.c.bf16 %v4108, %v4107
    %v4119 = vpack.c.bf16 %v4110, %v4109
    %v4120 = vpack.c.bf16 %v4112, %v4111
    %4121 = vrot.lane.b32.xlu0 %v3138, 92
    %v4122 = vpop.permute.xlu0 %4121
    %4123 = vrot.lane.b32.xlu0 %v3139, 92
    %v4124 = vpop.permute.xlu0 %4123
    %4125 = vrot.lane.b32.xlu0 %v3140, 92
    %v4126 = vpop.permute.xlu0 %4125
    %4127 = vrot.lane.b32.xlu0 %v3141, 92
    %v4128 = vpop.permute.xlu0 %4127
    %4141 = vrot.lane.b32.xlu0 %v28, 124
    %v4142 = vpop.permute.xlu0 %4141
    %4143 = vrot.lane.b32.xlu0 %v29, 124
    %v4144 = vpop.permute.xlu0 %4143
    %4145 = vrot.lane.b32.xlu0 %v30, 124
    %v4146 = vpop.permute.xlu0 %4145
    %4147 = vrot.lane.b32.xlu0 %v31, 124
    %v4148 = vpop.permute.xlu0 %4147
    %4149 = vrot.lane.b32.xlu0 %v32, 124
    %v4150 = vpop.permute.xlu0 %4149
    %4151 = vrot.lane.b32.xlu0 %v33, 124
    %v4152 = vpop.permute.xlu0 %4151
    %4153 = vrot.lane.b32.xlu0 %v34, 124
    %v4154 = vpop.permute.xlu0 %4153
    %4155 = vrot.lane.b32.xlu0 %v35, 124
    %v4156 = vpop.permute.xlu0 %4155
    %v4166 = vsel %vm1144, %v4113, 0
    %v4169 = vsel %vm1144, %v4114, 0
    %v4172 = vsel %vm1144, %v4115, 0
    %v4175 = vsel %vm1144, %v4116, 0
    %4177 = vmatprep.subr.bf16.mxu0 0
    %4178 = vmatpush1.bf16.msra.mxu0 %v4122
    %4179 = vmatprep.subr.bf16.mxu0 0
    %4180 = vmatpush1.bf16.msra.mxu0 %v4124
    %4181 = vmatprep.subr.bf16.mxu0 0
    %4182 = vmatpush1.bf16.msra.mxu0 %v4126
    %4183 = vmatprep.subr.bf16.mxu0 0
    %4184 = vmatpush1.bf16.msra.mxu0 %v4128
    %4185 = vmatprep.subr.bf16.mxu0 0
    %4186 = vmatpush1.bf16.msra.mxu0 0
    %4187 = vmatprep.subr.bf16.mxu0 0
    %4188 = vmatpush1.bf16.msra.mxu0 0
    %4189 = vmatprep.subr.bf16.mxu0 0
    %4190 = vmatpush1.bf16.msra.mxu0 0
    %4191 = vmatprep.subr.bf16.mxu0 0
    %4192 = vmatpush1.bf16.msra.mxu0 0
    %4193 = vmatprep.subr.bf16.mxu0 0
    %4194 = vmatpush1.bf16.msra.mxu0 0
    %4195 = vmatprep.subr.bf16.mxu0 0
    %4196 = vmatpush1.bf16.msra.mxu0 0
    %4197 = vmatprep.subr.bf16.mxu0 0
    %4198 = vmatpush1.bf16.msra.mxu0 0
    %4199 = vmatprep.subr.bf16.mxu0 0
    %4200 = vmatpush1.bf16.msra.mxu0 0
    %4201 = vmatprep.subr.bf16.mxu0 0
    %4202 = vmatpush1.bf16.msra.mxu0 0
    %4203 = vmatprep.subr.bf16.mxu0 0
    %4204 = vmatpush1.bf16.msra.mxu0 0
    %4205 = vmatprep.subr.bf16.mxu0 0
    %4206 = vmatpush1.bf16.msra.mxu0 0
    %4207 = vmatprep.subr.bf16.mxu0 0
    %4208 = vmatpush1.bf16.msra.mxu0 0
    %4209 = vmatprep.mubr.bf16.mxu0 0
    %4210 = vmatmul.mubr.bf16.gmra.mrb[0].mxu0 %v4166
    %v4211 = vpop.f32.mrb[0].mxu0
    %v4212 = vadd.f32 %v4142, %v4211
    %v4213 = vpop.f32.mrb[0].mxu0
    %v4214 = vpop.f32.mrb[0].mxu0
    %v4215 = vadd.f32 %v4144, %v4214
    %v4216 = vpop.f32.mrb[0].mxu0
    %4217 = vmatprep.mubr.bf16.mxu0 0
    %4218 = vmatmul.mubr.bf16.gmra.mrb[0].mxu0 %v4169
    %v4219 = vpop.f32.mrb[0].mxu0
    %v4220 = vadd.f32 %v4146, %v4219
    %v4221 = vpop.f32.mrb[0].mxu0
    %v4222 = vpop.f32.mrb[0].mxu0
    %v4223 = vadd.f32 %v4148, %v4222
    %v4224 = vpop.f32.mrb[0].mxu0
    %4225 = vmatprep.mubr.bf16.mxu0 0
    %4226 = vmatmul.mubr.bf16.gmra.mrb[0].mxu0 %v4172
    %v4227 = vpop.f32.mrb[0].mxu0
    %v4228 = vadd.f32 %v4150, %v4227
    %v4229 = vpop.f32.mrb[0].mxu0
    %v4230 = vpop.f32.mrb[0].mxu0
    %v4231 = vadd.f32 %v4152, %v4230
    %v4232 = vpop.f32.mrb[0].mxu0
    %4233 = vmatprep.mubr.bf16.mxu0 0
    %4234 = vmatmul.mubr.bf16.gmra.mrb[0].mxu0 %v4175
    %v4235 = vpop.f32.mrb[0].mxu0
    %v4236 = vadd.f32 %v4154, %v4235
    %v4237 = vpop.f32.mrb[0].mxu0
    %v4238 = vpop.f32.mrb[0].mxu0
    %v4239 = vadd.f32 %v4156, %v4238
    %v4240 = vpop.f32.mrb[0].mxu0
    %4241 = vdwg.mxu0
    %4242 = vrot.lane.b32.xlu0 %v3142, 92
    %v4243 = vpop.permute.xlu0 %4242
    %4244 = vrot.lane.b32.xlu0 %v3143, 92
    %v4245 = vpop.permute.xlu0 %4244
    %4246 = vrot.lane.b32.xlu0 %v3144, 92
    %v4247 = vpop.permute.xlu0 %4246
    %4248 = vrot.lane.b32.xlu0 %v3145, 92
    %v4249 = vpop.permute.xlu0 %4248
    %4262 = vrot.lane.b32.xlu0 %v36, 124
    %v4263 = vpop.permute.xlu0 %4262
    %4264 = vrot.lane.b32.xlu0 %v37, 124
    %v4265 = vpop.permute.xlu0 %4264
    %4266 = vrot.lane.b32.xlu0 %v38, 124
    %v4267 = vpop.permute.xlu0 %4266
    %4268 = vrot.lane.b32.xlu0 %v39, 124
    %v4269 = vpop.permute.xlu0 %4268
    %4270 = vrot.lane.b32.xlu0 %v40, 124
    %v4271 = vpop.permute.xlu0 %4270
    %4272 = vrot.lane.b32.xlu0 %v41, 124
    %v4273 = vpop.permute.xlu0 %4272
    %4274 = vrot.lane.b32.xlu0 %v42, 124
    %v4275 = vpop.permute.xlu0 %4274
    %4276 = vrot.lane.b32.xlu0 %v43, 124
    %v4277 = vpop.permute.xlu0 %4276
    %v4287 = vsel %vm1144, %v4117, 0
    %v4290 = vsel %vm1144, %v4118, 0
    %v4293 = vsel %vm1144, %v4119, 0
    %v4296 = vsel %vm1144, %v4120, 0
    %4298 = vmatprep.subr.bf16.mxu0 0
    %4299 = vmatpush1.bf16.msra.mxu0 %v4243
    %4300 = vmatprep.subr.bf16.mxu0 0
    %4301 = vmatpush1.bf16.msra.mxu0 %v4245
    %4302 = vmatprep.subr.bf16.mxu0 0
    %4303 = vmatpush1.bf16.msra.mxu0 %v4247
    %4304 = vmatprep.subr.bf16.mxu0 0
    %4305 = vmatpush1.bf16.msra.mxu0 %v4249
    %4306 = vmatprep.subr.bf16.mxu0 0
    %4307 = vmatpush1.bf16.msra.mxu0 0
    %4308 = vmatprep.subr.bf16.mxu0 0
    %4309 = vmatpush1.bf16.msra.mxu0 0
    %4310 = vmatprep.subr.bf16.mxu0 0
    %4311 = vmatpush1.bf16.msra.mxu0 0
    %4312 = vmatprep.subr.bf16.mxu0 0
    %4313 = vmatpush1.bf16.msra.mxu0 0
    %4314 = vmatprep.subr.bf16.mxu0 0
    %4315 = vmatpush1.bf16.msra.mxu0 0
    %4316 = vmatprep.subr.bf16.mxu0 0
    %4317 = vmatpush1.bf16.msra.mxu0 0
    %4318 = vmatprep.subr.bf16.mxu0 0
    %4319 = vmatpush1.bf16.msra.mxu0 0
    %4320 = vmatprep.subr.bf16.mxu0 0
    %4321 = vmatpush1.bf16.msra.mxu0 0
    %4322 = vmatprep.subr.bf16.mxu0 0
    %4323 = vmatpush1.bf16.msra.mxu0 0
    %4324 = vmatprep.subr.bf16.mxu0 0
    %4325 = vmatpush1.bf16.msra.mxu0 0
    %4326 = vmatprep.subr.bf16.mxu0 0
    %4327 = vmatpush1.bf16.msra.mxu0 0
    %4328 = vmatprep.subr.bf16.mxu0 0
    %4329 = vmatpush1.bf16.msra.mxu0 0
    %4330 = vmatprep.mubr.bf16.mxu0 0
    %4331 = vmatmul.mubr.bf16.gmra.mrb[0].mxu0 %v4287
    %v4332 = vpop.f32.mrb[0].mxu0
    %v4333 = vadd.f32 %v4263, %v4332
    %v4334 = vpop.f32.mrb[0].mxu0
    %v4335 = vpop.f32.mrb[0].mxu0
    %v4336 = vadd.f32 %v4265, %v4335
    %v4337 = vpop.f32.mrb[0].mxu0
    %4338 = vmatprep.mubr.bf16.mxu0 0
    %4339 = vmatmul.mubr.bf16.gmra.mrb[0].mxu0 %v4290
    %v4340 = vpop.f32.mrb[0].mxu0
    %v4341 = vadd.f32 %v4267, %v4340
    %v4342 = vpop.f32.mrb[0].mxu0
    %v4343 = vpop.f32.mrb[0].mxu0
    %v4344 = vadd.f32 %v4269, %v4343
    %v4345 = vpop.f32.mrb[0].mxu0
    %4346 = vmatprep.mubr.bf16.mxu0 0
    %4347 = vmatmul.mubr.bf16.gmra.mrb[0].mxu0 %v4293
    %v4348 = vpop.f32.mrb[0].mxu0
    %v4349 = vadd.f32 %v4271, %v4348
    %v4350 = vpop.f32.mrb[0].mxu0
    %v4351 = vpop.f32.mrb[0].mxu0
    %v4352 = vadd.f32 %v4273, %v4351
    %v4353 = vpop.f32.mrb[0].mxu0
    %4354 = vmatprep.mubr.bf16.mxu0 0
    %4355 = vmatmul.mubr.bf16.gmra.mrb[0].mxu0 %v4296
    %v4356 = vpop.f32.mrb[0].mxu0
    %v4357 = vadd.f32 %v4275, %v4356
    %v4358 = vpop.f32.mrb[0].mxu0
    %v4359 = vpop.f32.mrb[0].mxu0
    %v4360 = vadd.f32 %v4277, %v4359
    %v4361 = vpop.f32.mrb[0].mxu0
    %4362 = vdwg.mxu0
    %4379 = vrot.lane.b32.xlu0 %v4212, 4
    %v4380 = vpop.permute.xlu0 %4379
    %4381 = vrot.lane.b32.xlu0 %v4215, 4
    %v4382 = vpop.permute.xlu0 %4381
    %4383 = vrot.lane.b32.xlu0 %v4220, 4
    %v4384 = vpop.permute.xlu0 %4383
    %4385 = vrot.lane.b32.xlu0 %v4223, 4
    %v4386 = vpop.permute.xlu0 %4385
    %4387 = vrot.lane.b32.xlu0 %v4228, 4
    %v4388 = vpop.permute.xlu0 %4387
    %4389 = vrot.lane.b32.xlu0 %v4231, 4
    %v4390 = vpop.permute.xlu0 %4389
    %4391 = vrot.lane.b32.xlu0 %v4236, 4
    %v4392 = vpop.permute.xlu0 %4391
    %4393 = vrot.lane.b32.xlu0 %v4239, 4
    %v4394 = vpop.permute.xlu0 %4393
    %4395 = vrot.lane.b32.xlu0 %v4333, 4
    %v4396 = vpop.permute.xlu0 %4395
    %4397 = vrot.lane.b32.xlu0 %v4336, 4
    %v4398 = vpop.permute.xlu0 %4397
    %4399 = vrot.lane.b32.xlu0 %v4341, 4
    %v4400 = vpop.permute.xlu0 %4399
    %4401 = vrot.lane.b32.xlu0 %v4344, 4
    %v4402 = vpop.permute.xlu0 %4401
    %4403 = vrot.lane.b32.xlu0 %v4349, 4
    %v4404 = vpop.permute.xlu0 %4403
    %4405 = vrot.lane.b32.xlu0 %v4352, 4
    %v4406 = vpop.permute.xlu0 %4405
    %4407 = vrot.lane.b32.xlu0 %v4357, 4
    %v4408 = vpop.permute.xlu0 %4407
    %4409 = vrot.lane.b32.xlu0 %v4360, 4
    %v4410 = vpop.permute.xlu0 %4409
    %vm4427 = vcmask 64544
    %4428 = vst.msk [vmem:[#allocation4] sm:$0xff] %vm4427, %v4380
    %4429 = vst.msk [vmem:[#allocation4 + $0x8] sm:$0xff] %vm4427, %v4382
    %4430 = vst.msk [vmem:[#allocation4 + $0x10] sm:$0xff] %vm4427, %v4384
    %4431 = vst.msk [vmem:[#allocation4 + $0x18] sm:$0xff] %vm4427, %v4386
    %4432 = vst.msk [vmem:[#allocation4 + $0x20] sm:$0xff] %vm4427, %v4388
    %4433 = vst.msk [vmem:[#allocation4 + $0x28] sm:$0xff] %vm4427, %v4390
    %4434 = vst.msk [vmem:[#allocation4 + $0x30] sm:$0xff] %vm4427, %v4392
    %4435 = vst.msk [vmem:[#allocation4 + $0x38] sm:$0xff] %vm4427, %v4394
    %4436 = vst.msk [vmem:[#allocation4 + $0x40] sm:$0xff] %vm4427, %v4396
    %4437 = vst.msk [vmem:[#allocation4 + $0x48] sm:$0xff] %vm4427, %v4398
    %4438 = vst.msk [vmem:[#allocation4 + $0x50] sm:$0xff] %vm4427, %v4400
    %4439 = vst.msk [vmem:[#allocation4 + $0x58] sm:$0xff] %vm4427, %v4402
    %4440 = vst.msk [vmem:[#allocation4 + $0x60] sm:$0xff] %vm4427, %v4404
    %4441 = vst.msk [vmem:[#allocation4 + $0x68] sm:$0xff] %vm4427, %v4406
    %4442 = vst.msk [vmem:[#allocation4 + $0x70] sm:$0xff] %vm4427, %v4408
    %4443 = vst.msk [vmem:[#allocation4 + $0x78] sm:$0xff] %vm4427, %v4410
    %4444 = vrot.lane.b32.xlu0 %v3138, 120
    %v4445 = vpop.permute.xlu0 %4444
    %4446 = vrot.lane.b32.xlu0 %v3139, 120
    %v4447 = vpop.permute.xlu0 %4446
    %4448 = vrot.lane.b32.xlu0 %v3140, 120
    %v4449 = vpop.permute.xlu0 %4448
    %4450 = vrot.lane.b32.xlu0 %v3141, 120
    %v4451 = vpop.permute.xlu0 %4450
    %4452 = vrot.lane.b32.xlu0 %v3138, 104
    %v4453 = vpop.permute.xlu0 %4452
    %4454 = vrot.lane.b32.xlu0 %v3139, 104
    %v4455 = vpop.permute.xlu0 %4454
    %4456 = vrot.lane.b32.xlu0 %v3140, 104
    %v4457 = vpop.permute.xlu0 %4456
    %4458 = vrot.lane.b32.xlu0 %v3141, 104
    %v4459 = vpop.permute.xlu0 %4458
    %v4461 = vsel %vm3158, %v4445, 0
    %v4464 = vsel %vm3158, %v4447, 0
    %v4467 = vsel %vm3158, %v4449, 0
    %v4470 = vsel %vm3158, %v4451, 0
    %v4473 = vsel %vm3158, %v4453, 0
    %v4476 = vsel %vm3158, %v4455, 0
    %v4479 = vsel %vm3158, %v4457, 0
    %v4482 = vsel %vm3158, %v4459, 0
    %4484 = vmatprep.subr.bf16.mxu0 0
    %4485 = vmatpush1.bf16.xpose.msra.mxu0 %v4473
    %4486 = vmatprep.subr.bf16.mxu0 0
    %4487 = vmatpush1.bf16.xpose.msra.mxu0 %v4476
    %4488 = vmatprep.subr.bf16.mxu0 0
    %4489 = vmatpush1.bf16.xpose.msra.mxu0 %v4479
    %4490 = vmatprep.subr.bf16.mxu0 0
    %4491 = vmatpush1.bf16.xpose.msra.mxu0 %v4482
    %4492 = vmatprep.subr.bf16.mxu0 0
    %4493 = vmatpush1.bf16.xpose.msra.mxu0 0
    %4494 = vmatprep.subr.bf16.mxu0 0
    %4495 = vmatpush1.bf16.xpose.msra.mxu0 0
    %4496 = vmatprep.subr.bf16.mxu0 0
    %4497 = vmatpush1.bf16.xpose.msra.mxu0 0
    %4498 = vmatprep.subr.bf16.mxu0 0
    %4499 = vmatpush1.bf16.xpose.msra.mxu0 0
    %4500 = vmatprep.subr.bf16.mxu0 0
    %4501 = vmatpush1.bf16.xpose.msra.mxu0 0
    %4502 = vmatprep.subr.bf16.mxu0 0
    %4503 = vmatpush1.bf16.xpose.msra.mxu0 0
    %4504 = vmatprep.subr.bf16.mxu0 0
    %4505 = vmatpush1.bf16.xpose.msra.mxu0 0
    %4506 = vmatprep.subr.bf16.mxu0 0
    %4507 = vmatpush1.bf16.xpose.msra.mxu0 0
    %4508 = vmatprep.subr.bf16.mxu0 0
    %4509 = vmatpush1.bf16.xpose.msra.mxu0 0
    %4510 = vmatprep.subr.bf16.mxu0 0
    %4511 = vmatpush1.bf16.xpose.msra.mxu0 0
    %4512 = vmatprep.subr.bf16.mxu0 0
    %4513 = vmatpush1.bf16.xpose.msra.mxu0 0
    %4514 = vmatprep.subr.bf16.mxu0 0
    %4515 = vmatpush1.bf16.xpose.msra.mxu0 0
    %4516 = vmatprep.mubr.bf16.mxu0 0
    %4517 = vmatmul.mubr.bf16.gmra.mrb[0].mxu0 %v4461
    %v4518 = vpop.f32.mrb[0].mxu0
    %v4519 = vadd.f32 0.0, %v4518
    %v4520 = vpop.f32.mrb[0].mxu0
    %v4521 = vpop.f32.mrb[0].mxu0
    %v4522 = vadd.f32 0.0, %v4521
    %v4523 = vpop.f32.mrb[0].mxu0
    %4524 = vmatprep.mubr.bf16.mxu0 0
    %4525 = vmatmul.mubr.bf16.gmra.mrb[0].mxu0 %v4464
    %v4526 = vpop.f32.mrb[0].mxu0
    %v4527 = vadd.f32 0.0, %v4526
    %v4528 = vpop.f32.mrb[0].mxu0
    %v4529 = vpop.f32.mrb[0].mxu0
    %v4530 = vadd.f32 0.0, %v4529
    %v4531 = vpop.f32.mrb[0].mxu0
    %4532 = vmatprep.mubr.bf16.mxu0 0
    %4533 = vmatmul.mubr.bf16.gmra.mrb[0].mxu0 %v4467
    %v4534 = vpop.f32.mrb[0].mxu0
    %v4535 = vadd.f32 0.0, %v4534
    %v4536 = vpop.f32.mrb[0].mxu0
    %v4537 = vpop.f32.mrb[0].mxu0
    %v4538 = vadd.f32 0.0, %v4537
    %v4539 = vpop.f32.mrb[0].mxu0
    %4540 = vmatprep.mubr.bf16.mxu0 0
    %4541 = vmatmul.mubr.bf16.gmra.mrb[0].mxu0 %v4470
    %v4542 = vpop.f32.mrb[0].mxu0
    %v4543 = vadd.f32 0.0, %v4542
    %v4544 = vpop.f32.mrb[0].mxu0
    %v4545 = vpop.f32.mrb[0].mxu0
    %v4546 = vadd.f32 0.0, %v4545
    %v4547 = vpop.f32.mrb[0].mxu0
    %4548 = vdwg.mxu0
    %4549 = vrot.lane.b32.xlu0 %v3142, 120
    %v4550 = vpop.permute.xlu0 %4549
    %4551 = vrot.lane.b32.xlu0 %v3143, 120
    %v4552 = vpop.permute.xlu0 %4551
    %4553 = vrot.lane.b32.xlu0 %v3144, 120
    %v4554 = vpop.permute.xlu0 %4553
    %4555 = vrot.lane.b32.xlu0 %v3145, 120
    %v4556 = vpop.permute.xlu0 %4555
    %4557 = vrot.lane.b32.xlu0 %v3142, 104
    %v4558 = vpop.permute.xlu0 %4557
    %4559 = vrot.lane.b32.xlu0 %v3143, 104
    %v4560 = vpop.permute.xlu0 %4559
    %4561 = vrot.lane.b32.xlu0 %v3144, 104
    %v4562 = vpop.permute.xlu0 %4561
    %4563 = vrot.lane.b32.xlu0 %v3145, 104
    %v4564 = vpop.permute.xlu0 %4563
    %v4566 = vsel %vm3158, %v4550, 0
    %v4569 = vsel %vm3158, %v4552, 0
    %v4572 = vsel %vm3158, %v4554, 0
    %v4575 = vsel %vm3158, %v4556, 0
    %v4578 = vsel %vm3158, %v4558, 0
    %v4581 = vsel %vm3158, %v4560, 0
    %v4584 = vsel %vm3158, %v4562, 0
    %v4587 = vsel %vm3158, %v4564, 0
    %4589 = vmatprep.subr.bf16.mxu0 0
    %4590 = vmatpush1.bf16.xpose.msra.mxu0 %v4578
    %4591 = vmatprep.subr.bf16.mxu0 0
    %4592 = vmatpush1.bf16.xpose.msra.mxu0 %v4581
    %4593 = vmatprep.subr.bf16.mxu0 0
    %4594 = vmatpush1.bf16.xpose.msra.mxu0 %v4584
    %4595 = vmatprep.subr.bf16.mxu0 0
    %4596 = vmatpush1.bf16.xpose.msra.mxu0 %v4587
    %4597 = vmatprep.subr.bf16.mxu0 0
    %4598 = vmatpush1.bf16.xpose.msra.mxu0 0
    %4599 = vmatprep.subr.bf16.mxu0 0
    %4600 = vmatpush1.bf16.xpose.msra.mxu0 0
    %4601 = vmatprep.subr.bf16.mxu0 0
    %4602 = vmatpush1.bf16.xpose.msra.mxu0 0
    %4603 = vmatprep.subr.bf16.mxu0 0
    %4604 = vmatpush1.bf16.xpose.msra.mxu0 0
    %4605 = vmatprep.subr.bf16.mxu0 0
    %4606 = vmatpush1.bf16.xpose.msra.mxu0 0
    %4607 = vmatprep.subr.bf16.mxu0 0
    %4608 = vmatpush1.bf16.xpose.msra.mxu0 0
    %4609 = vmatprep.subr.bf16.mxu0 0
    %4610 = vmatpush1.bf16.xpose.msra.mxu0 0
    %4611 = vmatprep.subr.bf16.mxu0 0
    %4612 = vmatpush1.bf16.xpose.msra.mxu0 0
    %4613 = vmatprep.subr.bf16.mxu0 0
    %4614 = vmatpush1.bf16.xpose.msra.mxu0 0
    %4615 = vmatprep.subr.bf16.mxu0 0
    %4616 = vmatpush1.bf16.xpose.msra.mxu0 0
    %4617 = vmatprep.subr.bf16.mxu0 0
    %4618 = vmatpush1.bf16.xpose.msra.mxu0 0
    %4619 = vmatprep.subr.bf16.mxu0 0
    %4620 = vmatpush1.bf16.xpose.msra.mxu0 0
    %4621 = vmatprep.mubr.bf16.mxu0 0
    %4622 = vmatmul.mubr.bf16.gmra.mrb[0].mxu0 %v4566
    %v4623 = vpop.f32.mrb[0].mxu0
    %v4624 = vadd.f32 0.0, %v4623
    %v4625 = vpop.f32.mrb[0].mxu0
    %v4626 = vpop.f32.mrb[0].mxu0
    %v4627 = vadd.f32 0.0, %v4626
    %v4628 = vpop.f32.mrb[0].mxu0
    %4629 = vmatprep.mubr.bf16.mxu0 0
    %4630 = vmatmul.mubr.bf16.gmra.mrb[0].mxu0 %v4569
    %v4631 = vpop.f32.mrb[0].mxu0
    %v4632 = vadd.f32 0.0, %v4631
    %v4633 = vpop.f32.mrb[0].mxu0
    %v4634 = vpop.f32.mrb[0].mxu0
    %v4635 = vadd.f32 0.0, %v4634
    %v4636 = vpop.f32.mrb[0].mxu0
    %4637 = vmatprep.mubr.bf16.mxu0 0
    %4638 = vmatmul.mubr.bf16.gmra.mrb[0].mxu0 %v4572
    %v4639 = vpop.f32.mrb[0].mxu0
    %v4640 = vadd.f32 0.0, %v4639
    %v4641 = vpop.f32.mrb[0].mxu0
    %v4642 = vpop.f32.mrb[0].mxu0
    %v4643 = vadd.f32 0.0, %v4642
    %v4644 = vpop.f32.mrb[0].mxu0
    %4645 = vmatprep.mubr.bf16.mxu0 0
    %4646 = vmatmul.mubr.bf16.gmra.mrb[0].mxu0 %v4575
    %v4647 = vpop.f32.mrb[0].mxu0
    %v4648 = vadd.f32 0.0, %v4647
    %v4649 = vpop.f32.mrb[0].mxu0
    %v4650 = vpop.f32.mrb[0].mxu0
    %v4651 = vadd.f32 0.0, %v4650
    %v4652 = vpop.f32.mrb[0].mxu0
    %4653 = vdwg.mxu0
    %v4654 = vsel %vm1144, %v4519, -inf
    %4655 = vmax.xlane.f32.xlu0 %v4654
    %v4656 = vpop.xlane.xlu0 %4655
    %v4657 = vsel %vm1144, %v4522, -inf
    %4658 = vmax.xlane.f32.xlu0 %v4657
    %v4659 = vpop.xlane.xlu0 %4658
    %v4660 = vsel %vm1144, %v4527, -inf
    %4661 = vmax.xlane.f32.xlu0 %v4660
    %v4662 = vpop.xlane.xlu0 %4661
    %v4663 = vsel %vm1144, %v4530, -inf
    %4664 = vmax.xlane.f32.xlu0 %v4663
    %v4665 = vpop.xlane.xlu0 %4664
    %v4666 = vsel %vm1144, %v4535, -inf
    %4667 = vmax.xlane.f32.xlu0 %v4666
    %v4668 = vpop.xlane.xlu0 %4667
    %v4669 = vsel %vm1144, %v4538, -inf
    %4670 = vmax.xlane.f32.xlu0 %v4669
    %v4671 = vpop.xlane.xlu0 %4670
    %v4672 = vsel %vm1144, %v4543, -inf
    %4673 = vmax.xlane.f32.xlu0 %v4672
    %v4674 = vpop.xlane.xlu0 %4673
    %v4675 = vsel %vm1144, %v4546, -inf
    %4676 = vmax.xlane.f32.xlu0 %v4675
    %v4677 = vpop.xlane.xlu0 %4676
    %v4678 = vsel %vm1144, %v4624, -inf
    %4679 = vmax.xlane.f32.xlu0 %v4678
    %v4680 = vpop.xlane.xlu0 %4679
    %v4681 = vsel %vm1144, %v4627, -inf
    %4682 = vmax.xlane.f32.xlu0 %v4681
    %v4683 = vpop.xlane.xlu0 %4682
    %v4684 = vsel %vm1144, %v4632, -inf
    %4685 = vmax.xlane.f32.xlu0 %v4684
    %v4686 = vpop.xlane.xlu0 %4685
    %v4687 = vsel %vm1144, %v4635, -inf
    %4688 = vmax.xlane.f32.xlu0 %v4687
    %v4689 = vpop.xlane.xlu0 %4688
    %v4690 = vsel %vm1144, %v4640, -inf
    %4691 = vmax.xlane.f32.xlu0 %v4690
    %v4692 = vpop.xlane.xlu0 %4691
    %v4693 = vsel %vm1144, %v4643, -inf
    %4694 = vmax.xlane.f32.xlu0 %v4693
    %v4695 = vpop.xlane.xlu0 %4694
    %v4696 = vsel %vm1144, %v4648, -inf
    %4697 = vmax.xlane.f32.xlu0 %v4696
    %v4698 = vpop.xlane.xlu0 %4697
    %v4699 = vsel %vm1144, %v4651, -inf
    %4700 = vmax.xlane.f32.xlu0 %v4699
    %v4701 = vpop.xlane.xlu0 %4700
    %v4702 = vsub.f32 %v4519, %v4656
    %v4703 = vsub.f32 %v4522, %v4659
    %v4704 = vsub.f32 %v4527, %v4662
    %v4705 = vsub.f32 %v4530, %v4665
    %v4706 = vsub.f32 %v4535, %v4668
    %v4707 = vsub.f32 %v4538, %v4671
    %v4708 = vsub.f32 %v4543, %v4674
    %v4709 = vsub.f32 %v4546, %v4677
    %v4710 = vsub.f32 %v4624, %v4680
    %v4711 = vsub.f32 %v4627, %v4683
    %v4712 = vsub.f32 %v4632, %v4686
    %v4713 = vsub.f32 %v4635, %v4689
    %v4714 = vsub.f32 %v4640, %v4692
    %v4715 = vsub.f32 %v4643, %v4695
    %v4716 = vsub.f32 %v4648, %v4698
    %v4717 = vsub.f32 %v4651, %v4701
    %v4718 = vmul.f32 %v4702, 1.442695
    %v4719 = vpow.pop %v4718
    %v4720 = vmul.f32 %v4703, 1.442695
    %v4721 = vpow.pop %v4720
    %v4722 = vmul.f32 %v4704, 1.442695
    %v4723 = vpow.pop %v4722
    %v4724 = vmul.f32 %v4705, 1.442695
    %v4725 = vpow.pop %v4724
    %v4726 = vmul.f32 %v4706, 1.442695
    %v4727 = vpow.pop %v4726
    %v4728 = vmul.f32 %v4707, 1.442695
    %v4729 = vpow.pop %v4728
    %v4730 = vmul.f32 %v4708, 1.442695
    %v4731 = vpow.pop %v4730
    %v4732 = vmul.f32 %v4709, 1.442695
    %v4733 = vpow.pop %v4732
    %v4734 = vmul.f32 %v4710, 1.442695
    %v4735 = vpow.pop %v4734
    %v4736 = vmul.f32 %v4711, 1.442695
    %v4737 = vpow.pop %v4736
    %v4738 = vmul.f32 %v4712, 1.442695
    %v4739 = vpow.pop %v4738
    %v4740 = vmul.f32 %v4713, 1.442695
    %v4741 = vpow.pop %v4740
    %v4742 = vmul.f32 %v4714, 1.442695
    %v4743 = vpow.pop %v4742
    %v4744 = vmul.f32 %v4715, 1.442695
    %v4745 = vpow.pop %v4744
    %v4746 = vmul.f32 %v4716, 1.442695
    %v4747 = vpow.pop %v4746
    %v4748 = vmul.f32 %v4717, 1.442695
    %v4749 = vpow.pop %v4748
    %v4750 = vsel %vm1144, %v4719, 0.0
    %4751 = vadd.xlane.f32.xlu0 %v4750
    %v4752 = vpop.xlane.xlu0 %4751
    %v4753 = vsel %vm1144, %v4721, 0.0
    %4754 = vadd.xlane.f32.xlu0 %v4753
    %v4755 = vpop.xlane.xlu0 %4754
    %v4756 = vsel %vm1144, %v4723, 0.0
    %4757 = vadd.xlane.f32.xlu0 %v4756
    %v4758 = vpop.xlane.xlu0 %4757
    %v4759 = vsel %vm1144, %v4725, 0.0
    %4760 = vadd.xlane.f32.xlu0 %v4759
    %v4761 = vpop.xlane.xlu0 %4760
    %v4762 = vsel %vm1144, %v4727, 0.0
    %4763 = vadd.xlane.f32.xlu0 %v4762
    %v4764 = vpop.xlane.xlu0 %4763
    %v4765 = vsel %vm1144, %v4729, 0.0
    %4766 = vadd.xlane.f32.xlu0 %v4765
    %v4767 = vpop.xlane.xlu0 %4766
    %v4768 = vsel %vm1144, %v4731, 0.0
    %4769 = vadd.xlane.f32.xlu0 %v4768
    %v4770 = vpop.xlane.xlu0 %4769
    %v4771 = vsel %vm1144, %v4733, 0.0
    %4772 = vadd.xlane.f32.xlu0 %v4771
    %v4773 = vpop.xlane.xlu0 %4772
    %v4774 = vsel %vm1144, %v4735, 0.0
    %4775 = vadd.xlane.f32.xlu0 %v4774
    %v4776 = vpop.xlane.xlu0 %4775
    %v4777 = vsel %vm1144, %v4737, 0.0
    %4778 = vadd.xlane.f32.xlu0 %v4777
    %v4779 = vpop.xlane.xlu0 %4778
    %v4780 = vsel %vm1144, %v4739, 0.0
    %4781 = vadd.xlane.f32.xlu0 %v4780
    %v4782 = vpop.xlane.xlu0 %4781
    %v4783 = vsel %vm1144, %v4741, 0.0
    %4784 = vadd.xlane.f32.xlu0 %v4783
    %v4785 = vpop.xlane.xlu0 %4784
    %v4786 = vsel %vm1144, %v4743, 0.0
    %4787 = vadd.xlane.f32.xlu0 %v4786
    %v4788 = vpop.xlane.xlu0 %4787
    %v4789 = vsel %vm1144, %v4745, 0.0
    %4790 = vadd.xlane.f32.xlu0 %v4789
    %v4791 = vpop.xlane.xlu0 %4790
    %v4792 = vsel %vm1144, %v4747, 0.0
    %4793 = vadd.xlane.f32.xlu0 %v4792
    %v4794 = vpop.xlane.xlu0 %4793
    %v4795 = vsel %vm1144, %v4749, 0.0
    %4796 = vadd.xlane.f32.xlu0 %v4795
    %v4797 = vpop.xlane.xlu0 %4796
    %v4798 = vrcp.pop %v4752
    %v4799 = vrcp.pop %v4755
    %v4800 = vrcp.pop %v4758
    %v4801 = vrcp.pop %v4761
    %v4802 = vrcp.pop %v4764
    %v4803 = vrcp.pop %v4767
    %v4804 = vrcp.pop %v4770
    %v4805 = vrcp.pop %v4773
    %v4806 = vrcp.pop %v4776
    %v4807 = vrcp.pop %v4779
    %v4808 = vrcp.pop %v4782
    %v4809 = vrcp.pop %v4785
    %v4810 = vrcp.pop %v4788
    %v4811 = vrcp.pop %v4791
    %v4812 = vrcp.pop %v4794
    %v4813 = vrcp.pop %v4797
    %v4814 = vmul.f32 %v4719, %v4798
    %v4815 = vmul.f32 %v4721, %v4799
    %v4816 = vmul.f32 %v4723, %v4800
    %v4817 = vmul.f32 %v4725, %v4801
    %v4818 = vmul.f32 %v4727, %v4802
    %v4819 = vmul.f32 %v4729, %v4803
    %v4820 = vmul.f32 %v4731, %v4804
    %v4821 = vmul.f32 %v4733, %v4805
    %v4822 = vmul.f32 %v4735, %v4806
    %v4823 = vmul.f32 %v4737, %v4807
    %v4824 = vmul.f32 %v4739, %v4808
    %v4825 = vmul.f32 %v4741, %v4809
    %v4826 = vmul.f32 %v4743, %v4810
    %v4827 = vmul.f32 %v4745, %v4811
    %v4828 = vmul.f32 %v4747, %v4812
    %v4829 = vmul.f32 %v4749, %v4813
    %v4830 = vpack.c.bf16 %v4815, %v4814
    %v4831 = vpack.c.bf16 %v4817, %v4816
    %v4832 = vpack.c.bf16 %v4819, %v4818
    %v4833 = vpack.c.bf16 %v4821, %v4820
    %v4834 = vpack.c.bf16 %v4823, %v4822
    %v4835 = vpack.c.bf16 %v4825, %v4824
    %v4836 = vpack.c.bf16 %v4827, %v4826
    %v4837 = vpack.c.bf16 %v4829, %v4828
    %4838 = vrot.lane.b32.xlu0 %v3138, 88
    %v4839 = vpop.permute.xlu0 %4838
    %4840 = vrot.lane.b32.xlu0 %v3139, 88
    %v4841 = vpop.permute.xlu0 %4840
    %4842 = vrot.lane.b32.xlu0 %v3140, 88
    %v4843 = vpop.permute.xlu0 %4842
    %4844 = vrot.lane.b32.xlu0 %v3141, 88
    %v4845 = vpop.permute.xlu0 %4844
    %4850 = vrot.lane.b32.xlu0 %v28, 120
    %v4851 = vpop.permute.xlu0 %4850
    %4852 = vrot.lane.b32.xlu0 %v29, 120
    %v4853 = vpop.permute.xlu0 %4852
    %4854 = vrot.lane.b32.xlu0 %v30, 120
    %v4855 = vpop.permute.xlu0 %4854
    %4856 = vrot.lane.b32.xlu0 %v31, 120
    %v4857 = vpop.permute.xlu0 %4856
    %4858 = vrot.lane.b32.xlu0 %v32, 120
    %v4859 = vpop.permute.xlu0 %4858
    %4860 = vrot.lane.b32.xlu0 %v33, 120
    %v4861 = vpop.permute.xlu0 %4860
    %4862 = vrot.lane.b32.xlu0 %v34, 120
    %v4863 = vpop.permute.xlu0 %4862
    %4864 = vrot.lane.b32.xlu0 %v35, 120
    %v4865 = vpop.permute.xlu0 %4864
    %v4875 = vsel %vm1144, %v4830, 0
    %v4878 = vsel %vm1144, %v4831, 0
    %v4881 = vsel %vm1144, %v4832, 0
    %v4884 = vsel %vm1144, %v4833, 0
    %4886 = vmatprep.subr.bf16.mxu0 0
    %4887 = vmatpush1.bf16.msra.mxu0 %v4839
    %4888 = vmatprep.subr.bf16.mxu0 0
    %4889 = vmatpush1.bf16.msra.mxu0 %v4841
    %4890 = vmatprep.subr.bf16.mxu0 0
    %4891 = vmatpush1.bf16.msra.mxu0 %v4843
    %4892 = vmatprep.subr.bf16.mxu0 0
    %4893 = vmatpush1.bf16.msra.mxu0 %v4845
    %4894 = vmatprep.subr.bf16.mxu0 0
    %4895 = vmatpush1.bf16.msra.mxu0 0
    %4896 = vmatprep.subr.bf16.mxu0 0
    %4897 = vmatpush1.bf16.msra.mxu0 0
    %4898 = vmatprep.subr.bf16.mxu0 0
    %4899 = vmatpush1.bf16.msra.mxu0 0
    %4900 = vmatprep.subr.bf16.mxu0 0
    %4901 = vmatpush1.bf16.msra.mxu0 0
    %4902 = vmatprep.subr.bf16.mxu0 0
    %4903 = vmatpush1.bf16.msra.mxu0 0
    %4904 = vmatprep.subr.bf16.mxu0 0
    %4905 = vmatpush1.bf16.msra.mxu0 0
    %4906 = vmatprep.subr.bf16.mxu0 0
    %4907 = vmatpush1.bf16.msra.mxu0 0
    %4908 = vmatprep.subr.bf16.mxu0 0
    %4909 = vmatpush1.bf16.msra.mxu0 0
    %4910 = vmatprep.subr.bf16.mxu0 0
    %4911 = vmatpush1.bf16.msra.mxu0 0
    %4912 = vmatprep.subr.bf16.mxu0 0
    %4913 = vmatpush1.bf16.msra.mxu0 0
    %4914 = vmatprep.subr.bf16.mxu0 0
    %4915 = vmatpush1.bf16.msra.mxu0 0
    %4916 = vmatprep.subr.bf16.mxu0 0
    %4917 = vmatpush1.bf16.msra.mxu0 0
    %4918 = vmatprep.mubr.bf16.mxu0 0
    %4919 = vmatmul.mubr.bf16.gmra.mrb[0].mxu0 %v4875
    %v4920 = vpop.f32.mrb[0].mxu0
    %v4921 = vadd.f32 %v4851, %v4920
    %v4922 = vpop.f32.mrb[0].mxu0
    %v4923 = vpop.f32.mrb[0].mxu0
    %v4924 = vadd.f32 %v4853, %v4923
    %v4925 = vpop.f32.mrb[0].mxu0
    %4926 = vmatprep.mubr.bf16.mxu0 0
    %4927 = vmatmul.mubr.bf16.gmra.mrb[0].mxu0 %v4878
    %v4928 = vpop.f32.mrb[0].mxu0
    %v4929 = vadd.f32 %v4855, %v4928
    %v4930 = vpop.f32.mrb[0].mxu0
    %v4931 = vpop.f32.mrb[0].mxu0
    %v4932 = vadd.f32 %v4857, %v4931
    %v4933 = vpop.f32.mrb[0].mxu0
    %4934 = vmatprep.mubr.bf16.mxu0 0
    %4935 = vmatmul.mubr.bf16.gmra.mrb[0].mxu0 %v4881
    %v4936 = vpop.f32.mrb[0].mxu0
    %v4937 = vadd.f32 %v4859, %v4936
    %v4938 = vpop.f32.mrb[0].mxu0
    %v4939 = vpop.f32.mrb[0].mxu0
    %v4940 = vadd.f32 %v4861, %v4939
    %v4941 = vpop.f32.mrb[0].mxu0
    %4942 = vmatprep.mubr.bf16.mxu0 0
    %4943 = vmatmul.mubr.bf16.gmra.mrb[0].mxu0 %v4884
    %v4944 = vpop.f32.mrb[0].mxu0
    %v4945 = vadd.f32 %v4863, %v4944
    %v4946 = vpop.f32.mrb[0].mxu0
    %v4947 = vpop.f32.mrb[0].mxu0
    %v4948 = vadd.f32 %v4865, %v4947
    %v4949 = vpop.f32.mrb[0].mxu0
    %4950 = vdwg.mxu0
    %4951 = vrot.lane.b32.xlu0 %v3142, 88
    %v4952 = vpop.permute.xlu0 %4951
    %4953 = vrot.lane.b32.xlu0 %v3143, 88
    %v4954 = vpop.permute.xlu0 %4953
    %4955 = vrot.lane.b32.xlu0 %v3144, 88
    %v4956 = vpop.permute.xlu0 %4955
    %4957 = vrot.lane.b32.xlu0 %v3145, 88
    %v4958 = vpop.permute.xlu0 %4957
    %4963 = vrot.lane.b32.xlu0 %v36, 120
    %v4964 = vpop.permute.xlu0 %4963
    %4965 = vrot.lane.b32.xlu0 %v37, 120
    %v4966 = vpop.permute.xlu0 %4965
    %4967 = vrot.lane.b32.xlu0 %v38, 120
    %v4968 = vpop.permute.xlu0 %4967
    %4969 = vrot.lane.b32.xlu0 %v39, 120
    %v4970 = vpop.permute.xlu0 %4969
    %4971 = vrot.lane.b32.xlu0 %v40, 120
    %v4972 = vpop.permute.xlu0 %4971
    %4973 = vrot.lane.b32.xlu0 %v41, 120
    %v4974 = vpop.permute.xlu0 %4973
    %4975 = vrot.lane.b32.xlu0 %v42, 120
    %v4976 = vpop.permute.xlu0 %4975
    %4977 = vrot.lane.b32.xlu0 %v43, 120
    %v4978 = vpop.permute.xlu0 %4977
    %v4988 = vsel %vm1144, %v4834, 0
    %v4991 = vsel %vm1144, %v4835, 0
    %v4994 = vsel %vm1144, %v4836, 0
    %v4997 = vsel %vm1144, %v4837, 0
    %4999 = vmatprep.subr.bf16.mxu0 0
    %5000 = vmatpush1.bf16.msra.mxu0 %v4952
    %5001 = vmatprep.subr.bf16.mxu0 0
    %5002 = vmatpush1.bf16.msra.mxu0 %v4954
    %5003 = vmatprep.subr.bf16.mxu0 0
    %5004 = vmatpush1.bf16.msra.mxu0 %v4956
    %5005 = vmatprep.subr.bf16.mxu0 0
    %5006 = vmatpush1.bf16.msra.mxu0 %v4958
    %5007 = vmatprep.subr.bf16.mxu0 0
    %5008 = vmatpush1.bf16.msra.mxu0 0
    %5009 = vmatprep.subr.bf16.mxu0 0
    %5010 = vmatpush1.bf16.msra.mxu0 0
    %5011 = vmatprep.subr.bf16.mxu0 0
    %5012 = vmatpush1.bf16.msra.mxu0 0
    %5013 = vmatprep.subr.bf16.mxu0 0
    %5014 = vmatpush1.bf16.msra.mxu0 0
    %5015 = vmatprep.subr.bf16.mxu0 0
    %5016 = vmatpush1.bf16.msra.mxu0 0
    %5017 = vmatprep.subr.bf16.mxu0 0
    %5018 = vmatpush1.bf16.msra.mxu0 0
    %5019 = vmatprep.subr.bf16.mxu0 0
    %5020 = vmatpush1.bf16.msra.mxu0 0
    %5021 = vmatprep.subr.bf16.mxu0 0
    %5022 = vmatpush1.bf16.msra.mxu0 0
    %5023 = vmatprep.subr.bf16.mxu0 0
    %5024 = vmatpush1.bf16.msra.mxu0 0
    %5025 = vmatprep.subr.bf16.mxu0 0
    %5026 = vmatpush1.bf16.msra.mxu0 0
    %5027 = vmatprep.subr.bf16.mxu0 0
    %5028 = vmatpush1.bf16.msra.mxu0 0
    %5029 = vmatprep.subr.bf16.mxu0 0
    %5030 = vmatpush1.bf16.msra.mxu0 0
    %5031 = vmatprep.mubr.bf16.mxu0 0
    %5032 = vmatmul.mubr.bf16.gmra.mrb[0].mxu0 %v4988
    %v5033 = vpop.f32.mrb[0].mxu0
    %v5034 = vadd.f32 %v4964, %v5033
    %v5035 = vpop.f32.mrb[0].mxu0
    %v5036 = vpop.f32.mrb[0].mxu0
    %v5037 = vadd.f32 %v4966, %v5036
    %v5038 = vpop.f32.mrb[0].mxu0
    %5039 = vmatprep.mubr.bf16.mxu0 0
    %5040 = vmatmul.mubr.bf16.gmra.mrb[0].mxu0 %v4991
    %v5041 = vpop.f32.mrb[0].mxu0
    %v5042 = vadd.f32 %v4968, %v5041
    %v5043 = vpop.f32.mrb[0].mxu0
    %v5044 = vpop.f32.mrb[0].mxu0
    %v5045 = vadd.f32 %v4970, %v5044
    %v5046 = vpop.f32.mrb[0].mxu0
    %5047 = vmatprep.mubr.bf16.mxu0 0
    %5048 = vmatmul.mubr.bf16.gmra.mrb[0].mxu0 %v4994
    %v5049 = vpop.f32.mrb[0].mxu0
    %v5050 = vadd.f32 %v4972, %v5049
    %v5051 = vpop.f32.mrb[0].mxu0
    %v5052 = vpop.f32.mrb[0].mxu0
    %v5053 = vadd.f32 %v4974, %v5052
    %v5054 = vpop.f32.mrb[0].mxu0
    %5055 = vmatprep.mubr.bf16.mxu0 0
    %5056 = vmatmul.mubr.bf16.gmra.mrb[0].mxu0 %v4997
    %v5057 = vpop.f32.mrb[0].mxu0
    %v5058 = vadd.f32 %v4976, %v5057
    %v5059 = vpop.f32.mrb[0].mxu0
    %v5060 = vpop.f32.mrb[0].mxu0
    %v5061 = vadd.f32 %v4978, %v5060
    %v5062 = vpop.f32.mrb[0].mxu0
    %5063 = vdwg.mxu0
    %5080 = vrot.lane.b32.xlu0 %v4921, 8
    %v5081 = vpop.permute.xlu0 %5080
    %5082 = vrot.lane.b32.xlu0 %v4924, 8
    %v5083 = vpop.permute.xlu0 %5082
    %5084 = vrot.lane.b32.xlu0 %v4929, 8
    %v5085 = vpop.permute.xlu0 %5084
    %5086 = vrot.lane.b32.xlu0 %v4932, 8
    %v5087 = vpop.permute.xlu0 %5086
    %5088 = vrot.lane.b32.xlu0 %v4937, 8
    %v5089 = vpop.permute.xlu0 %5088
    %5090 = vrot.lane.b32.xlu0 %v4940, 8
    %v5091 = vpop.permute.xlu0 %5090
    %5092 = vrot.lane.b32.xlu0 %v4945, 8
    %v5093 = vpop.permute.xlu0 %5092
    %5094 = vrot.lane.b32.xlu0 %v4948, 8
    %v5095 = vpop.permute.xlu0 %5094
    %5096 = vrot.lane.b32.xlu0 %v5034, 8
    %v5097 = vpop.permute.xlu0 %5096
    %5098 = vrot.lane.b32.xlu0 %v5037, 8
    %v5099 = vpop.permute.xlu0 %5098
    %5100 = vrot.lane.b32.xlu0 %v5042, 8
    %v5101 = vpop.permute.xlu0 %5100
    %5102 = vrot.lane.b32.xlu0 %v5045, 8
    %v5103 = vpop.permute.xlu0 %5102
    %5104 = vrot.lane.b32.xlu0 %v5050, 8
    %v5105 = vpop.permute.xlu0 %5104
    %5106 = vrot.lane.b32.xlu0 %v5053, 8
    %v5107 = vpop.permute.xlu0 %5106
    %5108 = vrot.lane.b32.xlu0 %v5058, 8
    %v5109 = vpop.permute.xlu0 %5108
    %5110 = vrot.lane.b32.xlu0 %v5061, 8
    %v5111 = vpop.permute.xlu0 %5110
    %vm5128 = vcmask 97344
    %5129 = vst.msk [vmem:[#allocation4] sm:$0xff] %vm5128, %v5081
    %5130 = vst.msk [vmem:[#allocation4 + $0x8] sm:$0xff] %vm5128, %v5083
    %5131 = vst.msk [vmem:[#allocation4 + $0x10] sm:$0xff] %vm5128, %v5085
    %5132 = vst.msk [vmem:[#allocation4 + $0x18] sm:$0xff] %vm5128, %v5087
    %5133 = vst.msk [vmem:[#allocation4 + $0x20] sm:$0xff] %vm5128, %v5089
    %5134 = vst.msk [vmem:[#allocation4 + $0x28] sm:$0xff] %vm5128, %v5091
    %5135 = vst.msk [vmem:[#allocation4 + $0x30] sm:$0xff] %vm5128, %v5093
    %5136 = vst.msk [vmem:[#allocation4 + $0x38] sm:$0xff] %vm5128, %v5095
    %5137 = vst.msk [vmem:[#allocation4 + $0x40] sm:$0xff] %vm5128, %v5097
    %5138 = vst.msk [vmem:[#allocation4 + $0x48] sm:$0xff] %vm5128, %v5099
    %5139 = vst.msk [vmem:[#allocation4 + $0x50] sm:$0xff] %vm5128, %v5101
    %5140 = vst.msk [vmem:[#allocation4 + $0x58] sm:$0xff] %vm5128, %v5103
    %5141 = vst.msk [vmem:[#allocation4 + $0x60] sm:$0xff] %vm5128, %v5105
    %5142 = vst.msk [vmem:[#allocation4 + $0x68] sm:$0xff] %vm5128, %v5107
    %5143 = vst.msk [vmem:[#allocation4 + $0x70] sm:$0xff] %vm5128, %v5109
    %5144 = vst.msk [vmem:[#allocation4 + $0x78] sm:$0xff] %vm5128, %v5111
    %5145 = vrot.lane.b32.xlu0 %v3138, 116
    %v5146 = vpop.permute.xlu0 %5145
    %5147 = vrot.lane.b32.xlu0 %v3139, 116
    %v5148 = vpop.permute.xlu0 %5147
    %5149 = vrot.lane.b32.xlu0 %v3140, 116
    %v5150 = vpop.permute.xlu0 %5149
    %5151 = vrot.lane.b32.xlu0 %v3141, 116
    %v5152 = vpop.permute.xlu0 %5151
    %5153 = vrot.lane.b32.xlu0 %v3138, 100
    %v5154 = vpop.permute.xlu0 %5153
    %5155 = vrot.lane.b32.xlu0 %v3139, 100
    %v5156 = vpop.permute.xlu0 %5155
    %5157 = vrot.lane.b32.xlu0 %v3140, 100
    %v5158 = vpop.permute.xlu0 %5157
    %5159 = vrot.lane.b32.xlu0 %v3141, 100
    %v5160 = vpop.permute.xlu0 %5159
    %v5162 = vsel %vm3158, %v5146, 0
    %v5165 = vsel %vm3158, %v5148, 0
    %v5168 = vsel %vm3158, %v5150, 0
    %v5171 = vsel %vm3158, %v5152, 0
    %v5174 = vsel %vm3158, %v5154, 0
    %v5177 = vsel %vm3158, %v5156, 0
    %v5180 = vsel %vm3158, %v5158, 0
    %v5183 = vsel %vm3158, %v5160, 0
    %5185 = vmatprep.subr.bf16.mxu0 0
    %5186 = vmatpush1.bf16.xpose.msra.mxu0 %v5174
    %5187 = vmatprep.subr.bf16.mxu0 0
    %5188 = vmatpush1.bf16.xpose.msra.mxu0 %v5177
    %5189 = vmatprep.subr.bf16.mxu0 0
    %5190 = vmatpush1.bf16.xpose.msra.mxu0 %v5180
    %5191 = vmatprep.subr.bf16.mxu0 0
    %5192 = vmatpush1.bf16.xpose.msra.mxu0 %v5183
    %5193 = vmatprep.subr.bf16.mxu0 0
    %5194 = vmatpush1.bf16.xpose.msra.mxu0 0
    %5195 = vmatprep.subr.bf16.mxu0 0
    %5196 = vmatpush1.bf16.xpose.msra.mxu0 0
    %5197 = vmatprep.subr.bf16.mxu0 0
    %5198 = vmatpush1.bf16.xpose.msra.mxu0 0
    %5199 = vmatprep.subr.bf16.mxu0 0
    %5200 = vmatpush1.bf16.xpose.msra.mxu0 0
    %5201 = vmatprep.subr.bf16.mxu0 0
    %5202 = vmatpush1.bf16.xpose.msra.mxu0 0
    %5203 = vmatprep.subr.bf16.mxu0 0
    %5204 = vmatpush1.bf16.xpose.msra.mxu0 0
    %5205 = vmatprep.subr.bf16.mxu0 0
    %5206 = vmatpush1.bf16.xpose.msra.mxu0 0
    %5207 = vmatprep.subr.bf16.mxu0 0
    %5208 = vmatpush1.bf16.xpose.msra.mxu0 0
    %5209 = vmatprep.subr.bf16.mxu0 0
    %5210 = vmatpush1.bf16.xpose.msra.mxu0 0
    %5211 = vmatprep.subr.bf16.mxu0 0
    %5212 = vmatpush1.bf16.xpose.msra.mxu0 0
    %5213 = vmatprep.subr.bf16.mxu0 0
    %5214 = vmatpush1.bf16.xpose.msra.mxu0 0
    %5215 = vmatprep.subr.bf16.mxu0 0
    %5216 = vmatpush1.bf16.xpose.msra.mxu0 0
    %5217 = vmatprep.mubr.bf16.mxu0 0
    %5218 = vmatmul.mubr.bf16.gmra.mrb[0].mxu0 %v5162
    %v5219 = vpop.f32.mrb[0].mxu0
    %v5220 = vadd.f32 0.0, %v5219
    %v5221 = vpop.f32.mrb[0].mxu0
    %v5222 = vpop.f32.mrb[0].mxu0
    %v5223 = vadd.f32 0.0, %v5222
    %v5224 = vpop.f32.mrb[0].mxu0
    %5225 = vmatprep.mubr.bf16.mxu0 0
    %5226 = vmatmul.mubr.bf16.gmra.mrb[0].mxu0 %v5165
    %v5227 = vpop.f32.mrb[0].mxu0
    %v5228 = vadd.f32 0.0, %v5227
    %v5229 = vpop.f32.mrb[0].mxu0
    %v5230 = vpop.f32.mrb[0].mxu0
    %v5231 = vadd.f32 0.0, %v5230
    %v5232 = vpop.f32.mrb[0].mxu0
    %5233 = vmatprep.mubr.bf16.mxu0 0
    %5234 = vmatmul.mubr.bf16.gmra.mrb[0].mxu0 %v5168
    %v5235 = vpop.f32.mrb[0].mxu0
    %v5236 = vadd.f32 0.0, %v5235
    %v5237 = vpop.f32.mrb[0].mxu0
    %v5238 = vpop.f32.mrb[0].mxu0
    %v5239 = vadd.f32 0.0, %v5238
    %v5240 = vpop.f32.mrb[0].mxu0
    %5241 = vmatprep.mubr.bf16.mxu0 0
    %5242 = vmatmul.mubr.bf16.gmra.mrb[0].mxu0 %v5171
    %v5243 = vpop.f32.mrb[0].mxu0
    %v5244 = vadd.f32 0.0, %v5243
    %v5245 = vpop.f32.mrb[0].mxu0
    %v5246 = vpop.f32.mrb[0].mxu0
    %v5247 = vadd.f32 0.0, %v5246
    %v5248 = vpop.f32.mrb[0].mxu0
    %5249 = vdwg.mxu0
    %5250 = vrot.lane.b32.xlu0 %v3142, 116
    %v5251 = vpop.permute.xlu0 %5250
    %5252 = vrot.lane.b32.xlu0 %v3143, 116
    %v5253 = vpop.permute.xlu0 %5252
    %5254 = vrot.lane.b32.xlu0 %v3144, 116
    %v5255 = vpop.permute.xlu0 %5254
    %5256 = vrot.lane.b32.xlu0 %v3145, 116
    %v5257 = vpop.permute.xlu0 %5256
    %5258 = vrot.lane.b32.xlu0 %v3142, 100
    %v5259 = vpop.permute.xlu0 %5258
    %5260 = vrot.lane.b32.xlu0 %v3143, 100
    %v5261 = vpop.permute.xlu0 %5260
    %5262 = vrot.lane.b32.xlu0 %v3144, 100
    %v5263 = vpop.permute.xlu0 %5262
    %5264 = vrot.lane.b32.xlu0 %v3145, 100
    %v5265 = vpop.permute.xlu0 %5264
    %v5267 = vsel %vm3158, %v5251, 0
    %v5270 = vsel %vm3158, %v5253, 0
    %v5273 = vsel %vm3158, %v5255, 0
    %v5276 = vsel %vm3158, %v5257, 0
    %v5279 = vsel %vm3158, %v5259, 0
    %v5282 = vsel %vm3158, %v5261, 0
    %v5285 = vsel %vm3158, %v5263, 0
    %v5288 = vsel %vm3158, %v5265, 0
    %5290 = vmatprep.subr.bf16.mxu0 0
    %5291 = vmatpush1.bf16.xpose.msra.mxu0 %v5279
    %5292 = vmatprep.subr.bf16.mxu0 0
    %5293 = vmatpush1.bf16.xpose.msra.mxu0 %v5282
    %5294 = vmatprep.subr.bf16.mxu0 0
    %5295 = vmatpush1.bf16.xpose.msra.mxu0 %v5285
    %5296 = vmatprep.subr.bf16.mxu0 0
    %5297 = vmatpush1.bf16.xpose.msra.mxu0 %v5288
    %5298 = vmatprep.subr.bf16.mxu0 0
    %5299 = vmatpush1.bf16.xpose.msra.mxu0 0
    %5300 = vmatprep.subr.bf16.mxu0 0
    %5301 = vmatpush1.bf16.xpose.msra.mxu0 0
    %5302 = vmatprep.subr.bf16.mxu0 0
    %5303 = vmatpush1.bf16.xpose.msra.mxu0 0
    %5304 = vmatprep.subr.bf16.mxu0 0
    %5305 = vmatpush1.bf16.xpose.msra.mxu0 0
    %5306 = vmatprep.subr.bf16.mxu0 0
    %5307 = vmatpush1.bf16.xpose.msra.mxu0 0
    %5308 = vmatprep.subr.bf16.mxu0 0
    %5309 = vmatpush1.bf16.xpose.msra.mxu0 0
    %5310 = vmatprep.subr.bf16.mxu0 0
    %5311 = vmatpush1.bf16.xpose.msra.mxu0 0
    %5312 = vmatprep.subr.bf16.mxu0 0
    %5313 = vmatpush1.bf16.xpose.msra.mxu0 0
    %5314 = vmatprep.subr.bf16.mxu0 0
    %5315 = vmatpush1.bf16.xpose.msra.mxu0 0
    %5316 = vmatprep.subr.bf16.mxu0 0
    %5317 = vmatpush1.bf16.xpose.msra.mxu0 0
    %5318 = vmatprep.subr.bf16.mxu0 0
    %5319 = vmatpush1.bf16.xpose.msra.mxu0 0
    %5320 = vmatprep.subr.bf16.mxu0 0
    %5321 = vmatpush1.bf16.xpose.msra.mxu0 0
    %5322 = vmatprep.mubr.bf16.mxu0 0
    %5323 = vmatmul.mubr.bf16.gmra.mrb[0].mxu0 %v5267
    %v5324 = vpop.f32.mrb[0].mxu0
    %v5325 = vadd.f32 0.0, %v5324
    %v5326 = vpop.f32.mrb[0].mxu0
    %v5327 = vpop.f32.mrb[0].mxu0
    %v5328 = vadd.f32 0.0, %v5327
    %v5329 = vpop.f32.mrb[0].mxu0
    %5330 = vmatprep.mubr.bf16.mxu0 0
    %5331 = vmatmul.mubr.bf16.gmra.mrb[0].mxu0 %v5270
    %v5332 = vpop.f32.mrb[0].mxu0
    %v5333 = vadd.f32 0.0, %v5332
    %v5334 = vpop.f32.mrb[0].mxu0
    %v5335 = vpop.f32.mrb[0].mxu0
    %v5336 = vadd.f32 0.0, %v5335
    %v5337 = vpop.f32.mrb[0].mxu0
    %5338 = vmatprep.mubr.bf16.mxu0 0
    %5339 = vmatmul.mubr.bf16.gmra.mrb[0].mxu0 %v5273
    %v5340 = vpop.f32.mrb[0].mxu0
    %v5341 = vadd.f32 0.0, %v5340
    %v5342 = vpop.f32.mrb[0].mxu0
    %v5343 = vpop.f32.mrb[0].mxu0
    %v5344 = vadd.f32 0.0, %v5343
    %v5345 = vpop.f32.mrb[0].mxu0
    %5346 = vmatprep.mubr.bf16.mxu0 0
    %5347 = vmatmul.mubr.bf16.gmra.mrb[0].mxu0 %v5276
    %v5348 = vpop.f32.mrb[0].mxu0
    %v5349 = vadd.f32 0.0, %v5348
    %v5350 = vpop.f32.mrb[0].mxu0
    %v5351 = vpop.f32.mrb[0].mxu0
    %v5352 = vadd.f32 0.0, %v5351
    %v5353 = vpop.f32.mrb[0].mxu0
    %5354 = vdwg.mxu0
    %v5355 = vsel %vm1144, %v5220, -inf
    %5356 = vmax.xlane.f32.xlu0 %v5355
    %v5357 = vpop.xlane.xlu0 %5356
    %v5358 = vsel %vm1144, %v5223, -inf
    %5359 = vmax.xlane.f32.xlu0 %v5358
    %v5360 = vpop.xlane.xlu0 %5359
    %v5361 = vsel %vm1144, %v5228, -inf
    %5362 = vmax.xlane.f32.xlu0 %v5361
    %v5363 = vpop.xlane.xlu0 %5362
    %v5364 = vsel %vm1144, %v5231, -inf
    %5365 = vmax.xlane.f32.xlu0 %v5364
    %v5366 = vpop.xlane.xlu0 %5365
    %v5367 = vsel %vm1144, %v5236, -inf
    %5368 = vmax.xlane.f32.xlu0 %v5367
    %v5369 = vpop.xlane.xlu0 %5368
    %v5370 = vsel %vm1144, %v5239, -inf
    %5371 = vmax.xlane.f32.xlu0 %v5370
    %v5372 = vpop.xlane.xlu0 %5371
    %v5373 = vsel %vm1144, %v5244, -inf
    %5374 = vmax.xlane.f32.xlu0 %v5373
    %v5375 = vpop.xlane.xlu0 %5374
    %v5376 = vsel %vm1144, %v5247, -inf
    %5377 = vmax.xlane.f32.xlu0 %v5376
    %v5378 = vpop.xlane.xlu0 %5377
    %v5379 = vsel %vm1144, %v5325, -inf
    %5380 = vmax.xlane.f32.xlu0 %v5379
    %v5381 = vpop.xlane.xlu0 %5380
    %v5382 = vsel %vm1144, %v5328, -inf
    %5383 = vmax.xlane.f32.xlu0 %v5382
    %v5384 = vpop.xlane.xlu0 %5383
    %v5385 = vsel %vm1144, %v5333, -inf
    %5386 = vmax.xlane.f32.xlu0 %v5385
    %v5387 = vpop.xlane.xlu0 %5386
    %v5388 = vsel %vm1144, %v5336, -inf
    %5389 = vmax.xlane.f32.xlu0 %v5388
    %v5390 = vpop.xlane.xlu0 %5389
    %v5391 = vsel %vm1144, %v5341, -inf
    %5392 = vmax.xlane.f32.xlu0 %v5391
    %v5393 = vpop.xlane.xlu0 %5392
    %v5394 = vsel %vm1144, %v5344, -inf
    %5395 = vmax.xlane.f32.xlu0 %v5394
    %v5396 = vpop.xlane.xlu0 %5395
    %v5397 = vsel %vm1144, %v5349, -inf
    %5398 = vmax.xlane.f32.xlu0 %v5397
    %v5399 = vpop.xlane.xlu0 %5398
    %v5400 = vsel %vm1144, %v5352, -inf
    %5401 = vmax.xlane.f32.xlu0 %v5400
    %v5402 = vpop.xlane.xlu0 %5401
    %v5403 = vsub.f32 %v5220, %v5357
    %v5404 = vsub.f32 %v5223, %v5360
    %v5405 = vsub.f32 %v5228, %v5363
    %v5406 = vsub.f32 %v5231, %v5366
    %v5407 = vsub.f32 %v5236, %v5369
    %v5408 = vsub.f32 %v5239, %v5372
    %v5409 = vsub.f32 %v5244, %v5375
    %v5410 = vsub.f32 %v5247, %v5378
    %v5411 = vsub.f32 %v5325, %v5381
    %v5412 = vsub.f32 %v5328, %v5384
    %v5413 = vsub.f32 %v5333, %v5387
    %v5414 = vsub.f32 %v5336, %v5390
    %v5415 = vsub.f32 %v5341, %v5393
    %v5416 = vsub.f32 %v5344, %v5396
    %v5417 = vsub.f32 %v5349, %v5399
    %v5418 = vsub.f32 %v5352, %v5402
    %v5419 = vmul.f32 %v5403, 1.442695
    %v5420 = vpow.pop %v5419
    %v5421 = vmul.f32 %v5404, 1.442695
    %v5422 = vpow.pop %v5421
    %v5423 = vmul.f32 %v5405, 1.442695
    %v5424 = vpow.pop %v5423
    %v5425 = vmul.f32 %v5406, 1.442695
    %v5426 = vpow.pop %v5425
    %v5427 = vmul.f32 %v5407, 1.442695
    %v5428 = vpow.pop %v5427
    %v5429 = vmul.f32 %v5408, 1.442695
    %v5430 = vpow.pop %v5429
    %v5431 = vmul.f32 %v5409, 1.442695
    %v5432 = vpow.pop %v5431
    %v5433 = vmul.f32 %v5410, 1.442695
    %v5434 = vpow.pop %v5433
    %v5435 = vmul.f32 %v5411, 1.442695
    %v5436 = vpow.pop %v5435
    %v5437 = vmul.f32 %v5412, 1.442695
    %v5438 = vpow.pop %v5437
    %v5439 = vmul.f32 %v5413, 1.442695
    %v5440 = vpow.pop %v5439
    %v5441 = vmul.f32 %v5414, 1.442695
    %v5442 = vpow.pop %v5441
    %v5443 = vmul.f32 %v5415, 1.442695
    %v5444 = vpow.pop %v5443
    %v5445 = vmul.f32 %v5416, 1.442695
    %v5446 = vpow.pop %v5445
    %v5447 = vmul.f32 %v5417, 1.442695
    %v5448 = vpow.pop %v5447
    %v5449 = vmul.f32 %v5418, 1.442695
    %v5450 = vpow.pop %v5449
    %v5451 = vsel %vm1144, %v5420, 0.0
    %5452 = vadd.xlane.f32.xlu0 %v5451
    %v5453 = vpop.xlane.xlu0 %5452
    %v5454 = vsel %vm1144, %v5422, 0.0
    %5455 = vadd.xlane.f32.xlu0 %v5454
    %v5456 = vpop.xlane.xlu0 %5455
    %v5457 = vsel %vm1144, %v5424, 0.0
    %5458 = vadd.xlane.f32.xlu0 %v5457
    %v5459 = vpop.xlane.xlu0 %5458
    %v5460 = vsel %vm1144, %v5426, 0.0
    %5461 = vadd.xlane.f32.xlu0 %v5460
    %v5462 = vpop.xlane.xlu0 %5461
    %v5463 = vsel %vm1144, %v5428, 0.0
    %5464 = vadd.xlane.f32.xlu0 %v5463
    %v5465 = vpop.xlane.xlu0 %5464
    %v5466 = vsel %vm1144, %v5430, 0.0
    %5467 = vadd.xlane.f32.xlu0 %v5466
    %v5468 = vpop.xlane.xlu0 %5467
    %v5469 = vsel %vm1144, %v5432, 0.0
    %5470 = vadd.xlane.f32.xlu0 %v5469
    %v5471 = vpop.xlane.xlu0 %5470
    %v5472 = vsel %vm1144, %v5434, 0.0
    %5473 = vadd.xlane.f32.xlu0 %v5472
    %v5474 = vpop.xlane.xlu0 %5473
    %v5475 = vsel %vm1144, %v5436, 0.0
    %5476 = vadd.xlane.f32.xlu0 %v5475
    %v5477 = vpop.xlane.xlu0 %5476
    %v5478 = vsel %vm1144, %v5438, 0.0
    %5479 = vadd.xlane.f32.xlu0 %v5478
    %v5480 = vpop.xlane.xlu0 %5479
    %v5481 = vsel %vm1144, %v5440, 0.0
    %5482 = vadd.xlane.f32.xlu0 %v5481
    %v5483 = vpop.xlane.xlu0 %5482
    %v5484 = vsel %vm1144, %v5442, 0.0
    %5485 = vadd.xlane.f32.xlu0 %v5484
    %v5486 = vpop.xlane.xlu0 %5485
    %v5487 = vsel %vm1144, %v5444, 0.0
    %5488 = vadd.xlane.f32.xlu0 %v5487
    %v5489 = vpop.xlane.xlu0 %5488
    %v5490 = vsel %vm1144, %v5446, 0.0
    %5491 = vadd.xlane.f32.xlu0 %v5490
    %v5492 = vpop.xlane.xlu0 %5491
    %v5493 = vsel %vm1144, %v5448, 0.0
    %5494 = vadd.xlane.f32.xlu0 %v5493
    %v5495 = vpop.xlane.xlu0 %5494
    %v5496 = vsel %vm1144, %v5450, 0.0
    %5497 = vadd.xlane.f32.xlu0 %v5496
    %v5498 = vpop.xlane.xlu0 %5497
    %v5499 = vrcp.pop %v5453
    %v5500 = vrcp.pop %v5456
    %v5501 = vrcp.pop %v5459
    %v5502 = vrcp.pop %v5462
    %v5503 = vrcp.pop %v5465
    %v5504 = vrcp.pop %v5468
    %v5505 = vrcp.pop %v5471
    %v5506 = vrcp.pop %v5474
    %v5507 = vrcp.pop %v5477
    %v5508 = vrcp.pop %v5480
    %v5509 = vrcp.pop %v5483
    %v5510 = vrcp.pop %v5486
    %v5511 = vrcp.pop %v5489
    %v5512 = vrcp.pop %v5492
    %v5513 = vrcp.pop %v5495
    %v5514 = vrcp.pop %v5498
    %v5515 = vmul.f32 %v5420, %v5499
    %v5516 = vmul.f32 %v5422, %v5500
    %v5517 = vmul.f32 %v5424, %v5501
    %v5518 = vmul.f32 %v5426, %v5502
    %v5519 = vmul.f32 %v5428, %v5503
    %v5520 = vmul.f32 %v5430, %v5504
    %v5521 = vmul.f32 %v5432, %v5505
    %v5522 = vmul.f32 %v5434, %v5506
    %v5523 = vmul.f32 %v5436, %v5507
    %v5524 = vmul.f32 %v5438, %v5508
    %v5525 = vmul.f32 %v5440, %v5509
    %v5526 = vmul.f32 %v5442, %v5510
    %v5527 = vmul.f32 %v5444, %v5511
    %v5528 = vmul.f32 %v5446, %v5512
    %v5529 = vmul.f32 %v5448, %v5513
    %v5530 = vmul.f32 %v5450, %v5514
    %v5531 = vpack.c.bf16 %v5516, %v5515
    %v5532 = vpack.c.bf16 %v5518, %v5517
    %v5533 = vpack.c.bf16 %v5520, %v5519
    %v5534 = vpack.c.bf16 %v5522, %v5521
    %v5535 = vpack.c.bf16 %v5524, %v5523
    %v5536 = vpack.c.bf16 %v5526, %v5525
    %v5537 = vpack.c.bf16 %v5528, %v5527
    %v5538 = vpack.c.bf16 %v5530, %v5529
    %5539 = vrot.lane.b32.xlu0 %v3138, 84
    %v5540 = vpop.permute.xlu0 %5539
    %5541 = vrot.lane.b32.xlu0 %v3139, 84
    %v5542 = vpop.permute.xlu0 %5541
    %5543 = vrot.lane.b32.xlu0 %v3140, 84
    %v5544 = vpop.permute.xlu0 %5543
    %5545 = vrot.lane.b32.xlu0 %v3141, 84
    %v5546 = vpop.permute.xlu0 %5545
    %5551 = vrot.lane.b32.xlu0 %v28, 116
    %v5552 = vpop.permute.xlu0 %5551
    %5553 = vrot.lane.b32.xlu0 %v29, 116
    %v5554 = vpop.permute.xlu0 %5553
    %5555 = vrot.lane.b32.xlu0 %v30, 116
    %v5556 = vpop.permute.xlu0 %5555
    %5557 = vrot.lane.b32.xlu0 %v31, 116
    %v5558 = vpop.permute.xlu0 %5557
    %5559 = vrot.lane.b32.xlu0 %v32, 116
    %v5560 = vpop.permute.xlu0 %5559
    %5561 = vrot.lane.b32.xlu0 %v33, 116
    %v5562 = vpop.permute.xlu0 %5561
    %5563 = vrot.lane.b32.xlu0 %v34, 116
    %v5564 = vpop.permute.xlu0 %5563
    %5565 = vrot.lane.b32.xlu0 %v35, 116
    %v5566 = vpop.permute.xlu0 %5565
    %v5576 = vsel %vm1144, %v5531, 0
    %v5579 = vsel %vm1144, %v5532, 0
    %v5582 = vsel %vm1144, %v5533, 0
    %v5585 = vsel %vm1144, %v5534, 0
    %5587 = vmatprep.subr.bf16.mxu0 0
    %5588 = vmatpush1.bf16.msra.mxu0 %v5540
    %5589 = vmatprep.subr.bf16.mxu0 0
    %5590 = vmatpush1.bf16.msra.mxu0 %v5542
    %5591 = vmatprep.subr.bf16.mxu0 0
    %5592 = vmatpush1.bf16.msra.mxu0 %v5544
    %5593 = vmatprep.subr.bf16.mxu0 0
    %5594 = vmatpush1.bf16.msra.mxu0 %v5546
    %5595 = vmatprep.subr.bf16.mxu0 0
    %5596 = vmatpush1.bf16.msra.mxu0 0
    %5597 = vmatprep.subr.bf16.mxu0 0
    %5598 = vmatpush1.bf16.msra.mxu0 0
    %5599 = vmatprep.subr.bf16.mxu0 0
    %5600 = vmatpush1.bf16.msra.mxu0 0
    %5601 = vmatprep.subr.bf16.mxu0 0
    %5602 = vmatpush1.bf16.msra.mxu0 0
    %5603 = vmatprep.subr.bf16.mxu0 0
    %5604 = vmatpush1.bf16.msra.mxu0 0
    %5605 = vmatprep.subr.bf16.mxu0 0
    %5606 = vmatpush1.bf16.msra.mxu0 0
    %5607 = vmatprep.subr.bf16.mxu0 0
    %5608 = vmatpush1.bf16.msra.mxu0 0
    %5609 = vmatprep.subr.bf16.mxu0 0
    %5610 = vmatpush1.bf16.msra.mxu0 0
    %5611 = vmatprep.subr.bf16.mxu0 0
    %5612 = vmatpush1.bf16.msra.mxu0 0
    %5613 = vmatprep.subr.bf16.mxu0 0
    %5614 = vmatpush1.bf16.msra.mxu0 0
    %5615 = vmatprep.subr.bf16.mxu0 0
    %5616 = vmatpush1.bf16.msra.mxu0 0
    %5617 = vmatprep.subr.bf16.mxu0 0
    %5618 = vmatpush1.bf16.msra.mxu0 0
    %5619 = vmatprep.mubr.bf16.mxu0 0
    %5620 = vmatmul.mubr.bf16.gmra.mrb[0].mxu0 %v5576
    %v5621 = vpop.f32.mrb[0].mxu0
    %v5622 = vadd.f32 %v5552, %v5621
    %v5623 = vpop.f32.mrb[0].mxu0
    %v5624 = vpop.f32.mrb[0].mxu0
    %v5625 = vadd.f32 %v5554, %v5624
    %v5626 = vpop.f32.mrb[0].mxu0
    %5627 = vmatprep.mubr.bf16.mxu0 0
    %5628 = vmatmul.mubr.bf16.gmra.mrb[0].mxu0 %v5579
    %v5629 = vpop.f32.mrb[0].mxu0
    %v5630 = vadd.f32 %v5556, %v5629
    %v5631 = vpop.f32.mrb[0].mxu0
    %v5632 = vpop.f32.mrb[0].mxu0
    %v5633 = vadd.f32 %v5558, %v5632
    %v5634 = vpop.f32.mrb[0].mxu0
    %5635 = vmatprep.mubr.bf16.mxu0 0
    %5636 = vmatmul.mubr.bf16.gmra.mrb[0].mxu0 %v5582
    %v5637 = vpop.f32.mrb[0].mxu0
    %v5638 = vadd.f32 %v5560, %v5637
    %v5639 = vpop.f32.mrb[0].mxu0
    %v5640 = vpop.f32.mrb[0].mxu0
    %v5641 = vadd.f32 %v5562, %v5640
    %v5642 = vpop.f32.mrb[0].mxu0
    %5643 = vmatprep.mubr.bf16.mxu0 0
    %5644 = vmatmul.mubr.bf16.gmra.mrb[0].mxu0 %v5585
    %v5645 = vpop.f32.mrb[0].mxu0
    %v5646 = vadd.f32 %v5564, %v5645
    %v5647 = vpop.f32.mrb[0].mxu0
    %v5648 = vpop.f32.mrb[0].mxu0
    %v5649 = vadd.f32 %v5566, %v5648
    %v5650 = vpop.f32.mrb[0].mxu0
    %5651 = vdwg.mxu0
    %5652 = vrot.lane.b32.xlu0 %v3142, 84
    %v5653 = vpop.permute.xlu0 %5652
    %5654 = vrot.lane.b32.xlu0 %v3143, 84
    %v5655 = vpop.permute.xlu0 %5654
    %5656 = vrot.lane.b32.xlu0 %v3144, 84
    %v5657 = vpop.permute.xlu0 %5656
    %5658 = vrot.lane.b32.xlu0 %v3145, 84
    %v5659 = vpop.permute.xlu0 %5658
    %5664 = vrot.lane.b32.xlu0 %v36, 116
    %v5665 = vpop.permute.xlu0 %5664
    %5666 = vrot.lane.b32.xlu0 %v37, 116
    %v5667 = vpop.permute.xlu0 %5666
    %5668 = vrot.lane.b32.xlu0 %v38, 116
    %v5669 = vpop.permute.xlu0 %5668
    %5670 = vrot.lane.b32.xlu0 %v39, 116
    %v5671 = vpop.permute.xlu0 %5670
    %5672 = vrot.lane.b32.xlu0 %v40, 116
    %v5673 = vpop.permute.xlu0 %5672
    %5674 = vrot.lane.b32.xlu0 %v41, 116
    %v5675 = vpop.permute.xlu0 %5674
    %5676 = vrot.lane.b32.xlu0 %v42, 116
    %v5677 = vpop.permute.xlu0 %5676
    %5678 = vrot.lane.b32.xlu0 %v43, 116
    %v5679 = vpop.permute.xlu0 %5678
    %v5689 = vsel %vm1144, %v5535, 0
    %v5692 = vsel %vm1144, %v5536, 0
    %v5695 = vsel %vm1144, %v5537, 0
    %v5698 = vsel %vm1144, %v5538, 0
    %5700 = vmatprep.subr.bf16.mxu0 0
    %5701 = vmatpush1.bf16.msra.mxu0 %v5653
    %5702 = vmatprep.subr.bf16.mxu0 0
    %5703 = vmatpush1.bf16.msra.mxu0 %v5655
    %5704 = vmatprep.subr.bf16.mxu0 0
    %5705 = vmatpush1.bf16.msra.mxu0 %v5657
    %5706 = vmatprep.subr.bf16.mxu0 0
    %5707 = vmatpush1.bf16.msra.mxu0 %v5659
    %5708 = vmatprep.subr.bf16.mxu0 0
    %5709 = vmatpush1.bf16.msra.mxu0 0
    %5710 = vmatprep.subr.bf16.mxu0 0
    %5711 = vmatpush1.bf16.msra.mxu0 0
    %5712 = vmatprep.subr.bf16.mxu0 0
    %5713 = vmatpush1.bf16.msra.mxu0 0
    %5714 = vmatprep.subr.bf16.mxu0 0
    %5715 = vmatpush1.bf16.msra.mxu0 0
    %5716 = vmatprep.subr.bf16.mxu0 0
    %5717 = vmatpush1.bf16.msra.mxu0 0
    %5718 = vmatprep.subr.bf16.mxu0 0
    %5719 = vmatpush1.bf16.msra.mxu0 0
    %5720 = vmatprep.subr.bf16.mxu0 0
    %5721 = vmatpush1.bf16.msra.mxu0 0
    %5722 = vmatprep.subr.bf16.mxu0 0
    %5723 = vmatpush1.bf16.msra.mxu0 0
    %5724 = vmatprep.subr.bf16.mxu0 0
    %5725 = vmatpush1.bf16.msra.mxu0 0
    %5726 = vmatprep.subr.bf16.mxu0 0
    %5727 = vmatpush1.bf16.msra.mxu0 0
    %5728 = vmatprep.subr.bf16.mxu0 0
    %5729 = vmatpush1.bf16.msra.mxu0 0
    %5730 = vmatprep.subr.bf16.mxu0 0
    %5731 = vmatpush1.bf16.msra.mxu0 0
    %5732 = vmatprep.mubr.bf16.mxu0 0
    %5733 = vmatmul.mubr.bf16.gmra.mrb[0].mxu0 %v5689
    %v5734 = vpop.f32.mrb[0].mxu0
    %v5735 = vadd.f32 %v5665, %v5734
    %v5736 = vpop.f32.mrb[0].mxu0
    %v5737 = vpop.f32.mrb[0].mxu0
    %v5738 = vadd.f32 %v5667, %v5737
    %v5739 = vpop.f32.mrb[0].mxu0
    %5740 = vmatprep.mubr.bf16.mxu0 0
    %5741 = vmatmul.mubr.bf16.gmra.mrb[0].mxu0 %v5692
    %v5742 = vpop.f32.mrb[0].mxu0
    %v5743 = vadd.f32 %v5669, %v5742
    %v5744 = vpop.f32.mrb[0].mxu0
    %v5745 = vpop.f32.mrb[0].mxu0
    %v5746 = vadd.f32 %v5671, %v5745
    %v5747 = vpop.f32.mrb[0].mxu0
    %5748 = vmatprep.mubr.bf16.mxu0 0
    %5749 = vmatmul.mubr.bf16.gmra.mrb[0].mxu0 %v5695
    %v5750 = vpop.f32.mrb[0].mxu0
    %v5751 = vadd.f32 %v5673, %v5750
    %v5752 = vpop.f32.mrb[0].mxu0
    %v5753 = vpop.f32.mrb[0].mxu0
    %v5754 = vadd.f32 %v5675, %v5753
    %v5755 = vpop.f32.mrb[0].mxu0
    %5756 = vmatprep.mubr.bf16.mxu0 0
    %5757 = vmatmul.mubr.bf16.gmra.mrb[0].mxu0 %v5698
    %v5758 = vpop.f32.mrb[0].mxu0
    %v5759 = vadd.f32 %v5677, %v5758
    %v5760 = vpop.f32.mrb[0].mxu0
    %v5761 = vpop.f32.mrb[0].mxu0
    %v5762 = vadd.f32 %v5679, %v5761
    %v5763 = vpop.f32.mrb[0].mxu0
    %5764 = vdwg.mxu0
    %5781 = vrot.lane.b32.xlu0 %v5622, 12
    %v5782 = vpop.permute.xlu0 %5781
    %5783 = vrot.lane.b32.xlu0 %v5625, 12
    %v5784 = vpop.permute.xlu0 %5783
    %5785 = vrot.lane.b32.xlu0 %v5630, 12
    %v5786 = vpop.permute.xlu0 %5785
    %5787 = vrot.lane.b32.xlu0 %v5633, 12
    %v5788 = vpop.permute.xlu0 %5787
    %5789 = vrot.lane.b32.xlu0 %v5638, 12
    %v5790 = vpop.permute.xlu0 %5789
    %5791 = vrot.lane.b32.xlu0 %v5641, 12
    %v5792 = vpop.permute.xlu0 %5791
    %5793 = vrot.lane.b32.xlu0 %v5646, 12
    %v5794 = vpop.permute.xlu0 %5793
    %5795 = vrot.lane.b32.xlu0 %v5649, 12
    %v5796 = vpop.permute.xlu0 %5795
    %5797 = vrot.lane.b32.xlu0 %v5735, 12
    %v5798 = vpop.permute.xlu0 %5797
    %5799 = vrot.lane.b32.xlu0 %v5738, 12
    %v5800 = vpop.permute.xlu0 %5799
    %5801 = vrot.lane.b32.xlu0 %v5743, 12
    %v5802 = vpop.permute.xlu0 %5801
    %5803 = vrot.lane.b32.xlu0 %v5746, 12
    %v5804 = vpop.permute.xlu0 %5803
    %5805 = vrot.lane.b32.xlu0 %v5751, 12
    %v5806 = vpop.permute.xlu0 %5805
    %5807 = vrot.lane.b32.xlu0 %v5754, 12
    %v5808 = vpop.permute.xlu0 %5807
    %5809 = vrot.lane.b32.xlu0 %v5759, 12
    %v5810 = vpop.permute.xlu0 %5809
    %5811 = vrot.lane.b32.xlu0 %v5762, 12
    %v5812 = vpop.permute.xlu0 %5811
    %vm5829 = vcmask 130144
    %5830 = vst.msk [vmem:[#allocation4] sm:$0xff] %vm5829, %v5782
    %5831 = vst.msk [vmem:[#allocation4 + $0x8] sm:$0xff] %vm5829, %v5784
    %5832 = vst.msk [vmem:[#allocation4 + $0x10] sm:$0xff] %vm5829, %v5786
    %5833 = vst.msk [vmem:[#allocation4 + $0x18] sm:$0xff] %vm5829, %v5788
    %5834 = vst.msk [vmem:[#allocation4 + $0x20] sm:$0xff] %vm5829, %v5790
    %5835 = vst.msk [vmem:[#allocation4 + $0x28] sm:$0xff] %vm5829, %v5792
    %5836 = vst.msk [vmem:[#allocation4 + $0x30] sm:$0xff] %vm5829, %v5794
    %5837 = vst.msk [vmem:[#allocation4 + $0x38] sm:$0xff] %vm5829, %v5796
    %5838 = vst.msk [vmem:[#allocation4 + $0x40] sm:$0xff] %vm5829, %v5798
    %5839 = vst.msk [vmem:[#allocation4 + $0x48] sm:$0xff] %vm5829, %v5800
    %5840 = vst.msk [vmem:[#allocation4 + $0x50] sm:$0xff] %vm5829, %v5802
    %5841 = vst.msk [vmem:[#allocation4 + $0x58] sm:$0xff] %vm5829, %v5804
    %5842 = vst.msk [vmem:[#allocation4 + $0x60] sm:$0xff] %vm5829, %v5806
    %5843 = vst.msk [vmem:[#allocation4 + $0x68] sm:$0xff] %vm5829, %v5808
    %5844 = vst.msk [vmem:[#allocation4 + $0x70] sm:$0xff] %vm5829, %v5810
    %5845 = vst.msk [vmem:[#allocation4 + $0x78] sm:$0xff] %vm5829, %v5812
    // Predicated region
    $region30: #{mhsa_bottleneck_forward.1} parent=1 // pred_check
      _
    $region31: #{mhsa_bottleneck_forward.1} parent=1 // pred_check_branch
      %5847 = sbr.rel (0) target = $region33
    $region32: #{mhsa_bottleneck_forward.1} parent=1 // pred_region
      %s5849 = ssub.s32 2048, 2048
      %5850 = vsyncadd [#allocation5], %s5849
      %s5851 = sshll.u32 [#allocation4], 4
      %s5852 = int_to_ptr.vmem [resolvable:$true] %s5851
      %5857 = dma.vmem_to_hbm [thread:$0]  %s5852, 2048, %s7, [#allocation5], 128, 128, 8
    $region33: #{mhsa_bottleneck_forward.1} parent=1 // pred_fallthru
      _
    // Predicated region
    $region34: #{mhsa_bottleneck_forward.1} parent=1 // pred_check
      _
    $region35: #{mhsa_bottleneck_forward.1} parent=1 // pred_check_branch
      %5859 = sbr.rel (0) target = $region37
    $region36: #{mhsa_bottleneck_forward.1} parent=1 // pred_region
      %5860 = dma.done [#allocation5], 2048
    $region37: #{mhsa_bottleneck_forward.1} parent=1 // pred_fallthru
      _
    %5861 = vsyncpa [#allocation5], 1

</llo_original>
